<compile_context>
chip_gen: v6e
topology: v6e:2x2x1
jax: 0.10.0
libtpu: 0.0.40
codegen_flags: <defaults>
</compile_context>

<pallas_src>
import functools
import math

import jax
import jax.numpy as jnp
from jax import lax
from jax.experimental import pallas as pl
from jax.experimental.pallas import tpu as pltpu


# ----------------------------- Pallas kernel ------------------------------- #

def star_batch_kernel(
    # per-batch activations
    hid_ref, cen_ref,
    # satellite attention params (packed, scale folded into Wq/bq)
    wqkv_s_ref, bqkv_s_ref, wo_s_ref, bo_s_ref,
    # relay attention params (packed, scale folded into Wq/bq)
    wqkv_r_ref, bqkv_r_ref, wo_r_ref, bo_r_ref,
    # layernorm params
    g_s_ref, b_s_ref, g_r_ref, b_r_ref,
    # head-assignment masks: hm (H, nh), hmt (nh, H)
    hm_ref, hmt_ref,
    # outputs
    out_cs_ref, out_cen_ref,
    *, S, H, nh, eps, n_iters):

    f32 = jnp.float32

    hid = hid_ref[...].reshape(S, H).astype(f32)      # fixed hidden_state slab
    cen = cen_ref[...].reshape(1, H).astype(f32)      # relay / center node

    # Weights: constant index_map -> fetched once, resident across the grid.
    wqkv_s = wqkv_s_ref[...]                          # (H, 3H)  [Wq*s | Wk | Wv]
    wo_s = wo_s_ref[...]                              # (H, H)
    wqkv_r = wqkv_r_ref[...]                          # (H, 3H)
    wo_r = wo_r_ref[...]                              # (H, H)
    bqkv_s = bqkv_s_ref[...]                          # (1, 3H)  f32
    bo_s = bo_s_ref[...]                              # (1, H)
    bqkv_r = bqkv_r_ref[...]
    bo_r = bo_r_ref[...]
    g_s = g_s_ref[...]; b_s = b_s_ref[...]            # (1, H)
    g_r = g_r_ref[...]; b_r = b_r_ref[...]
    hm = hm_ref[...]                                  # (H, nh)  f32 0/1
    hmt = hmt_ref[...]                                # (nh, H)

    def mm(x, w):
        # MXU matmul: operands in the weight's dtype (bf16 for projections),
        # f32 accumulation.  Head-mask matmuls keep f32 (w is f32).
        return jnp.dot(x.astype(w.dtype), w, preferred_element_type=f32)

    def fast_recip(x):
        # EUP approximate reciprocal + one Newton step (~f32 accuracy).
        r = pl.reciprocal(x, approx=True)
        return r * (2.0 - x * r)

    def layernorm(x, g, b):
        u = jnp.mean(x, axis=-1, keepdims=True)
        s = jnp.mean((x - u) ** 2, axis=-1, keepdims=True)
        return g * ((x - u) * lax.rsqrt(s + eps)) + b

    def shift_back(x):       # PyTorch in-place backward shift: rows [1..S-1, 1]
        return jnp.concatenate([x[1:], x[1:2]], axis=0)

    cs = hid                                          # current_states = clone(hidden)
    k_hid = v_hid = None

    for it in range(n_iters):
        # ---------------------- satellite update ----------------------- #
        # Fold the center row into the big projection (its Q columns are unused).
        x_s = jnp.concatenate([cs, cen], axis=0)      # (S+1, H)
        proj = mm(x_s, wqkv_s) + bqkv_s               # (S+1, 3H), f32
        q = proj[:S, :H]                              # 1/sqrt(d) already folded in
        k_cs = proj[:S, H:2 * H]
        v_cs = proj[:S, 2 * H:]
        k_cen = proj[S:, H:2 * H]                     # (1, H)
        v_cen = proj[S:, 2 * H:]
        if it == 0:
            # current_states == hidden_state at iteration 0: reuse its K/V.
            k_hid, v_hid = k_cs, v_cs

        k_back = shift_back(k_cs)
        v_back = shift_back(v_cs)
        k_fwd = k_cs[0:1]                             # forward shift == row 0 everywhere
        v_fwd = v_cs[0:1]

        # Per-branch, per-head scores (S, nh).  Rank-1 key branches use
        # implicit (1, H) broadcasting — no stacks, no broadcast_to.
        s_back = mm(q * k_back, hm)
        s_self = mm(q * k_cs, hm)
        s_fwd = mm(q * k_fwd, hm)
        s_hid = mm(q * k_hid, hm)
        s_cen = mm(q * k_cen, hm)

        m = jnp.maximum(jnp.maximum(jnp.maximum(s_back, s_self),
                                    jnp.maximum(s_fwd, s_hid)), s_cen)
        e_back = jnp.exp(s_back - m)
        e_self = jnp.exp(s_self - m)
        e_fwd = jnp.exp(s_fwd - m)
        e_hid = jnp.exp(s_hid - m)
        e_cen = jnp.exp(s_cen - m)
        inv = fast_recip(e_back + e_self + e_fwd + e_hid + e_cen)

        # Context: per-head probs broadcast back to hidden lanes through hmt.
        ctx = (mm(e_back * inv, hmt) * v_back
               + mm(e_self * inv, hmt) * v_cs
               + mm(e_fwd * inv, hmt) * v_fwd
               + mm(e_hid * inv, hmt) * v_hid
               + mm(e_cen * inv, hmt) * v_cen)        # (S, H)

        sat = jnp.maximum(mm(ctx, wo_s) + bo_s, 0.0)  # out proj + F.relu
        cs = layernorm(sat, g_s, b_s)                 # (S, H) new satellites

        # -------- relay update: center attends over [new cs ; center] ---- #
        x_r = jnp.concatenate([cs, cen], axis=0)      # (S+1, H)
        proj_r = mm(x_r, wqkv_r) + bqkv_r             # (S+1, 3H); Q used only for center row
        q_r = proj_r[S:, :H]                          # (1, H), scale folded in
        k_all = proj_r[:, H:2 * H]                    # (S+1, H)
        v_all = proj_r[:, 2 * H:]

        sc = mm(q_r * k_all, hm)                      # (S+1, nh)
        m_r = jnp.max(sc, axis=0, keepdims=True)      # (1, nh)
        e_r = jnp.exp(sc - m_r)
        inv_r = fast_recip(jnp.sum(e_r, axis=0, keepdims=True))
        p_r = mm(e_r * inv_r, hmt)                    # (S+1, H)
        ctx_r = jnp.sum(p_r * v_all, axis=0, keepdims=True)      # (1, H)

        rel = jnp.maximum(mm(ctx_r, wo_r) + bo_r, 0.0)
        cen = layernorm(rel, g_r, b_r)                # (1, H) new center

    out_cs_ref[...] = cs.reshape(1, S, H).astype(out_cs_ref.dtype)
    out_cen_ref[...] = cen.reshape(1, 1, H).astype(out_cen_ref.dtype)


# ----------------------------- wrapper -------------------------------------- #

def _vmem_limit_bytes(S, H, nh, mxu_dtype):
    """Rough per-step working-set estimate with headroom, kept under v7x's 64 MiB."""
    wbytes = (2 * H * 3 * H + 2 * H * H) * jnp.dtype(mxu_dtype).itemsize   # proj weights
    wbytes += (2 * 3 * H + 6 * H + 2 * H * nh) * 4                          # biases/LN/masks
    act = (S + 1) * H * 4
    est = int(1.5 * (2 * wbytes + 8 * act + 24 * act))
    return max(32 * 1024 * 1024, min(est, 56 * 1024 * 1024))


def star_transformer_layer(hidden_state, center, params, *, num_heads, head_size,
                           eps=1e-12, n_iters=2, mxu_dtype=jnp.bfloat16):
    """Full StarTransformerLayer.forward: 2 fused satellite+relay iterations."""
    B, S, H = hidden_state.shape
    assert H == num_heads * head_size
    scale = 1.0 / math.sqrt(head_size)
    f32 = jnp.float32

    sat, rel = params["sat"], params["rel"]
    # Pack projections; fold the 1/sqrt(head_size) score scale into Wq / bq.
    # Projection weights in mxu_dtype (bf16) — biases stay f32 (added post-accum).
    wqkv_s = jnp.concatenate([sat["wq"] * scale, sat["wk"], sat["wv"]], axis=1).astype(mxu_dtype)
    bqkv_s = jnp.concatenate([sat["bq"] * scale, sat["bk"], sat["bv"]], axis=1).astype(f32)
    wo_s = sat["wo"].astype(mxu_dtype)
    bo_s = sat["bo"].astype(f32)
    wqkv_r = jnp.concatenate([rel["wq"] * scale, rel["wk"], rel["wv"]], axis=1).astype(mxu_dtype)
    bqkv_r = jnp.concatenate([rel["bq"] * scale, rel["bk"], rel["bv"]], axis=1).astype(f32)
    wo_r = rel["wo"].astype(mxu_dtype)
    bo_r = rel["bo"].astype(f32)

    g_s = params["g_s"].astype(f32); b_s = params["b_s"].astype(f32)
    g_r = params["g_r"].astype(f32); b_r = params["b_r"].astype(f32)

    # Head-assignment masks: hm[d, h] = 1 iff hidden dim d belongs to head h.
    hm = jnp.repeat(jnp.eye(num_heads, dtype=f32), head_size, axis=0)   # (H, nh)
    hmt = hm.T                                                          # (nh, H)

    center3 = center.reshape(B, 1, H)

    weights = [wqkv_s, bqkv_s, wo_s, bo_s, wqkv_r, bqkv_r, wo_r, bo_r,
               g_s, b_s, g_r, b_r, hm, hmt]

    # Per-batch activation blocks (double-buffered by the pipeline).
    act_specs = [pl.BlockSpec((1, S, H), lambda b: (b, 0, 0)),     # hidden_state
                 pl.BlockSpec((1, 1, H), lambda b: (b, 0, 0))]     # center
    # Constant index_map: weights fetched once, resident across the batch grid.
    # TODO(synk): add pipeline_mode=pl.Buffered(1) here when single-buffering the
    # constant weights is needed to free VMEM for larger activation tiles.
    weight_specs = [pl.BlockSpec(w.shape, lambda b: (0, 0)) for w in weights]

    out_shape = (jax.ShapeDtypeStruct((B, S, H), hidden_state.dtype),
                 jax.ShapeDtypeStruct((B, 1, H), center.dtype))
    out_specs = (pl.BlockSpec((1, S, H), lambda b: (b, 0, 0)),
                 pl.BlockSpec((1, 1, H), lambda b: (b, 0, 0)))

    kern = functools.partial(star_batch_kernel, S=S, H=H, nh=num_heads,
                             eps=eps, n_iters=n_iters)

    cs, cen3 = pl.pallas_call(
        kern,
        grid=(B,),                                   # batch on the grid
        in_specs=act_specs + weight_specs,
        out_specs=out_specs,
        out_shape=out_shape,
        compiler_params=pltpu.CompilerParams(
            dimension_semantics=("parallel",),       # v7x megacore splits the batch
            vmem_limit_bytes=_vmem_limit_bytes(S, H, num_heads, mxu_dtype)),
    )(hidden_state, center3, *weights)
    return cs, cen3.reshape(B, H)


# ----------------------------- pure-JAX reference --------------------------- #

def _layernorm_ref(x, gamma, beta, eps):
    u = jnp.mean(x, axis=-1, keepdims=True)
    s = jnp.mean((x - u) ** 2, axis=-1, keepdims=True)
    return gamma * ((x - u) / jnp.sqrt(s + eps)) + beta


def _mha_ref(q, k, v, p, nh, hs):
    def lin(x, w, b):
        return x @ w + b
    H = nh * hs
    Q, K, V = lin(q, p["wq"], p["bq"]), lin(k, p["wk"], p["bk"]), lin(v, p["wv"], p["bv"])
    N, Lq, _ = Q.shape
    Lk = K.shape[1]

    def split(x, L):
        return x.reshape(N, L, nh, hs).transpose(0, 2, 1, 3)

    Qh, Kh, Vh = split(Q, Lq), split(K, Lk), split(V, Lk)
    sc = jnp.einsum("nhqd,nhkd->nhqk", Qh, Kh) / math.sqrt(hs)
    pr = jax.nn.softmax(sc, axis=-1)
    ctx = jnp.einsum("nhqk,nhkd->nhqd", pr, Vh)
    ctx = ctx.transpose(0, 2, 1, 3).reshape(N, Lq, H)
    return lin(ctx, p["wo"], p["bo"])


def _cycle_shift_ref(x, forward):
    if forward:   # buggy in-place semantics: every row == original row 0
        return jnp.broadcast_to(x[:, 0:1, :], x.shape)
    return jnp.concatenate([x[:, 1:, :], x[:, 1:2, :]], axis=1)


def star_ref(hidden_state, center, params, nh, hs, eps=1e-12):
    B, S, H = hidden_state.shape
    cs = hidden_state
    for _ in range(2):
        before = _cycle_shift_ref(cs, False)
        after = _cycle_shift_ref(cs, True)
        cexp = jnp.broadcast_to(center[:, None, :], cs.shape)
        concats = jnp.stack([before, cs, after, hidden_state, cexp], axis=2)
        concats = concats.reshape(B * S, 5, H)
        q = cs.reshape(B * S, 1, H)
        sat = _mha_ref(q, concats, concats, params["sat"], nh, hs)
        cs = _layernorm_ref(jax.nn.relu(sat), params["g_s"], params["b_s"], eps)
        cs = cs.reshape(B, S, H)
        c = center[:, None, :]
        cc = jnp.concatenate([c, cs], axis=1)
        rel = _mha_ref(c, cc, cc, params["rel"], nh, hs)
        center = _layernorm_ref(jax.nn.relu(rel), params["g_r"], params["b_r"], eps)[:, 0, :]
    return cs, center


# ----------------------------- main ----------------------------------------- #

if __name__ == "__main__":
    B, S, nh, hs = 2, 8, 4, 8
    H = nh * hs

    key = jax.random.PRNGKey(0)
    keys = jax.random.split(key, 20)

    def w(k):
        return jax.random.normal(k, (H, H), jnp.float32) * 0.1

    def bvec(k):
        return jax.random.normal(k, (1, H), jnp.float32) * 0.05

    sat = {"wq": w(keys[0]), "bq": bvec(keys[1]),
           "wk": w(keys[2]), "bk": bvec(keys[3]),
           "wv": w(keys[4]), "bv": bvec(keys[5]),
           "wo": w(keys[6]), "bo": bvec(keys[7])}
    rel = {"wq": w(keys[8]), "bq": bvec(keys[9]),
           "wk": w(keys[10]), "bk": bvec(keys[11]),
           "wv": w(keys[12]), "bv": bvec(keys[13]),
           "wo": w(keys[14]), "bo": bvec(keys[15])}

    params = {
        "sat": sat, "rel": rel,
        "g_s": jnp.ones((1, H), jnp.float32), "b_s": jnp.zeros((1, H), jnp.float32),
        "g_r": jnp.ones((1, H), jnp.float32), "b_r": jnp.zeros((1, H), jnp.float32),
    }

    hidden_state = jax.random.normal(keys[16], (B, S, H), jnp.float32)
    center = jax.random.normal(keys[17], (B, H), jnp.float32)

    # Exactness check: f32 MXU operands (bit-for-bit same algorithm, tight tol).
    fwd_f32 = jax.jit(functools.partial(star_transformer_layer, num_heads=nh,
                                        head_size=hs, mxu_dtype=jnp.float32))
    cs_f32, cen_f32 = fwd_f32(hidden_state, center, params)
    jax.block_until_ready((cs_f32, cen_f32))

    # Performance path: bf16 MXU operands, f32 accumulation / softmax / LN.
    fwd_bf16 = jax.jit(functools.partial(star_transformer_layer, num_heads=nh,
                                         head_size=hs, mxu_dtype=jnp.bfloat16))
    cs_bf16, cen_bf16 = fwd_bf16(hidden_state, center, params)
    jax.block_until_ready((cs_bf16, cen_bf16))

    cs_ref, cen_ref = star_ref(hidden_state, center, params, nh, hs)

    assert cs_f32.shape == (B, S, H) and cen_f32.shape == (B, H)
    assert jnp.allclose(cs_f32, cs_ref, atol=1e-3, rtol=1e-3)
    assert jnp.allclose(cen_f32, cen_ref, atol=1e-3, rtol=1e-3)
    # bf16 matmul operands: looser tolerance (per review guidance).
    assert jnp.allclose(cs_bf16, cs_ref, atol=5e-2, rtol=5e-2)
    assert jnp.allclose(cen_bf16, cen_ref, atol=5e-2, rtol=5e-2)

    print("KERNEL_OK")
</pallas_src>

<mosaic_0001>
module attributes {stable_mosaic.version = 11 : i64} {
  func.func @star_batch_kernel(%arg0: i32, %arg1: memref<1x8x32xf32, #tpu.memory_space<vmem>>, %arg2: memref<1x1x32xf32, #tpu.memory_space<vmem>>, %arg3: memref<32x96xf32, #tpu.memory_space<vmem>>, %arg4: memref<1x96xf32, #tpu.memory_space<vmem>>, %arg5: memref<32x32xf32, #tpu.memory_space<vmem>>, %arg6: memref<1x32xf32, #tpu.memory_space<vmem>>, %arg7: memref<32x96xf32, #tpu.memory_space<vmem>>, %arg8: memref<1x96xf32, #tpu.memory_space<vmem>>, %arg9: memref<32x32xf32, #tpu.memory_space<vmem>>, %arg10: memref<1x32xf32, #tpu.memory_space<vmem>>, %arg11: memref<1x32xf32, #tpu.memory_space<vmem>>, %arg12: memref<1x32xf32, #tpu.memory_space<vmem>>, %arg13: memref<1x32xf32, #tpu.memory_space<vmem>>, %arg14: memref<1x32xf32, #tpu.memory_space<vmem>>, %arg15: memref<32x4xf32, #tpu.memory_space<vmem>>, %arg16: memref<4x32xf32, #tpu.memory_space<vmem>>, %arg17: memref<1x8x32xf32, #tpu.memory_space<vmem>>, %arg18: memref<1x1x32xf32, #tpu.memory_space<vmem>>) attributes {dimension_semantics = [#tpu.dimension_semantics<parallel>], iteration_bounds = array<i64: 2>, scalar_prefetch = 0 : i64, scratch_operands = 0 : i64, tpu.core_type = #tpu.core_type<tc>, window_params = [{transform_indices = @transform_0, window_bounds = array<i64: 1, 8, 32>}, {transform_indices = @transform_1, window_bounds = array<i64: 1, 1, 32>}, {pipeline_mode = #tpu.pipeline_mode<synchronous>, transform_indices = @transform_2, window_bounds = array<i64: 32, 96>}, {pipeline_mode = #tpu.pipeline_mode<synchronous>, transform_indices = @transform_3, window_bounds = array<i64: 1, 96>}, {pipeline_mode = #tpu.pipeline_mode<synchronous>, transform_indices = @transform_4, window_bounds = array<i64: 32, 32>}, {pipeline_mode = #tpu.pipeline_mode<synchronous>, transform_indices = @transform_5, window_bounds = array<i64: 1, 32>}, {pipeline_mode = #tpu.pipeline_mode<synchronous>, transform_indices = @transform_6, window_bounds = array<i64: 32, 96>}, {pipeline_mode = #tpu.pipeline_mode<synchronous>, transform_indices = @transform_7, window_bounds = array<i64: 1, 96>}, {pipeline_mode = #tpu.pipeline_mode<synchronous>, transform_indices = @transform_8, window_bounds = array<i64: 32, 32>}, {pipeline_mode = #tpu.pipeline_mode<synchronous>, transform_indices = @transform_9, window_bounds = array<i64: 1, 32>}, {pipeline_mode = #tpu.pipeline_mode<synchronous>, transform_indices = @transform_10, window_bounds = array<i64: 1, 32>}, {pipeline_mode = #tpu.pipeline_mode<synchronous>, transform_indices = @transform_11, window_bounds = array<i64: 1, 32>}, {pipeline_mode = #tpu.pipeline_mode<synchronous>, transform_indices = @transform_12, window_bounds = array<i64: 1, 32>}, {pipeline_mode = #tpu.pipeline_mode<synchronous>, transform_indices = @transform_13, window_bounds = array<i64: 1, 32>}, {pipeline_mode = #tpu.pipeline_mode<synchronous>, transform_indices = @transform_14, window_bounds = array<i64: 32, 4>}, {pipeline_mode = #tpu.pipeline_mode<synchronous>, transform_indices = @transform_15, window_bounds = array<i64: 4, 32>}, {transform_indices = @transform_16, window_bounds = array<i64: 1, 8, 32>}, {transform_indices = @transform_17, window_bounds = array<i64: 1, 1, 32>}]} {
    %c0 = arith.constant 0 : index
    %c0_0 = arith.constant 0 : index
    %c0_1 = arith.constant 0 : index
    %0 = vector.load %arg1[%c0, %c0_0, %c0_1] : memref<1x8x32xf32, #tpu.memory_space<vmem>>, vector<1x8x32xf32>
    %1 = vector.shape_cast %0 : vector<1x8x32xf32> to vector<8x32xf32>
    %c0_2 = arith.constant 0 : index
    %c0_3 = arith.constant 0 : index
    %c0_4 = arith.constant 0 : index
    %2 = vector.load %arg2[%c0_2, %c0_3, %c0_4] : memref<1x1x32xf32, #tpu.memory_space<vmem>>, vector<1x1x32xf32>
    %3 = vector.shape_cast %2 : vector<1x1x32xf32> to vector<1x32xf32>
    %c0_5 = arith.constant 0 : index
    %c0_6 = arith.constant 0 : index
    %4 = vector.load %arg3[%c0_5, %c0_6] : memref<32x96xf32, #tpu.memory_space<vmem>>, vector<32x96xf32>
    %c0_7 = arith.constant 0 : index
    %c0_8 = arith.constant 0 : index
    %5 = vector.load %arg5[%c0_7, %c0_8] : memref<32x32xf32, #tpu.memory_space<vmem>>, vector<32x32xf32>
    %c0_9 = arith.constant 0 : index
    %c0_10 = arith.constant 0 : index
    %6 = vector.load %arg7[%c0_9, %c0_10] : memref<32x96xf32, #tpu.memory_space<vmem>>, vector<32x96xf32>
    %c0_11 = arith.constant 0 : index
    %c0_12 = arith.constant 0 : index
    %7 = vector.load %arg9[%c0_11, %c0_12] : memref<32x32xf32, #tpu.memory_space<vmem>>, vector<32x32xf32>
    %c0_13 = arith.constant 0 : index
    %c0_14 = arith.constant 0 : index
    %8 = vector.load %arg4[%c0_13, %c0_14] : memref<1x96xf32, #tpu.memory_space<vmem>>, vector<1x96xf32>
    %c0_15 = arith.constant 0 : index
    %c0_16 = arith.constant 0 : index
    %9 = vector.load %arg6[%c0_15, %c0_16] : memref<1x32xf32, #tpu.memory_space<vmem>>, vector<1x32xf32>
    %c0_17 = arith.constant 0 : index
    %c0_18 = arith.constant 0 : index
    %10 = vector.load %arg8[%c0_17, %c0_18] : memref<1x96xf32, #tpu.memory_space<vmem>>, vector<1x96xf32>
    %c0_19 = arith.constant 0 : index
    %c0_20 = arith.constant 0 : index
    %11 = vector.load %arg10[%c0_19, %c0_20] : memref<1x32xf32, #tpu.memory_space<vmem>>, vector<1x32xf32>
    %c0_21 = arith.constant 0 : index
    %c0_22 = arith.constant 0 : index
    %12 = vector.load %arg11[%c0_21, %c0_22] : memref<1x32xf32, #tpu.memory_space<vmem>>, vector<1x32xf32>
    %c0_23 = arith.constant 0 : index
    %c0_24 = arith.constant 0 : index
    %13 = vector.load %arg12[%c0_23, %c0_24] : memref<1x32xf32, #tpu.memory_space<vmem>>, vector<1x32xf32>
    %c0_25 = arith.constant 0 : index
    %c0_26 = arith.constant 0 : index
    %14 = vector.load %arg13[%c0_25, %c0_26] : memref<1x32xf32, #tpu.memory_space<vmem>>, vector<1x32xf32>
    %c0_27 = arith.constant 0 : index
    %c0_28 = arith.constant 0 : index
    %15 = vector.load %arg14[%c0_27, %c0_28] : memref<1x32xf32, #tpu.memory_space<vmem>>, vector<1x32xf32>
    %c0_29 = arith.constant 0 : index
    %c0_30 = arith.constant 0 : index
    %16 = vector.load %arg15[%c0_29, %c0_30] : memref<32x4xf32, #tpu.memory_space<vmem>>, vector<32x4xf32>
    %c0_31 = arith.constant 0 : index
    %c0_32 = arith.constant 0 : index
    %17 = vector.load %arg16[%c0_31, %c0_32] : memref<4x32xf32, #tpu.memory_space<vmem>>, vector<4x32xf32>
    %18 = tpu.concatenate %1, %3 in 0 : vector<8x32xf32>, vector<1x32xf32> -> vector<9x32xf32>
    %cst = arith.constant dense<0.000000e+00> : vector<9x96xf32>
    %19 = tpu.matmul %18, %4, %cst {dimension_numbers = #tpu.dot_dimension_numbers<[1], [0], [0], [1], [0, 0, 1, 1], [], []>} : vector<9x32xf32>, vector<32x96xf32>, vector<9x96xf32> -> vector<9x96xf32>
    %20 = vector.broadcast %8 : vector<1x96xf32> to vector<9x96xf32>
    %21 = arith.addf %19, %20 : vector<9x96xf32>
    %22 = vector.extract_strided_slice %21 {offsets = [0, 0], sizes = [8, 32], strides = [1, 1]} : vector<9x96xf32> to vector<8x32xf32>
    %23 = vector.extract_strided_slice %21 {offsets = [0, 32], sizes = [8, 32], strides = [1, 1]} : vector<9x96xf32> to vector<8x32xf32>
    %24 = vector.extract_strided_slice %21 {offsets = [0, 64], sizes = [8, 32], strides = [1, 1]} : vector<9x96xf32> to vector<8x32xf32>
    %25 = vector.extract_strided_slice %21 {offsets = [8, 32], sizes = [1, 32], strides = [1, 1]} : vector<9x96xf32> to vector<1x32xf32>
    %26 = vector.extract_strided_slice %21 {offsets = [8, 64], sizes = [1, 32], strides = [1, 1]} : vector<9x96xf32> to vector<1x32xf32>
    %27 = vector.extract_strided_slice %23 {offsets = [1, 0], sizes = [7, 32], strides = [1, 1]} : vector<8x32xf32> to vector<7x32xf32>
    %28 = vector.extract_strided_slice %23 {offsets = [1, 0], sizes = [1, 32], strides = [1, 1]} : vector<8x32xf32> to vector<1x32xf32>
    %29 = tpu.concatenate %27, %28 in 0 : vector<7x32xf32>, vector<1x32xf32> -> vector<8x32xf32>
    %30 = vector.extract_strided_slice %24 {offsets = [1, 0], sizes = [7, 32], strides = [1, 1]} : vector<8x32xf32> to vector<7x32xf32>
    %31 = vector.extract_strided_slice %24 {offsets = [1, 0], sizes = [1, 32], strides = [1, 1]} : vector<8x32xf32> to vector<1x32xf32>
    %32 = tpu.concatenate %30, %31 in 0 : vector<7x32xf32>, vector<1x32xf32> -> vector<8x32xf32>
    %33 = vector.extract_strided_slice %23 {offsets = [0, 0], sizes = [1, 32], strides = [1, 1]} : vector<8x32xf32> to vector<1x32xf32>
    %34 = vector.extract_strided_slice %24 {offsets = [0, 0], sizes = [1, 32], strides = [1, 1]} : vector<8x32xf32> to vector<1x32xf32>
    %35 = arith.mulf %22, %29 : vector<8x32xf32>
    %cst_33 = arith.constant dense<0.000000e+00> : vector<8x4xf32>
    %36 = tpu.matmul %35, %16, %cst_33 {dimension_numbers = #tpu.dot_dimension_numbers<[1], [0], [0], [1], [0, 0, 1, 1], [], []>} : vector<8x32xf32>, vector<32x4xf32>, vector<8x4xf32> -> vector<8x4xf32>
    %37 = arith.mulf %22, %23 : vector<8x32xf32>
    %cst_34 = arith.constant dense<0.000000e+00> : vector<8x4xf32>
    %38 = tpu.matmul %37, %16, %cst_34 {dimension_numbers = #tpu.dot_dimension_numbers<[1], [0], [0], [1], [0, 0, 1, 1], [], []>} : vector<8x32xf32>, vector<32x4xf32>, vector<8x4xf32> -> vector<8x4xf32>
    %39 = vector.broadcast %33 : vector<1x32xf32> to vector<8x32xf32>
    %40 = arith.mulf %22, %39 : vector<8x32xf32>
    %cst_35 = arith.constant dense<0.000000e+00> : vector<8x4xf32>
    %41 = tpu.matmul %40, %16, %cst_35 {dimension_numbers = #tpu.dot_dimension_numbers<[1], [0], [0], [1], [0, 0, 1, 1], [], []>} : vector<8x32xf32>, vector<32x4xf32>, vector<8x4xf32> -> vector<8x4xf32>
    %42 = arith.mulf %22, %23 : vector<8x32xf32>
    %cst_36 = arith.constant dense<0.000000e+00> : vector<8x4xf32>
    %43 = tpu.matmul %42, %16, %cst_36 {dimension_numbers = #tpu.dot_dimension_numbers<[1], [0], [0], [1], [0, 0, 1, 1], [], []>} : vector<8x32xf32>, vector<32x4xf32>, vector<8x4xf32> -> vector<8x4xf32>
    %44 = vector.broadcast %25 : vector<1x32xf32> to vector<8x32xf32>
    %45 = arith.mulf %22, %44 : vector<8x32xf32>
    %cst_37 = arith.constant dense<0.000000e+00> : vector<8x4xf32>
    %46 = tpu.matmul %45, %16, %cst_37 {dimension_numbers = #tpu.dot_dimension_numbers<[1], [0], [0], [1], [0, 0, 1, 1], [], []>} : vector<8x32xf32>, vector<32x4xf32>, vector<8x4xf32> -> vector<8x4xf32>
    %47 = arith.maximumf %36, %38 : vector<8x4xf32>
    %48 = arith.maximumf %41, %43 : vector<8x4xf32>
    %49 = arith.maximumf %47, %48 : vector<8x4xf32>
    %50 = arith.maximumf %49, %46 : vector<8x4xf32>
    %51 = arith.subf %36, %50 : vector<8x4xf32>
    %52 = math.exp %51 : vector<8x4xf32>
    %53 = arith.subf %38, %50 : vector<8x4xf32>
    %54 = math.exp %53 : vector<8x4xf32>
    %55 = arith.subf %41, %50 : vector<8x4xf32>
    %56 = math.exp %55 : vector<8x4xf32>
    %57 = arith.subf %43, %50 : vector<8x4xf32>
    %58 = math.exp %57 : vector<8x4xf32>
    %59 = arith.subf %46, %50 : vector<8x4xf32>
    %60 = math.exp %59 : vector<8x4xf32>
    %61 = arith.addf %52, %54 : vector<8x4xf32>
    %62 = arith.addf %61, %56 : vector<8x4xf32>
    %63 = arith.addf %62, %58 : vector<8x4xf32>
    %64 = arith.addf %63, %60 : vector<8x4xf32>
    %65 = tpu.reciprocal %64 {approx = true} : vector<8x4xf32> -> vector<8x4xf32>
    %66 = arith.mulf %64, %65 : vector<8x4xf32>
    %cst_38 = arith.constant 2.000000e+00 : f32
    %67 = vector.broadcast %cst_38 : f32 to vector<8x4xf32>
    %68 = arith.subf %67, %66 : vector<8x4xf32>
    %69 = arith.mulf %65, %68 : vector<8x4xf32>
    %70 = arith.mulf %52, %69 : vector<8x4xf32>
    %cst_39 = arith.constant dense<0.000000e+00> : vector<8x32xf32>
    %71 = tpu.matmul %70, %17, %cst_39 {dimension_numbers = #tpu.dot_dimension_numbers<[1], [0], [0], [1], [0, 0, 1, 1], [], []>} : vector<8x4xf32>, vector<4x32xf32>, vector<8x32xf32> -> vector<8x32xf32>
    %72 = arith.mulf %71, %32 : vector<8x32xf32>
    %73 = arith.mulf %54, %69 : vector<8x4xf32>
    %cst_40 = arith.constant dense<0.000000e+00> : vector<8x32xf32>
    %74 = tpu.matmul %73, %17, %cst_40 {dimension_numbers = #tpu.dot_dimension_numbers<[1], [0], [0], [1], [0, 0, 1, 1], [], []>} : vector<8x4xf32>, vector<4x32xf32>, vector<8x32xf32> -> vector<8x32xf32>
    %75 = arith.mulf %74, %24 : vector<8x32xf32>
    %76 = arith.addf %72, %75 : vector<8x32xf32>
    %77 = arith.mulf %56, %69 : vector<8x4xf32>
    %cst_41 = arith.constant dense<0.000000e+00> : vector<8x32xf32>
    %78 = tpu.matmul %77, %17, %cst_41 {dimension_numbers = #tpu.dot_dimension_numbers<[1], [0], [0], [1], [0, 0, 1, 1], [], []>} : vector<8x4xf32>, vector<4x32xf32>, vector<8x32xf32> -> vector<8x32xf32>
    %79 = vector.broadcast %34 : vector<1x32xf32> to vector<8x32xf32>
    %80 = arith.mulf %78, %79 : vector<8x32xf32>
    %81 = arith.addf %76, %80 : vector<8x32xf32>
    %82 = arith.mulf %58, %69 : vector<8x4xf32>
    %cst_42 = arith.constant dense<0.000000e+00> : vector<8x32xf32>
    %83 = tpu.matmul %82, %17, %cst_42 {dimension_numbers = #tpu.dot_dimension_numbers<[1], [0], [0], [1], [0, 0, 1, 1], [], []>} : vector<8x4xf32>, vector<4x32xf32>, vector<8x32xf32> -> vector<8x32xf32>
    %84 = arith.mulf %83, %24 : vector<8x32xf32>
    %85 = arith.addf %81, %84 : vector<8x32xf32>
    %86 = arith.mulf %60, %69 : vector<8x4xf32>
    %cst_43 = arith.constant dense<0.000000e+00> : vector<8x32xf32>
    %87 = tpu.matmul %86, %17, %cst_43 {dimension_numbers = #tpu.dot_dimension_numbers<[1], [0], [0], [1], [0, 0, 1, 1], [], []>} : vector<8x4xf32>, vector<4x32xf32>, vector<8x32xf32> -> vector<8x32xf32>
    %88 = vector.broadcast %26 : vector<1x32xf32> to vector<8x32xf32>
    %89 = arith.mulf %87, %88 : vector<8x32xf32>
    %90 = arith.addf %85, %89 : vector<8x32xf32>
    %cst_44 = arith.constant dense<0.000000e+00> : vector<8x32xf32>
    %91 = tpu.matmul %90, %5, %cst_44 {dimension_numbers = #tpu.dot_dimension_numbers<[1], [0], [0], [1], [0, 0, 1, 1], [], []>} : vector<8x32xf32>, vector<32x32xf32>, vector<8x32xf32> -> vector<8x32xf32>
    %92 = vector.broadcast %9 : vector<1x32xf32> to vector<8x32xf32>
    %93 = arith.addf %91, %92 : vector<8x32xf32>
    %cst_45 = arith.constant 0.000000e+00 : f32
    %94 = vector.broadcast %cst_45 : f32 to vector<8x32xf32>
    %95 = arith.maximumf %93, %94 : vector<8x32xf32>
    %cst_46 = arith.constant dense<0.000000e+00> : vector<8xf32>
    %96 = vector.multi_reduction <add>, %95, %cst_46 [1] : vector<8x32xf32> to vector<8xf32>
    %97 = vector.shape_cast %96 : vector<8xf32> to vector<8x1xf32>
    %cst_47 = arith.constant 3.200000e+01 : f32
    %98 = vector.broadcast %cst_47 : f32 to vector<8x1xf32>
    %99 = arith.divf %97, %98 : vector<8x1xf32>
    %100 = vector.broadcast %99 : vector<8x1xf32> to vector<8x32xf32>
    %101 = arith.subf %95, %100 : vector<8x32xf32>
    %102 = arith.mulf %101, %101 : vector<8x32xf32>
    %cst_48 = arith.constant dense<0.000000e+00> : vector<8xf32>
    %103 = vector.multi_reduction <add>, %102, %cst_48 [1] : vector<8x32xf32> to vector<8xf32>
    %104 = vector.shape_cast %103 : vector<8xf32> to vector<8x1xf32>
    %cst_49 = arith.constant 3.200000e+01 : f32
    %105 = vector.broadcast %cst_49 : f32 to vector<8x1xf32>
    %106 = arith.divf %104, %105 : vector<8x1xf32>
    %107 = vector.broadcast %99 : vector<8x1xf32> to vector<8x32xf32>
    %108 = arith.subf %95, %107 : vector<8x32xf32>
    %cst_50 = arith.constant 9.99999996E-13 : f32
    %109 = vector.broadcast %cst_50 : f32 to vector<8x1xf32>
    %110 = arith.addf %106, %109 : vector<8x1xf32>
    %111 = math.rsqrt %110 : vector<8x1xf32>
    %112 = vector.broadcast %111 : vector<8x1xf32> to vector<8x32xf32>
    %113 = arith.mulf %108, %112 : vector<8x32xf32>
    %114 = vector.broadcast %12 : vector<1x32xf32> to vector<8x32xf32>
    %115 = arith.mulf %114, %113 : vector<8x32xf32>
    %116 = vector.broadcast %13 : vector<1x32xf32> to vector<8x32xf32>
    %117 = arith.addf %115, %116 : vector<8x32xf32>
    %118 = tpu.concatenate %117, %3 in 0 : vector<8x32xf32>, vector<1x32xf32> -> vector<9x32xf32>
    %cst_51 = arith.constant dense<0.000000e+00> : vector<9x96xf32>
    %119 = tpu.matmul %118, %6, %cst_51 {dimension_numbers = #tpu.dot_dimension_numbers<[1], [0], [0], [1], [0, 0, 1, 1], [], []>} : vector<9x32xf32>, vector<32x96xf32>, vector<9x96xf32> -> vector<9x96xf32>
    %120 = vector.broadcast %10 : vector<1x96xf32> to vector<9x96xf32>
    %121 = arith.addf %119, %120 : vector<9x96xf32>
    %122 = vector.extract_strided_slice %121 {offsets = [8, 0], sizes = [1, 32], strides = [1, 1]} : vector<9x96xf32> to vector<1x32xf32>
    %123 = vector.extract_strided_slice %121 {offsets = [0, 32], sizes = [9, 32], strides = [1, 1]} : vector<9x96xf32> to vector<9x32xf32>
    %124 = vector.extract_strided_slice %121 {offsets = [0, 64], sizes = [9, 32], strides = [1, 1]} : vector<9x96xf32> to vector<9x32xf32>
    %125 = vector.broadcast %122 : vector<1x32xf32> to vector<9x32xf32>
    %126 = arith.mulf %125, %123 : vector<9x32xf32>
    %cst_52 = arith.constant dense<0.000000e+00> : vector<9x4xf32>
    %127 = tpu.matmul %126, %16, %cst_52 {dimension_numbers = #tpu.dot_dimension_numbers<[1], [0], [0], [1], [0, 0, 1, 1], [], []>} : vector<9x32xf32>, vector<32x4xf32>, vector<9x4xf32> -> vector<9x4xf32>
    %cst_53 = arith.constant dense<0xFF800000> : vector<4xf32>
    %128 = vector.multi_reduction <maximumf>, %127, %cst_53 [0] : vector<9x4xf32> to vector<4xf32>
    %129 = vector.shape_cast %128 : vector<4xf32> to vector<1x4xf32>
    %130 = vector.broadcast %129 : vector<1x4xf32> to vector<9x4xf32>
    %131 = arith.subf %127, %130 : vector<9x4xf32>
    %132 = math.exp %131 : vector<9x4xf32>
    %cst_54 = arith.constant dense<0.000000e+00> : vector<4xf32>
    %133 = vector.multi_reduction <add>, %132, %cst_54 [0] : vector<9x4xf32> to vector<4xf32>
    %134 = vector.shape_cast %133 : vector<4xf32> to vector<1x4xf32>
    %135 = tpu.reciprocal %134 {approx = true} : vector<1x4xf32> -> vector<1x4xf32>
    %136 = arith.mulf %134, %135 : vector<1x4xf32>
    %cst_55 = arith.constant 2.000000e+00 : f32
    %137 = vector.broadcast %cst_55 : f32 to vector<1x4xf32>
    %138 = arith.subf %137, %136 : vector<1x4xf32>
    %139 = arith.mulf %135, %138 : vector<1x4xf32>
    %140 = vector.broadcast %139 : vector<1x4xf32> to vector<9x4xf32>
    %141 = arith.mulf %132, %140 : vector<9x4xf32>
    %cst_56 = arith.constant dense<0.000000e+00> : vector<9x32xf32>
    %142 = tpu.matmul %141, %17, %cst_56 {dimension_numbers = #tpu.dot_dimension_numbers<[1], [0], [0], [1], [0, 0, 1, 1], [], []>} : vector<9x4xf32>, vector<4x32xf32>, vector<9x32xf32> -> vector<9x32xf32>
    %143 = arith.mulf %142, %124 : vector<9x32xf32>
    %cst_57 = arith.constant dense<0.000000e+00> : vector<32xf32>
    %144 = vector.multi_reduction <add>, %143, %cst_57 [0] : vector<9x32xf32> to vector<32xf32>
    %145 = vector.shape_cast %144 : vector<32xf32> to vector<1x32xf32>
    %cst_58 = arith.constant dense<0.000000e+00> : vector<1x32xf32>
    %146 = tpu.matmul %145, %7, %cst_58 {dimension_numbers = #tpu.dot_dimension_numbers<[1], [0], [0], [1], [0, 0, 1, 1], [], []>} : vector<1x32xf32>, vector<32x32xf32>, vector<1x32xf32> -> vector<1x32xf32>
    %147 = arith.addf %146, %11 : vector<1x32xf32>
    %cst_59 = arith.constant 0.000000e+00 : f32
    %148 = vector.broadcast %cst_59 : f32 to vector<1x32xf32>
    %149 = arith.maximumf %147, %148 : vector<1x32xf32>
    %cst_60 = arith.constant dense<0.000000e+00> : vector<1xf32>
    %150 = vector.multi_reduction <add>, %149, %cst_60 [1] : vector<1x32xf32> to vector<1xf32>
    %151 = vector.shape_cast %150 : vector<1xf32> to vector<1x1xf32>
    %cst_61 = arith.constant 3.200000e+01 : f32
    %152 = vector.broadcast %cst_61 : f32 to vector<1x1xf32>
    %153 = arith.divf %151, %152 : vector<1x1xf32>
    %154 = vector.broadcast %153 : vector<1x1xf32> to vector<1x32xf32>
    %155 = arith.subf %149, %154 : vector<1x32xf32>
    %156 = arith.mulf %155, %155 : vector<1x32xf32>
    %cst_62 = arith.constant dense<0.000000e+00> : vector<1xf32>
    %157 = vector.multi_reduction <add>, %156, %cst_62 [1] : vector<1x32xf32> to vector<1xf32>
    %158 = vector.shape_cast %157 : vector<1xf32> to vector<1x1xf32>
    %cst_63 = arith.constant 3.200000e+01 : f32
    %159 = vector.broadcast %cst_63 : f32 to vector<1x1xf32>
    %160 = arith.divf %158, %159 : vector<1x1xf32>
    %161 = vector.broadcast %153 : vector<1x1xf32> to vector<1x32xf32>
    %162 = arith.subf %149, %161 : vector<1x32xf32>
    %cst_64 = arith.constant 9.99999996E-13 : f32
    %163 = vector.broadcast %cst_64 : f32 to vector<1x1xf32>
    %164 = arith.addf %160, %163 : vector<1x1xf32>
    %165 = math.rsqrt %164 : vector<1x1xf32>
    %166 = vector.broadcast %165 : vector<1x1xf32> to vector<1x32xf32>
    %167 = arith.mulf %162, %166 : vector<1x32xf32>
    %168 = arith.mulf %14, %167 : vector<1x32xf32>
    %169 = arith.addf %168, %15 : vector<1x32xf32>
    %170 = tpu.concatenate %117, %169 in 0 : vector<8x32xf32>, vector<1x32xf32> -> vector<9x32xf32>
    %cst_65 = arith.constant dense<0.000000e+00> : vector<9x96xf32>
    %171 = tpu.matmul %170, %4, %cst_65 {dimension_numbers = #tpu.dot_dimension_numbers<[1], [0], [0], [1], [0, 0, 1, 1], [], []>} : vector<9x32xf32>, vector<32x96xf32>, vector<9x96xf32> -> vector<9x96xf32>
    %172 = vector.broadcast %8 : vector<1x96xf32> to vector<9x96xf32>
    %173 = arith.addf %171, %172 : vector<9x96xf32>
    %174 = vector.extract_strided_slice %173 {offsets = [0, 0], sizes = [8, 32], strides = [1, 1]} : vector<9x96xf32> to vector<8x32xf32>
    %175 = vector.extract_strided_slice %173 {offsets = [0, 32], sizes = [8, 32], strides = [1, 1]} : vector<9x96xf32> to vector<8x32xf32>
    %176 = vector.extract_strided_slice %173 {offsets = [0, 64], sizes = [8, 32], strides = [1, 1]} : vector<9x96xf32> to vector<8x32xf32>
    %177 = vector.extract_strided_slice %173 {offsets = [8, 32], sizes = [1, 32], strides = [1, 1]} : vector<9x96xf32> to vector<1x32xf32>
    %178 = vector.extract_strided_slice %173 {offsets = [8, 64], sizes = [1, 32], strides = [1, 1]} : vector<9x96xf32> to vector<1x32xf32>
    %179 = vector.extract_strided_slice %175 {offsets = [1, 0], sizes = [7, 32], strides = [1, 1]} : vector<8x32xf32> to vector<7x32xf32>
    %180 = vector.extract_strided_slice %175 {offsets = [1, 0], sizes = [1, 32], strides = [1, 1]} : vector<8x32xf32> to vector<1x32xf32>
    %181 = tpu.concatenate %179, %180 in 0 : vector<7x32xf32>, vector<1x32xf32> -> vector<8x32xf32>
    %182 = vector.extract_strided_slice %176 {offsets = [1, 0], sizes = [7, 32], strides = [1, 1]} : vector<8x32xf32> to vector<7x32xf32>
    %183 = vector.extract_strided_slice %176 {offsets = [1, 0], sizes = [1, 32], strides = [1, 1]} : vector<8x32xf32> to vector<1x32xf32>
    %184 = tpu.concatenate %182, %183 in 0 : vector<7x32xf32>, vector<1x32xf32> -> vector<8x32xf32>
    %185 = vector.extract_strided_slice %175 {offsets = [0, 0], sizes = [1, 32], strides = [1, 1]} : vector<8x32xf32> to vector<1x32xf32>
    %186 = vector.extract_strided_slice %176 {offsets = [0, 0], sizes = [1, 32], strides = [1, 1]} : vector<8x32xf32> to vector<1x32xf32>
    %187 = arith.mulf %174, %181 : vector<8x32xf32>
    %cst_66 = arith.constant dense<0.000000e+00> : vector<8x4xf32>
    %188 = tpu.matmul %187, %16, %cst_66 {dimension_numbers = #tpu.dot_dimension_numbers<[1], [0], [0], [1], [0, 0, 1, 1], [], []>} : vector<8x32xf32>, vector<32x4xf32>, vector<8x4xf32> -> vector<8x4xf32>
    %189 = arith.mulf %174, %175 : vector<8x32xf32>
    %cst_67 = arith.constant dense<0.000000e+00> : vector<8x4xf32>
    %190 = tpu.matmul %189, %16, %cst_67 {dimension_numbers = #tpu.dot_dimension_numbers<[1], [0], [0], [1], [0, 0, 1, 1], [], []>} : vector<8x32xf32>, vector<32x4xf32>, vector<8x4xf32> -> vector<8x4xf32>
    %191 = vector.broadcast %185 : vector<1x32xf32> to vector<8x32xf32>
    %192 = arith.mulf %174, %191 : vector<8x32xf32>
    %cst_68 = arith.constant dense<0.000000e+00> : vector<8x4xf32>
    %193 = tpu.matmul %192, %16, %cst_68 {dimension_numbers = #tpu.dot_dimension_numbers<[1], [0], [0], [1], [0, 0, 1, 1], [], []>} : vector<8x32xf32>, vector<32x4xf32>, vector<8x4xf32> -> vector<8x4xf32>
    %194 = arith.mulf %174, %23 : vector<8x32xf32>
    %cst_69 = arith.constant dense<0.000000e+00> : vector<8x4xf32>
    %195 = tpu.matmul %194, %16, %cst_69 {dimension_numbers = #tpu.dot_dimension_numbers<[1], [0], [0], [1], [0, 0, 1, 1], [], []>} : vector<8x32xf32>, vector<32x4xf32>, vector<8x4xf32> -> vector<8x4xf32>
    %196 = vector.broadcast %177 : vector<1x32xf32> to vector<8x32xf32>
    %197 = arith.mulf %174, %196 : vector<8x32xf32>
    %cst_70 = arith.constant dense<0.000000e+00> : vector<8x4xf32>
    %198 = tpu.matmul %197, %16, %cst_70 {dimension_numbers = #tpu.dot_dimension_numbers<[1], [0], [0], [1], [0, 0, 1, 1], [], []>} : vector<8x32xf32>, vector<32x4xf32>, vector<8x4xf32> -> vector<8x4xf32>
    %199 = arith.maximumf %188, %190 : vector<8x4xf32>
    %200 = arith.maximumf %193, %195 : vector<8x4xf32>
    %201 = arith.maximumf %199, %200 : vector<8x4xf32>
    %202 = arith.maximumf %201, %198 : vector<8x4xf32>
    %203 = arith.subf %188, %202 : vector<8x4xf32>
    %204 = math.exp %203 : vector<8x4xf32>
    %205 = arith.subf %190, %202 : vector<8x4xf32>
    %206 = math.exp %205 : vector<8x4xf32>
    %207 = arith.subf %193, %202 : vector<8x4xf32>
    %208 = math.exp %207 : vector<8x4xf32>
    %209 = arith.subf %195, %202 : vector<8x4xf32>
    %210 = math.exp %209 : vector<8x4xf32>
    %211 = arith.subf %198, %202 : vector<8x4xf32>
    %212 = math.exp %211 : vector<8x4xf32>
    %213 = arith.addf %204, %206 : vector<8x4xf32>
    %214 = arith.addf %213, %208 : vector<8x4xf32>
    %215 = arith.addf %214, %210 : vector<8x4xf32>
    %216 = arith.addf %215, %212 : vector<8x4xf32>
    %217 = tpu.reciprocal %216 {approx = true} : vector<8x4xf32> -> vector<8x4xf32>
    %218 = arith.mulf %216, %217 : vector<8x4xf32>
    %cst_71 = arith.constant 2.000000e+00 : f32
    %219 = vector.broadcast %cst_71 : f32 to vector<8x4xf32>
    %220 = arith.subf %219, %218 : vector<8x4xf32>
    %221 = arith.mulf %217, %220 : vector<8x4xf32>
    %222 = arith.mulf %204, %221 : vector<8x4xf32>
    %cst_72 = arith.constant dense<0.000000e+00> : vector<8x32xf32>
    %223 = tpu.matmul %222, %17, %cst_72 {dimension_numbers = #tpu.dot_dimension_numbers<[1], [0], [0], [1], [0, 0, 1, 1], [], []>} : vector<8x4xf32>, vector<4x32xf32>, vector<8x32xf32> -> vector<8x32xf32>
    %224 = arith.mulf %223, %184 : vector<8x32xf32>
    %225 = arith.mulf %206, %221 : vector<8x4xf32>
    %cst_73 = arith.constant dense<0.000000e+00> : vector<8x32xf32>
    %226 = tpu.matmul %225, %17, %cst_73 {dimension_numbers = #tpu.dot_dimension_numbers<[1], [0], [0], [1], [0, 0, 1, 1], [], []>} : vector<8x4xf32>, vector<4x32xf32>, vector<8x32xf32> -> vector<8x32xf32>
    %227 = arith.mulf %226, %176 : vector<8x32xf32>
    %228 = arith.addf %224, %227 : vector<8x32xf32>
    %229 = arith.mulf %208, %221 : vector<8x4xf32>
    %cst_74 = arith.constant dense<0.000000e+00> : vector<8x32xf32>
    %230 = tpu.matmul %229, %17, %cst_74 {dimension_numbers = #tpu.dot_dimension_numbers<[1], [0], [0], [1], [0, 0, 1, 1], [], []>} : vector<8x4xf32>, vector<4x32xf32>, vector<8x32xf32> -> vector<8x32xf32>
    %231 = vector.broadcast %186 : vector<1x32xf32> to vector<8x32xf32>
    %232 = arith.mulf %230, %231 : vector<8x32xf32>
    %233 = arith.addf %228, %232 : vector<8x32xf32>
    %234 = arith.mulf %210, %221 : vector<8x4xf32>
    %cst_75 = arith.constant dense<0.000000e+00> : vector<8x32xf32>
    %235 = tpu.matmul %234, %17, %cst_75 {dimension_numbers = #tpu.dot_dimension_numbers<[1], [0], [0], [1], [0, 0, 1, 1], [], []>} : vector<8x4xf32>, vector<4x32xf32>, vector<8x32xf32> -> vector<8x32xf32>
    %236 = arith.mulf %235, %24 : vector<8x32xf32>
    %237 = arith.addf %233, %236 : vector<8x32xf32>
    %238 = arith.mulf %212, %221 : vector<8x4xf32>
    %cst_76 = arith.constant dense<0.000000e+00> : vector<8x32xf32>
    %239 = tpu.matmul %238, %17, %cst_76 {dimension_numbers = #tpu.dot_dimension_numbers<[1], [0], [0], [1], [0, 0, 1, 1], [], []>} : vector<8x4xf32>, vector<4x32xf32>, vector<8x32xf32> -> vector<8x32xf32>
    %240 = vector.broadcast %178 : vector<1x32xf32> to vector<8x32xf32>
    %241 = arith.mulf %239, %240 : vector<8x32xf32>
    %242 = arith.addf %237, %241 : vector<8x32xf32>
    %cst_77 = arith.constant dense<0.000000e+00> : vector<8x32xf32>
    %243 = tpu.matmul %242, %5, %cst_77 {dimension_numbers = #tpu.dot_dimension_numbers<[1], [0], [0], [1], [0, 0, 1, 1], [], []>} : vector<8x32xf32>, vector<32x32xf32>, vector<8x32xf32> -> vector<8x32xf32>
    %244 = vector.broadcast %9 : vector<1x32xf32> to vector<8x32xf32>
    %245 = arith.addf %243, %244 : vector<8x32xf32>
    %cst_78 = arith.constant 0.000000e+00 : f32
    %246 = vector.broadcast %cst_78 : f32 to vector<8x32xf32>
    %247 = arith.maximumf %245, %246 : vector<8x32xf32>
    %cst_79 = arith.constant dense<0.000000e+00> : vector<8xf32>
    %248 = vector.multi_reduction <add>, %247, %cst_79 [1] : vector<8x32xf32> to vector<8xf32>
    %249 = vector.shape_cast %248 : vector<8xf32> to vector<8x1xf32>
    %cst_80 = arith.constant 3.200000e+01 : f32
    %250 = vector.broadcast %cst_80 : f32 to vector<8x1xf32>
    %251 = arith.divf %249, %250 : vector<8x1xf32>
    %252 = vector.broadcast %251 : vector<8x1xf32> to vector<8x32xf32>
    %253 = arith.subf %247, %252 : vector<8x32xf32>
    %254 = arith.mulf %253, %253 : vector<8x32xf32>
    %cst_81 = arith.constant dense<0.000000e+00> : vector<8xf32>
    %255 = vector.multi_reduction <add>, %254, %cst_81 [1] : vector<8x32xf32> to vector<8xf32>
    %256 = vector.shape_cast %255 : vector<8xf32> to vector<8x1xf32>
    %cst_82 = arith.constant 3.200000e+01 : f32
    %257 = vector.broadcast %cst_82 : f32 to vector<8x1xf32>
    %258 = arith.divf %256, %257 : vector<8x1xf32>
    %259 = vector.broadcast %251 : vector<8x1xf32> to vector<8x32xf32>
    %260 = arith.subf %247, %259 : vector<8x32xf32>
    %cst_83 = arith.constant 9.99999996E-13 : f32
    %261 = vector.broadcast %cst_83 : f32 to vector<8x1xf32>
    %262 = arith.addf %258, %261 : vector<8x1xf32>
    %263 = math.rsqrt %262 : vector<8x1xf32>
    %264 = vector.broadcast %263 : vector<8x1xf32> to vector<8x32xf32>
    %265 = arith.mulf %260, %264 : vector<8x32xf32>
    %266 = vector.broadcast %12 : vector<1x32xf32> to vector<8x32xf32>
    %267 = arith.mulf %266, %265 : vector<8x32xf32>
    %268 = vector.broadcast %13 : vector<1x32xf32> to vector<8x32xf32>
    %269 = arith.addf %267, %268 : vector<8x32xf32>
    %270 = tpu.concatenate %269, %169 in 0 : vector<8x32xf32>, vector<1x32xf32> -> vector<9x32xf32>
    %cst_84 = arith.constant dense<0.000000e+00> : vector<9x96xf32>
    %271 = tpu.matmul %270, %6, %cst_84 {dimension_numbers = #tpu.dot_dimension_numbers<[1], [0], [0], [1], [0, 0, 1, 1], [], []>} : vector<9x32xf32>, vector<32x96xf32>, vector<9x96xf32> -> vector<9x96xf32>
    %272 = vector.broadcast %10 : vector<1x96xf32> to vector<9x96xf32>
    %273 = arith.addf %271, %272 : vector<9x96xf32>
    %274 = vector.extract_strided_slice %273 {offsets = [8, 0], sizes = [1, 32], strides = [1, 1]} : vector<9x96xf32> to vector<1x32xf32>
    %275 = vector.extract_strided_slice %273 {offsets = [0, 32], sizes = [9, 32], strides = [1, 1]} : vector<9x96xf32> to vector<9x32xf32>
    %276 = vector.extract_strided_slice %273 {offsets = [0, 64], sizes = [9, 32], strides = [1, 1]} : vector<9x96xf32> to vector<9x32xf32>
    %277 = vector.broadcast %274 : vector<1x32xf32> to vector<9x32xf32>
    %278 = arith.mulf %277, %275 : vector<9x32xf32>
    %cst_85 = arith.constant dense<0.000000e+00> : vector<9x4xf32>
    %279 = tpu.matmul %278, %16, %cst_85 {dimension_numbers = #tpu.dot_dimension_numbers<[1], [0], [0], [1], [0, 0, 1, 1], [], []>} : vector<9x32xf32>, vector<32x4xf32>, vector<9x4xf32> -> vector<9x4xf32>
    %cst_86 = arith.constant dense<0xFF800000> : vector<4xf32>
    %280 = vector.multi_reduction <maximumf>, %279, %cst_86 [0] : vector<9x4xf32> to vector<4xf32>
    %281 = vector.shape_cast %280 : vector<4xf32> to vector<1x4xf32>
    %282 = vector.broadcast %281 : vector<1x4xf32> to vector<9x4xf32>
    %283 = arith.subf %279, %282 : vector<9x4xf32>
    %284 = math.exp %283 : vector<9x4xf32>
    %cst_87 = arith.constant dense<0.000000e+00> : vector<4xf32>
    %285 = vector.multi_reduction <add>, %284, %cst_87 [0] : vector<9x4xf32> to vector<4xf32>
    %286 = vector.shape_cast %285 : vector<4xf32> to vector<1x4xf32>
    %287 = tpu.reciprocal %286 {approx = true} : vector<1x4xf32> -> vector<1x4xf32>
    %288 = arith.mulf %286, %287 : vector<1x4xf32>
    %cst_88 = arith.constant 2.000000e+00 : f32
    %289 = vector.broadcast %cst_88 : f32 to vector<1x4xf32>
    %290 = arith.subf %289, %288 : vector<1x4xf32>
    %291 = arith.mulf %287, %290 : vector<1x4xf32>
    %292 = vector.broadcast %291 : vector<1x4xf32> to vector<9x4xf32>
    %293 = arith.mulf %284, %292 : vector<9x4xf32>
    %cst_89 = arith.constant dense<0.000000e+00> : vector<9x32xf32>
    %294 = tpu.matmul %293, %17, %cst_89 {dimension_numbers = #tpu.dot_dimension_numbers<[1], [0], [0], [1], [0, 0, 1, 1], [], []>} : vector<9x4xf32>, vector<4x32xf32>, vector<9x32xf32> -> vector<9x32xf32>
    %295 = arith.mulf %294, %276 : vector<9x32xf32>
    %cst_90 = arith.constant dense<0.000000e+00> : vector<32xf32>
    %296 = vector.multi_reduction <add>, %295, %cst_90 [0] : vector<9x32xf32> to vector<32xf32>
    %297 = vector.shape_cast %296 : vector<32xf32> to vector<1x32xf32>
    %cst_91 = arith.constant dense<0.000000e+00> : vector<1x32xf32>
    %298 = tpu.matmul %297, %7, %cst_91 {dimension_numbers = #tpu.dot_dimension_numbers<[1], [0], [0], [1], [0, 0, 1, 1], [], []>} : vector<1x32xf32>, vector<32x32xf32>, vector<1x32xf32> -> vector<1x32xf32>
    %299 = arith.addf %298, %11 : vector<1x32xf32>
    %cst_92 = arith.constant 0.000000e+00 : f32
    %300 = vector.broadcast %cst_92 : f32 to vector<1x32xf32>
    %301 = arith.maximumf %299, %300 : vector<1x32xf32>
    %cst_93 = arith.constant dense<0.000000e+00> : vector<1xf32>
    %302 = vector.multi_reduction <add>, %301, %cst_93 [1] : vector<1x32xf32> to vector<1xf32>
    %303 = vector.shape_cast %302 : vector<1xf32> to vector<1x1xf32>
    %cst_94 = arith.constant 3.200000e+01 : f32
    %304 = vector.broadcast %cst_94 : f32 to vector<1x1xf32>
    %305 = arith.divf %303, %304 : vector<1x1xf32>
    %306 = vector.broadcast %305 : vector<1x1xf32> to vector<1x32xf32>
    %307 = arith.subf %301, %306 : vector<1x32xf32>
    %308 = arith.mulf %307, %307 : vector<1x32xf32>
    %cst_95 = arith.constant dense<0.000000e+00> : vector<1xf32>
    %309 = vector.multi_reduction <add>, %308, %cst_95 [1] : vector<1x32xf32> to vector<1xf32>
    %310 = vector.shape_cast %309 : vector<1xf32> to vector<1x1xf32>
    %cst_96 = arith.constant 3.200000e+01 : f32
    %311 = vector.broadcast %cst_96 : f32 to vector<1x1xf32>
    %312 = arith.divf %310, %311 : vector<1x1xf32>
    %313 = vector.broadcast %305 : vector<1x1xf32> to vector<1x32xf32>
    %314 = arith.subf %301, %313 : vector<1x32xf32>
    %cst_97 = arith.constant 9.99999996E-13 : f32
    %315 = vector.broadcast %cst_97 : f32 to vector<1x1xf32>
    %316 = arith.addf %312, %315 : vector<1x1xf32>
    %317 = math.rsqrt %316 : vector<1x1xf32>
    %318 = vector.broadcast %317 : vector<1x1xf32> to vector<1x32xf32>
    %319 = arith.mulf %314, %318 : vector<1x32xf32>
    %320 = arith.mulf %14, %319 : vector<1x32xf32>
    %321 = arith.addf %320, %15 : vector<1x32xf32>
    %322 = vector.shape_cast %269 : vector<8x32xf32> to vector<1x8x32xf32>
    %c0_98 = arith.constant 0 : index
    %c0_99 = arith.constant 0 : index
    %c0_100 = arith.constant 0 : index
    %323 = vector.load %arg17[%c0_98, %c0_99, %c0_100] : memref<1x8x32xf32, #tpu.memory_space<vmem>>, vector<1x8x32xf32>
    tpu.vector_store %arg17[%c0_98, %c0_99, %c0_100], %322 {strides = array<i32>} : memref<1x8x32xf32, #tpu.memory_space<vmem>>, vector<1x8x32xf32>,
    %324 = vector.shape_cast %321 : vector<1x32xf32> to vector<1x1x32xf32>
    %c0_101 = arith.constant 0 : index
    %c0_102 = arith.constant 0 : index
    %c0_103 = arith.constant 0 : index
    %325 = vector.load %arg18[%c0_101, %c0_102, %c0_103] : memref<1x1x32xf32, #tpu.memory_space<vmem>>, vector<1x1x32xf32>
    tpu.vector_store %arg18[%c0_101, %c0_102, %c0_103], %324 {strides = array<i32>} : memref<1x1x32xf32, #tpu.memory_space<vmem>>, vector<1x1x32xf32>,
    return
  }
  func.func @transform_0(%arg0: i32) -> (i32, i32, i32) {
    %c0_i32 = arith.constant 0 : i32
    %c0_i32_0 = arith.constant 0 : i32
    %c0_i32_1 = arith.constant 0 : i32
    return %arg0, %c0_i32, %c0_i32_0 : i32, i32, i32
  }
  func.func @transform_1(%arg0: i32) -> (i32, i32, i32) {
    %c0_i32 = arith.constant 0 : i32
    %c0_i32_0 = arith.constant 0 : i32
    %c0_i32_1 = arith.constant 0 : i32
    return %arg0, %c0_i32, %c0_i32_0 : i32, i32, i32
  }
  func.func @transform_2(%arg0: i32) -> (i32, i32) {
    %c0_i32 = arith.constant 0 : i32
    %c0_i32_0 = arith.constant 0 : i32
    %c0_i32_1 = arith.constant 0 : i32
    return %c0_i32, %c0_i32_0 : i32, i32
  }
  func.func @transform_3(%arg0: i32) -> (i32, i32) {
    %c0_i32 = arith.constant 0 : i32
    %c0_i32_0 = arith.constant 0 : i32
    %c0_i32_1 = arith.constant 0 : i32
    return %c0_i32, %c0_i32_0 : i32, i32
  }
  func.func @transform_4(%arg0: i32) -> (i32, i32) {
    %c0_i32 = arith.constant 0 : i32
    %c0_i32_0 = arith.constant 0 : i32
    %c0_i32_1 = arith.constant 0 : i32
    return %c0_i32, %c0_i32_0 : i32, i32
  }
  func.func @transform_5(%arg0: i32) -> (i32, i32) {
    %c0_i32 = arith.constant 0 : i32
    %c0_i32_0 = arith.constant 0 : i32
    %c0_i32_1 = arith.constant 0 : i32
    return %c0_i32, %c0_i32_0 : i32, i32
  }
  func.func @transform_6(%arg0: i32) -> (i32, i32) {
    %c0_i32 = arith.constant 0 : i32
    %c0_i32_0 = arith.constant 0 : i32
    %c0_i32_1 = arith.constant 0 : i32
    return %c0_i32, %c0_i32_0 : i32, i32
  }
  func.func @transform_7(%arg0: i32) -> (i32, i32) {
    %c0_i32 = arith.constant 0 : i32
    %c0_i32_0 = arith.constant 0 : i32
    %c0_i32_1 = arith.constant 0 : i32
    return %c0_i32, %c0_i32_0 : i32, i32
  }
  func.func @transform_8(%arg0: i32) -> (i32, i32) {
    %c0_i32 = arith.constant 0 : i32
    %c0_i32_0 = arith.constant 0 : i32
    %c0_i32_1 = arith.constant 0 : i32
    return %c0_i32, %c0_i32_0 : i32, i32
  }
  func.func @transform_9(%arg0: i32) -> (i32, i32) {
    %c0_i32 = arith.constant 0 : i32
    %c0_i32_0 = arith.constant 0 : i32
    %c0_i32_1 = arith.constant 0 : i32
    return %c0_i32, %c0_i32_0 : i32, i32
  }
  func.func @transform_10(%arg0: i32) -> (i32, i32) {
    %c0_i32 = arith.constant 0 : i32
    %c0_i32_0 = arith.constant 0 : i32
    %c0_i32_1 = arith.constant 0 : i32
    return %c0_i32, %c0_i32_0 : i32, i32
  }
  func.func @transform_11(%arg0: i32) -> (i32, i32) {
    %c0_i32 = arith.constant 0 : i32
    %c0_i32_0 = arith.constant 0 : i32
    %c0_i32_1 = arith.constant 0 : i32
    return %c0_i32, %c0_i32_0 : i32, i32
  }
  func.func @transform_12(%arg0: i32) -> (i32, i32) {
    %c0_i32 = arith.constant 0 : i32
    %c0_i32_0 = arith.constant 0 : i32
    %c0_i32_1 = arith.constant 0 : i32
    return %c0_i32, %c0_i32_0 : i32, i32
  }
  func.func @transform_13(%arg0: i32) -> (i32, i32) {
    %c0_i32 = arith.constant 0 : i32
    %c0_i32_0 = arith.constant 0 : i32
    %c0_i32_1 = arith.constant 0 : i32
    return %c0_i32, %c0_i32_0 : i32, i32
  }
  func.func @transform_14(%arg0: i32) -> (i32, i32) {
    %c0_i32 = arith.constant 0 : i32
    %c0_i32_0 = arith.constant 0 : i32
    %c0_i32_1 = arith.constant 0 : i32
    return %c0_i32, %c0_i32_0 : i32, i32
  }
  func.func @transform_15(%arg0: i32) -> (i32, i32) {
    %c0_i32 = arith.constant 0 : i32
    %c0_i32_0 = arith.constant 0 : i32
    %c0_i32_1 = arith.constant 0 : i32
    return %c0_i32, %c0_i32_0 : i32, i32
  }
  func.func @transform_16(%arg0: i32) -> (i32, i32, i32) {
    %c0_i32 = arith.constant 0 : i32
    %c0_i32_0 = arith.constant 0 : i32
    %c0_i32_1 = arith.constant 0 : i32
    return %arg0, %c0_i32, %c0_i32_0 : i32, i32, i32
  }
  func.func @transform_17(%arg0: i32) -> (i32, i32, i32) {
    %c0_i32 = arith.constant 0 : i32
    %c0_i32_0 = arith.constant 0 : i32
    %c0_i32_1 = arith.constant 0 : i32
    return %arg0, %c0_i32, %c0_i32_0 : i32, i32, i32
  }
}

</mosaic_0001>

<llo_original>
// kernel: star_transformer_layer.1
$region0: #{star_transformer_layer.1}
  #allocation0 [shape = 'u32[]', space=smem, size = 0x4, offset = 0x4, fixed_abs, tag = 'smem constant byte address 0x4 - core index']
  #allocation1 [shape = 'u32[144,128]{1,0:T(1,128)}', space=vmem, size = 0x12000, scoped, tag = 'internal scratch']
  %s0 = inlined_call_operand.vmem [shape: f32[2,8,32], index: 0, kind: input, shape index: {}]
  %s1 = inlined_call_operand.vmem [shape: f32[2,1,32], index: 1, kind: input, shape index: {}]
  %s2 = inlined_call_operand.vmem [shape: f32[32,96], index: 2, kind: input, shape index: {}]
  %s3 = inlined_call_operand.vmem [shape: f32[1,96], index: 3, kind: input, shape index: {}]
  %s4 = inlined_call_operand.vmem [shape: f32[32,32], index: 4, kind: input, shape index: {}]
  %s5 = inlined_call_operand.vmem [shape: f32[1,32], index: 5, kind: input, shape index: {}]
  %s6 = inlined_call_operand.vmem [shape: f32[32,96], index: 6, kind: input, shape index: {}]
  %s7 = inlined_call_operand.vmem [shape: f32[1,96], index: 7, kind: input, shape index: {}]
  %s8 = inlined_call_operand.vmem [shape: f32[32,32], index: 8, kind: input, shape index: {}]
  %s9 = inlined_call_operand.vmem [shape: f32[1,32], index: 9, kind: input, shape index: {}]
  %s10 = inlined_call_operand.vmem [shape: f32[1,32], index: 10, kind: input, shape index: {}]
  %s11 = inlined_call_operand.vmem [shape: f32[1,32], index: 11, kind: input, shape index: {}]
  %s12 = inlined_call_operand.vmem [shape: f32[1,32], index: 12, kind: input, shape index: {}]
  %s13 = inlined_call_operand.vmem [shape: f32[1,32], index: 13, kind: input, shape index: {}]
  %s14 = inlined_call_operand.vmem [shape: f32[32,4], index: 14, kind: input, shape index: {}]
  %s15 = inlined_call_operand.vmem [shape: f32[4,32], index: 15, kind: input, shape index: {}]
  %s16 = inlined_call_operand.hbm [shape: f32[2,8,32], index: 16, kind: output, shape index: {0}]
  %s17 = inlined_call_operand.hbm [shape: f32[2,1,32], index: 17, kind: output, shape index: {1}]
  %18 = xla_tuple %s16, %s17
  %s19 = sld [smem:[#allocation0]]
  $region105: #{star_transformer_layer.1} parent=0
    _
  %s21 = ssub.s32 1, %s19
  %s22 = scalar_select 0, %s21, %s19
  $region1: #{star_transformer_layer.1} parent=0
    #allocation2 [shape = 'u8[8192]{0}', space=vmem, size = 0x2000, scoped, tag = 'output window, operand 0']
    #allocation3 [shape = 's32[2]{0}', space=sflag, size = 0x8, scoped, tag = 'scoped memory for star_transformer_layer.1']
    #allocation4 [shape = 'u8[1024]{0}', space=vmem, size = 0x400, scoped, tag = 'output window, operand 1']
    #allocation5 [shape = 's32[2]{0}', space=sflag, size = 0x8, scoped, tag = 'scoped memory for star_transformer_layer.1']
    %23 = vsyncpa [#allocation3], 0
    %s24 = scalar_lea.sflag [#allocation3], 1
    %25 = vsyncpa %s24, 0
    %26 = vsyncpa [#allocation5], 0
    %s27 = scalar_lea.sflag [#allocation5], 1
    %28 = vsyncpa %s27, 0
    loop: start=0, step=1, limit=4
    $region2: #{star_transformer_layer.1} parent=1 // loop_pre_header
      _
    $region3: #{star_transformer_layer.1} parent=1 // loop_header
      %s30 = sphi 0, %s34
      %p31 = scmp.ge.s32.totalorder %s30, 4
      %s40 = sphi 0, %s42
      %s43 = sphi 0, %s40
      %s44 = sphi 0, %s43
      %s60 = sphi 0, %s44
      %s66 = sphi 0, %s68
      %s69 = sphi 0, %s66
      %s70 = sphi 0, %s69
      %s86 = sphi 0, %s70
      %s90 = sphi 0, %s90
      %s92 = sphi 0, %s90
      %s93 = sphi 0, %s92
      %s107 = sphi 0, %s93
      %s111 = sphi 0, %s111
      %s113 = sphi 0, %s111
      %s114 = sphi 0, %s113
      %s128 = sphi 0, %s114
      %s132 = sphi 0, %s132
      %s134 = sphi 0, %s132
      %s135 = sphi 0, %s134
      %s149 = sphi 0, %s135
      %s153 = sphi 0, %s153
      %s155 = sphi 0, %s153
      %s156 = sphi 0, %s155
      %s170 = sphi 0, %s156
      %s174 = sphi 0, %s174
      %s176 = sphi 0, %s174
      %s177 = sphi 0, %s176
      %s191 = sphi 0, %s177
      %s195 = sphi 0, %s195
      %s197 = sphi 0, %s195
      %s198 = sphi 0, %s197
      %s212 = sphi 0, %s198
      %s216 = sphi 0, %s216
      %s218 = sphi 0, %s216
      %s219 = sphi 0, %s218
      %s233 = sphi 0, %s219
      %s237 = sphi 0, %s237
      %s239 = sphi 0, %s237
      %s240 = sphi 0, %s239
      %s254 = sphi 0, %s240
      %s258 = sphi 0, %s258
      %s260 = sphi 0, %s258
      %s261 = sphi 0, %s260
      %s275 = sphi 0, %s261
      %s279 = sphi 0, %s279
      %s281 = sphi 0, %s279
      %s282 = sphi 0, %s281
      %s296 = sphi 0, %s282
      %s300 = sphi 0, %s300
      %s302 = sphi 0, %s300
      %s303 = sphi 0, %s302
      %s317 = sphi 0, %s303
      %s321 = sphi 0, %s321
      %s323 = sphi 0, %s321
      %s324 = sphi 0, %s323
      %s338 = sphi 0, %s324
      %s342 = sphi 0, %s342
      %s344 = sphi 0, %s342
      %s345 = sphi 0, %s344
      %s359 = sphi 0, %s345
      %s363 = sphi 0, %s363
      %s365 = sphi 0, %s363
      %s366 = sphi 0, %s365
      %s380 = sphi 0, %s366
      %s386 = sphi 0, %s388
      %s389 = sphi 0, %s386
      %s390 = sphi 0, %s389
      %s406 = sphi 0, %s390
      %s412 = sphi 0, %s414
      %s415 = sphi 0, %s412
      %s416 = sphi 0, %s415
      %s432 = sphi 0, %s416
    $region4: #{star_transformer_layer.1} parent=1 // loop_header_branch
      %33 = sbr.rel (%p31) target = $region8
    $region5: #{star_transformer_layer.1} parent=1 // loop_body
      %s35 = ssub.s32 %s30, 1
      %s36 = ssub.s32 %s30, 2
      %s37 = sadd.s32 %s30, 1
      %s38 = ssub.s32 %s30, %s37
      %p39 = scmp.eq.s32.totalorder %s38, 0
      %s41 = sadd.s32 %s40, 1
      %s42 = scalar_select %p39, %s40, %s41
      %p45 = pneg %p39
      %p46 = scmp.eq.s32.totalorder %s30, 1
      %p47 = por %p45, %p46
      %p48 = scmp.ne.s32.totalorder %s40, %s43
      %p49 = scmp.eq.s32.totalorder %s30, 0
      %p50 = por %p48, %p49
      %p51 = scmp.ne.s32.totalorder %s40, %s43
      %p52 = scmp.eq.s32.totalorder %s35, 1
      %p53 = por %p51, %p52
      %p54 = scmp.ne.s32.totalorder %s43, %s44
      %p55 = scmp.eq.s32.totalorder %s35, 0
      %p56 = por %p54, %p55
      %p57 = scmp.ne.s32.totalorder %s43, %s44
      %p58 = scmp.eq.s32.totalorder %s36, 1
      %p59 = por %p57, %p58
      %p61 = scmp.ne.s32.totalorder %s44, %s60
      %p62 = scmp.eq.s32.totalorder %s36, 0
      %p63 = por %p61, %p62
      %s64 = ssub.s32 %s30, %s37
      %p65 = scmp.eq.s32.totalorder %s64, 0
      %s67 = sadd.s32 %s66, 1
      %s68 = scalar_select %p65, %s66, %s67
      %p71 = pneg %p65
      %p72 = scmp.eq.s32.totalorder %s30, 1
      %p73 = por %p71, %p72
      %p74 = scmp.ne.s32.totalorder %s66, %s69
      %p75 = scmp.eq.s32.totalorder %s30, 0
      %p76 = por %p74, %p75
      %p77 = scmp.ne.s32.totalorder %s66, %s69
      %p78 = scmp.eq.s32.totalorder %s35, 1
      %p79 = por %p77, %p78
      %p80 = scmp.ne.s32.totalorder %s69, %s70
      %p81 = scmp.eq.s32.totalorder %s35, 0
      %p82 = por %p80, %p81
      %p83 = scmp.ne.s32.totalorder %s69, %s70
      %p84 = scmp.eq.s32.totalorder %s36, 1
      %p85 = por %p83, %p84
      %p87 = scmp.ne.s32.totalorder %s70, %s86
      %p88 = scmp.eq.s32.totalorder %s36, 0
      %p89 = por %p87, %p88
      %s91 = sadd.s32 %s90, 1
      %p94 = scmp.eq.s32.totalorder %s30, 1
      %p95 = scmp.ne.s32.totalorder %s90, %s92
      %p96 = scmp.eq.s32.totalorder %s30, 0
      %p97 = por %p95, %p96
      %p98 = scmp.ne.s32.totalorder %s90, %s92
      %p99 = scmp.eq.s32.totalorder %s35, 1
      %p100 = por %p98, %p99
      %p101 = scmp.ne.s32.totalorder %s92, %s93
      %p102 = scmp.eq.s32.totalorder %s35, 0
      %p103 = por %p101, %p102
      %p104 = scmp.ne.s32.totalorder %s92, %s93
      %p105 = scmp.eq.s32.totalorder %s36, 1
      %p106 = por %p104, %p105
      %p108 = scmp.ne.s32.totalorder %s93, %s107
      %p109 = scmp.eq.s32.totalorder %s36, 0
      %p110 = por %p108, %p109
      %s112 = sadd.s32 %s111, 1
      %p115 = scmp.eq.s32.totalorder %s30, 1
      %p116 = scmp.ne.s32.totalorder %s111, %s113
      %p117 = scmp.eq.s32.totalorder %s30, 0
      %p118 = por %p116, %p117
      %p119 = scmp.ne.s32.totalorder %s111, %s113
      %p120 = scmp.eq.s32.totalorder %s35, 1
      %p121 = por %p119, %p120
      %p122 = scmp.ne.s32.totalorder %s113, %s114
      %p123 = scmp.eq.s32.totalorder %s35, 0
      %p124 = por %p122, %p123
      %p125 = scmp.ne.s32.totalorder %s113, %s114
      %p126 = scmp.eq.s32.totalorder %s36, 1
      %p127 = por %p125, %p126
      %p129 = scmp.ne.s32.totalorder %s114, %s128
      %p130 = scmp.eq.s32.totalorder %s36, 0
      %p131 = por %p129, %p130
      %s133 = sadd.s32 %s132, 1
      %p136 = scmp.eq.s32.totalorder %s30, 1
      %p137 = scmp.ne.s32.totalorder %s132, %s134
      %p138 = scmp.eq.s32.totalorder %s30, 0
      %p139 = por %p137, %p138
      %p140 = scmp.ne.s32.totalorder %s132, %s134
      %p141 = scmp.eq.s32.totalorder %s35, 1
      %p142 = por %p140, %p141
      %p143 = scmp.ne.s32.totalorder %s134, %s135
      %p144 = scmp.eq.s32.totalorder %s35, 0
      %p145 = por %p143, %p144
      %p146 = scmp.ne.s32.totalorder %s134, %s135
      %p147 = scmp.eq.s32.totalorder %s36, 1
      %p148 = por %p146, %p147
      %p150 = scmp.ne.s32.totalorder %s135, %s149
      %p151 = scmp.eq.s32.totalorder %s36, 0
      %p152 = por %p150, %p151
      %s154 = sadd.s32 %s153, 1
      %p157 = scmp.eq.s32.totalorder %s30, 1
      %p158 = scmp.ne.s32.totalorder %s153, %s155
      %p159 = scmp.eq.s32.totalorder %s30, 0
      %p160 = por %p158, %p159
      %p161 = scmp.ne.s32.totalorder %s153, %s155
      %p162 = scmp.eq.s32.totalorder %s35, 1
      %p163 = por %p161, %p162
      %p164 = scmp.ne.s32.totalorder %s155, %s156
      %p165 = scmp.eq.s32.totalorder %s35, 0
      %p166 = por %p164, %p165
      %p167 = scmp.ne.s32.totalorder %s155, %s156
      %p168 = scmp.eq.s32.totalorder %s36, 1
      %p169 = por %p167, %p168
      %p171 = scmp.ne.s32.totalorder %s156, %s170
      %p172 = scmp.eq.s32.totalorder %s36, 0
      %p173 = por %p171, %p172
      %s175 = sadd.s32 %s174, 1
      %p178 = scmp.eq.s32.totalorder %s30, 1
      %p179 = scmp.ne.s32.totalorder %s174, %s176
      %p180 = scmp.eq.s32.totalorder %s30, 0
      %p181 = por %p179, %p180
      %p182 = scmp.ne.s32.totalorder %s174, %s176
      %p183 = scmp.eq.s32.totalorder %s35, 1
      %p184 = por %p182, %p183
      %p185 = scmp.ne.s32.totalorder %s176, %s177
      %p186 = scmp.eq.s32.totalorder %s35, 0
      %p187 = por %p185, %p186
      %p188 = scmp.ne.s32.totalorder %s176, %s177
      %p189 = scmp.eq.s32.totalorder %s36, 1
      %p190 = por %p188, %p189
      %p192 = scmp.ne.s32.totalorder %s177, %s191
      %p193 = scmp.eq.s32.totalorder %s36, 0
      %p194 = por %p192, %p193
      %s196 = sadd.s32 %s195, 1
      %p199 = scmp.eq.s32.totalorder %s30, 1
      %p200 = scmp.ne.s32.totalorder %s195, %s197
      %p201 = scmp.eq.s32.totalorder %s30, 0
      %p202 = por %p200, %p201
      %p203 = scmp.ne.s32.totalorder %s195, %s197
      %p204 = scmp.eq.s32.totalorder %s35, 1
      %p205 = por %p203, %p204
      %p206 = scmp.ne.s32.totalorder %s197, %s198
      %p207 = scmp.eq.s32.totalorder %s35, 0
      %p208 = por %p206, %p207
      %p209 = scmp.ne.s32.totalorder %s197, %s198
      %p210 = scmp.eq.s32.totalorder %s36, 1
      %p211 = por %p209, %p210
      %p213 = scmp.ne.s32.totalorder %s198, %s212
      %p214 = scmp.eq.s32.totalorder %s36, 0
      %p215 = por %p213, %p214
      %s217 = sadd.s32 %s216, 1
      %p220 = scmp.eq.s32.totalorder %s30, 1
      %p221 = scmp.ne.s32.totalorder %s216, %s218
      %p222 = scmp.eq.s32.totalorder %s30, 0
      %p223 = por %p221, %p222
      %p224 = scmp.ne.s32.totalorder %s216, %s218
      %p225 = scmp.eq.s32.totalorder %s35, 1
      %p226 = por %p224, %p225
      %p227 = scmp.ne.s32.totalorder %s218, %s219
      %p228 = scmp.eq.s32.totalorder %s35, 0
      %p229 = por %p227, %p228
      %p230 = scmp.ne.s32.totalorder %s218, %s219
      %p231 = scmp.eq.s32.totalorder %s36, 1
      %p232 = por %p230, %p231
      %p234 = scmp.ne.s32.totalorder %s219, %s233
      %p235 = scmp.eq.s32.totalorder %s36, 0
      %p236 = por %p234, %p235
      %s238 = sadd.s32 %s237, 1
      %p241 = scmp.eq.s32.totalorder %s30, 1
      %p242 = scmp.ne.s32.totalorder %s237, %s239
      %p243 = scmp.eq.s32.totalorder %s30, 0
      %p244 = por %p242, %p243
      %p245 = scmp.ne.s32.totalorder %s237, %s239
      %p246 = scmp.eq.s32.totalorder %s35, 1
      %p247 = por %p245, %p246
      %p248 = scmp.ne.s32.totalorder %s239, %s240
      %p249 = scmp.eq.s32.totalorder %s35, 0
      %p250 = por %p248, %p249
      %p251 = scmp.ne.s32.totalorder %s239, %s240
      %p252 = scmp.eq.s32.totalorder %s36, 1
      %p253 = por %p251, %p252
      %p255 = scmp.ne.s32.totalorder %s240, %s254
      %p256 = scmp.eq.s32.totalorder %s36, 0
      %p257 = por %p255, %p256
      %s259 = sadd.s32 %s258, 1
      %p262 = scmp.eq.s32.totalorder %s30, 1
      %p263 = scmp.ne.s32.totalorder %s258, %s260
      %p264 = scmp.eq.s32.totalorder %s30, 0
      %p265 = por %p263, %p264
      %p266 = scmp.ne.s32.totalorder %s258, %s260
      %p267 = scmp.eq.s32.totalorder %s35, 1
      %p268 = por %p266, %p267
      %p269 = scmp.ne.s32.totalorder %s260, %s261
      %p270 = scmp.eq.s32.totalorder %s35, 0
      %p271 = por %p269, %p270
      %p272 = scmp.ne.s32.totalorder %s260, %s261
      %p273 = scmp.eq.s32.totalorder %s36, 1
      %p274 = por %p272, %p273
      %p276 = scmp.ne.s32.totalorder %s261, %s275
      %p277 = scmp.eq.s32.totalorder %s36, 0
      %p278 = por %p276, %p277
      %s280 = sadd.s32 %s279, 1
      %p283 = scmp.eq.s32.totalorder %s30, 1
      %p284 = scmp.ne.s32.totalorder %s279, %s281
      %p285 = scmp.eq.s32.totalorder %s30, 0
      %p286 = por %p284, %p285
      %p287 = scmp.ne.s32.totalorder %s279, %s281
      %p288 = scmp.eq.s32.totalorder %s35, 1
      %p289 = por %p287, %p288
      %p290 = scmp.ne.s32.totalorder %s281, %s282
      %p291 = scmp.eq.s32.totalorder %s35, 0
      %p292 = por %p290, %p291
      %p293 = scmp.ne.s32.totalorder %s281, %s282
      %p294 = scmp.eq.s32.totalorder %s36, 1
      %p295 = por %p293, %p294
      %p297 = scmp.ne.s32.totalorder %s282, %s296
      %p298 = scmp.eq.s32.totalorder %s36, 0
      %p299 = por %p297, %p298
      %s301 = sadd.s32 %s300, 1
      %p304 = scmp.eq.s32.totalorder %s30, 1
      %p305 = scmp.ne.s32.totalorder %s300, %s302
      %p306 = scmp.eq.s32.totalorder %s30, 0
      %p307 = por %p305, %p306
      %p308 = scmp.ne.s32.totalorder %s300, %s302
      %p309 = scmp.eq.s32.totalorder %s35, 1
      %p310 = por %p308, %p309
      %p311 = scmp.ne.s32.totalorder %s302, %s303
      %p312 = scmp.eq.s32.totalorder %s35, 0
      %p313 = por %p311, %p312
      %p314 = scmp.ne.s32.totalorder %s302, %s303
      %p315 = scmp.eq.s32.totalorder %s36, 1
      %p316 = por %p314, %p315
      %p318 = scmp.ne.s32.totalorder %s303, %s317
      %p319 = scmp.eq.s32.totalorder %s36, 0
      %p320 = por %p318, %p319
      %s322 = sadd.s32 %s321, 1
      %p325 = scmp.eq.s32.totalorder %s30, 1
      %p326 = scmp.ne.s32.totalorder %s321, %s323
      %p327 = scmp.eq.s32.totalorder %s30, 0
      %p328 = por %p326, %p327
      %p329 = scmp.ne.s32.totalorder %s321, %s323
      %p330 = scmp.eq.s32.totalorder %s35, 1
      %p331 = por %p329, %p330
      %p332 = scmp.ne.s32.totalorder %s323, %s324
      %p333 = scmp.eq.s32.totalorder %s35, 0
      %p334 = por %p332, %p333
      %p335 = scmp.ne.s32.totalorder %s323, %s324
      %p336 = scmp.eq.s32.totalorder %s36, 1
      %p337 = por %p335, %p336
      %p339 = scmp.ne.s32.totalorder %s324, %s338
      %p340 = scmp.eq.s32.totalorder %s36, 0
      %p341 = por %p339, %p340
      %s343 = sadd.s32 %s342, 1
      %p346 = scmp.eq.s32.totalorder %s30, 1
      %p347 = scmp.ne.s32.totalorder %s342, %s344
      %p348 = scmp.eq.s32.totalorder %s30, 0
      %p349 = por %p347, %p348
      %p350 = scmp.ne.s32.totalorder %s342, %s344
      %p351 = scmp.eq.s32.totalorder %s35, 1
      %p352 = por %p350, %p351
      %p353 = scmp.ne.s32.totalorder %s344, %s345
      %p354 = scmp.eq.s32.totalorder %s35, 0
      %p355 = por %p353, %p354
      %p356 = scmp.ne.s32.totalorder %s344, %s345
      %p357 = scmp.eq.s32.totalorder %s36, 1
      %p358 = por %p356, %p357
      %p360 = scmp.ne.s32.totalorder %s345, %s359
      %p361 = scmp.eq.s32.totalorder %s36, 0
      %p362 = por %p360, %p361
      %s364 = sadd.s32 %s363, 1
      %p367 = scmp.eq.s32.totalorder %s30, 1
      %p368 = scmp.ne.s32.totalorder %s363, %s365
      %p369 = scmp.eq.s32.totalorder %s30, 0
      %p370 = por %p368, %p369
      %p371 = scmp.ne.s32.totalorder %s363, %s365
      %p372 = scmp.eq.s32.totalorder %s35, 1
      %p373 = por %p371, %p372
      %p374 = scmp.ne.s32.totalorder %s365, %s366
      %p375 = scmp.eq.s32.totalorder %s35, 0
      %p376 = por %p374, %p375
      %p377 = scmp.ne.s32.totalorder %s365, %s366
      %p378 = scmp.eq.s32.totalorder %s36, 1
      %p379 = por %p377, %p378
      %p381 = scmp.ne.s32.totalorder %s366, %s380
      %p382 = scmp.eq.s32.totalorder %s36, 0
      %p383 = por %p381, %p382
      %s384 = ssub.s32 %s30, %s37
      %p385 = scmp.eq.s32.totalorder %s384, 0
      %s387 = sadd.s32 %s386, 1
      %s388 = scalar_select %p385, %s386, %s387
      %p391 = pneg %p385
      %p392 = scmp.eq.s32.totalorder %s30, 1
      %p393 = por %p391, %p392
      %p394 = scmp.ne.s32.totalorder %s386, %s389
      %p395 = scmp.eq.s32.totalorder %s30, 0
      %p396 = por %p394, %p395
      %p397 = scmp.ne.s32.totalorder %s386, %s389
      %p398 = scmp.eq.s32.totalorder %s35, 1
      %p399 = por %p397, %p398
      %p400 = scmp.ne.s32.totalorder %s389, %s390
      %p401 = scmp.eq.s32.totalorder %s35, 0
      %p402 = por %p400, %p401
      %p403 = scmp.ne.s32.totalorder %s389, %s390
      %p404 = scmp.eq.s32.totalorder %s36, 1
      %p405 = por %p403, %p404
      %p407 = scmp.ne.s32.totalorder %s390, %s406
      %p408 = scmp.eq.s32.totalorder %s36, 0
      %p409 = por %p407, %p408
      %s410 = ssub.s32 %s30, %s37
      %p411 = scmp.eq.s32.totalorder %s410, 0
      %s413 = sadd.s32 %s412, 1
      %s414 = scalar_select %p411, %s412, %s413
      %p417 = pneg %p411
      %p418 = scmp.eq.s32.totalorder %s30, 1
      %p419 = por %p417, %p418
      %p420 = scmp.ne.s32.totalorder %s412, %s415
      %p421 = scmp.eq.s32.totalorder %s30, 0
      %p422 = por %p420, %p421
      %p423 = scmp.ne.s32.totalorder %s412, %s415
      %p424 = scmp.eq.s32.totalorder %s35, 1
      %p425 = por %p423, %p424
      %p426 = scmp.ne.s32.totalorder %s415, %s416
      %p427 = scmp.eq.s32.totalorder %s35, 0
      %p428 = por %p426, %p427
      %p429 = scmp.ne.s32.totalorder %s415, %s416
      %p430 = scmp.eq.s32.totalorder %s36, 1
      %p431 = por %p429, %p430
      %p433 = scmp.ne.s32.totalorder %s416, %s432
      %p434 = scmp.eq.s32.totalorder %s36, 0
      %p435 = por %p433, %p434
      %p436 = scmp.le.s32.totalorder 1, %s30
      %p437 = scmp.lt.s32.totalorder %s30, 3
      %p438 = pnand %p436, %p437
      %p439 = pneg %p438
      // Predicated region
      $region9: #{star_transformer_layer.1} parent=5 // pred_check
        _
      $region10: #{star_transformer_layer.1} parent=5 // pred_check_branch
        %441 = sbr.rel (%p438) target = $region12
      $region11: #{star_transformer_layer.1} parent=5 // pred_region
        %s442 = ssub.s32 %s30, 1
        // Predicated region
        $region13: #{star_transformer_layer.1} parent=11 // pred_check
          %p443 = pneg %p103
        $region14: #{star_transformer_layer.1} parent=11 // pred_check_branch
          %445 = sbr.rel (%p443) target = $region16
        $region15: #{star_transformer_layer.1} parent=11 // pred_region
          _
        $region16: #{star_transformer_layer.1} parent=11 // pred_fallthru
          _
        // Predicated region
        $region17: #{star_transformer_layer.1} parent=11 // pred_check
          %p446 = pneg %p124
        $region18: #{star_transformer_layer.1} parent=11 // pred_check_branch
          %448 = sbr.rel (%p446) target = $region20
        $region19: #{star_transformer_layer.1} parent=11 // pred_region
          _
        $region20: #{star_transformer_layer.1} parent=11 // pred_fallthru
          _
        // Predicated region
        $region21: #{star_transformer_layer.1} parent=11 // pred_check
          %p449 = pneg %p145
        $region22: #{star_transformer_layer.1} parent=11 // pred_check_branch
          %451 = sbr.rel (%p449) target = $region24
        $region23: #{star_transformer_layer.1} parent=11 // pred_region
          _
        $region24: #{star_transformer_layer.1} parent=11 // pred_fallthru
          _
        // Predicated region
        $region25: #{star_transformer_layer.1} parent=11 // pred_check
          %p452 = pneg %p166
        $region26: #{star_transformer_layer.1} parent=11 // pred_check_branch
          %454 = sbr.rel (%p452) target = $region28
        $region27: #{star_transformer_layer.1} parent=11 // pred_region
          _
        $region28: #{star_transformer_layer.1} parent=11 // pred_fallthru
          _
        // Predicated region
        $region29: #{star_transformer_layer.1} parent=11 // pred_check
          %p455 = pneg %p187
        $region30: #{star_transformer_layer.1} parent=11 // pred_check_branch
          %457 = sbr.rel (%p455) target = $region32
        $region31: #{star_transformer_layer.1} parent=11 // pred_region
          _
        $region32: #{star_transformer_layer.1} parent=11 // pred_fallthru
          _
        // Predicated region
        $region33: #{star_transformer_layer.1} parent=11 // pred_check
          %p458 = pneg %p208
        $region34: #{star_transformer_layer.1} parent=11 // pred_check_branch
          %460 = sbr.rel (%p458) target = $region36
        $region35: #{star_transformer_layer.1} parent=11 // pred_region
          _
        $region36: #{star_transformer_layer.1} parent=11 // pred_fallthru
          _
        // Predicated region
        $region37: #{star_transformer_layer.1} parent=11 // pred_check
          %p461 = pneg %p229
        $region38: #{star_transformer_layer.1} parent=11 // pred_check_branch
          %463 = sbr.rel (%p461) target = $region40
        $region39: #{star_transformer_layer.1} parent=11 // pred_region
          _
        $region40: #{star_transformer_layer.1} parent=11 // pred_fallthru
          _
        // Predicated region
        $region41: #{star_transformer_layer.1} parent=11 // pred_check
          %p464 = pneg %p250
        $region42: #{star_transformer_layer.1} parent=11 // pred_check_branch
          %466 = sbr.rel (%p464) target = $region44
        $region43: #{star_transformer_layer.1} parent=11 // pred_region
          _
        $region44: #{star_transformer_layer.1} parent=11 // pred_fallthru
          _
        // Predicated region
        $region45: #{star_transformer_layer.1} parent=11 // pred_check
          %p467 = pneg %p271
        $region46: #{star_transformer_layer.1} parent=11 // pred_check_branch
          %469 = sbr.rel (%p467) target = $region48
        $region47: #{star_transformer_layer.1} parent=11 // pred_region
          _
        $region48: #{star_transformer_layer.1} parent=11 // pred_fallthru
          _
        // Predicated region
        $region49: #{star_transformer_layer.1} parent=11 // pred_check
          %p470 = pneg %p292
        $region50: #{star_transformer_layer.1} parent=11 // pred_check_branch
          %472 = sbr.rel (%p470) target = $region52
        $region51: #{star_transformer_layer.1} parent=11 // pred_region
          _
        $region52: #{star_transformer_layer.1} parent=11 // pred_fallthru
          _
        // Predicated region
        $region53: #{star_transformer_layer.1} parent=11 // pred_check
          %p473 = pneg %p313
        $region54: #{star_transformer_layer.1} parent=11 // pred_check_branch
          %475 = sbr.rel (%p473) target = $region56
        $region55: #{star_transformer_layer.1} parent=11 // pred_region
          _
        $region56: #{star_transformer_layer.1} parent=11 // pred_fallthru
          _
        // Predicated region
        $region57: #{star_transformer_layer.1} parent=11 // pred_check
          %p476 = pneg %p334
        $region58: #{star_transformer_layer.1} parent=11 // pred_check_branch
          %478 = sbr.rel (%p476) target = $region60
        $region59: #{star_transformer_layer.1} parent=11 // pred_region
          _
        $region60: #{star_transformer_layer.1} parent=11 // pred_fallthru
          _
        // Predicated region
        $region61: #{star_transformer_layer.1} parent=11 // pred_check
          %p479 = pneg %p355
        $region62: #{star_transformer_layer.1} parent=11 // pred_check_branch
          %481 = sbr.rel (%p479) target = $region64
        $region63: #{star_transformer_layer.1} parent=11 // pred_region
          _
        $region64: #{star_transformer_layer.1} parent=11 // pred_fallthru
          _
        // Predicated region
        $region65: #{star_transformer_layer.1} parent=11 // pred_check
          %p482 = pneg %p376
        $region66: #{star_transformer_layer.1} parent=11 // pred_check_branch
          %484 = sbr.rel (%p482) target = $region68
        $region67: #{star_transformer_layer.1} parent=11 // pred_region
          _
        $region68: #{star_transformer_layer.1} parent=11 // pred_fallthru
          _
      $region12: #{star_transformer_layer.1} parent=5 // pred_fallthru
        _
      %p485 = scmp.lt.s32.totalorder %s30, 2
      // Predicated region
      $region69: #{star_transformer_layer.1} parent=5 // pred_check
        %p486 = pneg %p485
      $region70: #{star_transformer_layer.1} parent=5 // pred_check_branch
        %488 = sbr.rel (%p486) target = $region72
      $region71: #{star_transformer_layer.1} parent=5 // pred_region
        // Predicated region
        $region73: #{star_transformer_layer.1} parent=71 // pred_check
          %p489 = pneg %p50
        $region74: #{star_transformer_layer.1} parent=71 // pred_check_branch
          %491 = sbr.rel (%p489) target = $region76
        $region75: #{star_transformer_layer.1} parent=71 // pred_region
          %p492 = scmp.lt.s32.totalorder %s30, 1
          %s493 = scalar_select %p492, %s30, 1
          %s494 = smul.addr %s493, 8
          %s495 = scalar_lea.vmem %s0, %s494
        $region76: #{star_transformer_layer.1} parent=71 // pred_fallthru
          _
        // Predicated region
        $region77: #{star_transformer_layer.1} parent=71 // pred_check
          %p496 = pneg %p76
        $region78: #{star_transformer_layer.1} parent=71 // pred_check_branch
          %498 = sbr.rel (%p496) target = $region80
        $region79: #{star_transformer_layer.1} parent=71 // pred_region
          %p499 = scmp.lt.s32.totalorder %s30, 1
          %s500 = scalar_select %p499, %s30, 1
          %s501 = scalar_lea.vmem %s1, %s500
        $region80: #{star_transformer_layer.1} parent=71 // pred_fallthru
          _
      $region72: #{star_transformer_layer.1} parent=5 // pred_fallthru
        _
      %p502 = scmp.le.s32.totalorder 1, %s30
      %p503 = scmp.lt.s32.totalorder %s30, 3
      %p504 = pnand %p502, %p503
      %p505 = pneg %p504
      // Predicated region
      $region81: #{star_transformer_layer.1} parent=5 // pred_check
        _
      $region82: #{star_transformer_layer.1} parent=5 // pred_check_branch
        %507 = sbr.rel (%p504) target = $region84
      $region83: #{star_transformer_layer.1} parent=5 // pred_region
        %s508 = ssub.s32 %s30, 1
        %p509 = scmp.lt.s32.totalorder %s35, 1
        %s510 = scalar_select %p509, %s35, 1
        %s511 = smul.addr %s510, 8
        %s512 = scalar_lea.vmem %s0, %s511
        %p513 = pneg %p56
        %p514 = pneg %p53
        %p515 = scmp.lt.s32.totalorder %s35, 1
        %s516 = scalar_select %p515, %s35, 1
        %s517 = scalar_lea.vmem %s1, %s516
        %p518 = pneg %p82
        %p519 = pneg %p79
        %p520 = pneg %p103
        %p521 = pneg %p100
        %p522 = pneg %p124
        %p523 = pneg %p121
        %p524 = pneg %p145
        %p525 = pneg %p142
        %p526 = pneg %p166
        %p527 = pneg %p163
        %p528 = pneg %p187
        %p529 = pneg %p184
        %p530 = pneg %p208
        %p531 = pneg %p205
        %p532 = pneg %p229
        %p533 = pneg %p226
        %p534 = pneg %p250
        %p535 = pneg %p247
        %p536 = pneg %p271
        %p537 = pneg %p268
        %p538 = pneg %p292
        %p539 = pneg %p289
        %p540 = pneg %p313
        %p541 = pneg %p310
        %p542 = pneg %p334
        %p543 = pneg %p331
        %p544 = pneg %p355
        %p545 = pneg %p352
        %p546 = pneg %p376
        %p547 = pneg %p373
        %p548 = pneg %p402
        %p549 = pneg %p399
        %s550 = sand.u32 %s389, 1
        %s551 = scalar_lea.sflag [#allocation3], %s550
        %s552 = sand.u32 %s389, 1
        %s553 = smul.addr %s552, 8
        %s554 = scalar_lea.vmem [#allocation2], %s553
        %p555 = pneg %p428
        %p556 = pneg %p425
        %s557 = sand.u32 %s415, 1
        %s558 = scalar_lea.sflag [#allocation5], %s557
        %s559 = sand.u32 %s415, 1
        %s560 = scalar_lea.vmem [#allocation4], %s559
        %p561 = scmp.lt.s32.totalorder %s35, 1
        %s562 = scalar_select %p561, %s35, 1
        %s563 = smul.addr %s562, 8
        %s564 = scalar_lea.vmem %s0, %s563
        %p565 = scmp.lt.s32.totalorder %s35, 1
        %s566 = scalar_select %p565, %s35, 1
        %s567 = scalar_lea.vmem %s1, %s566
        %v568 = vld [vmem:[%s564] sm:$0xff]
        %v569 = vld [vmem:[%s567] sm:$0x1]
        %v570 = vld [vmem:[%s2] sm:$0xff]
        %v571 = vld [vmem:[%s2 + $0x8] sm:$0xff]
        %v572 = vld [vmem:[%s2 + $0x10] sm:$0xff]
        %v573 = vld [vmem:[%s2 + $0x18] sm:$0xff]
        %v574 = vld [vmem:[%s4] sm:$0xff]
        %v575 = vld [vmem:[%s4 + $0x8] sm:$0xff]
        %v576 = vld [vmem:[%s4 + $0x10] sm:$0xff]
        %v577 = vld [vmem:[%s4 + $0x18] sm:$0xff]
        %v578 = vld [vmem:[%s6] sm:$0xff]
        %v579 = vld [vmem:[%s6 + $0x8] sm:$0xff]
        %v580 = vld [vmem:[%s6 + $0x10] sm:$0xff]
        %v581 = vld [vmem:[%s6 + $0x18] sm:$0xff]
        %v582 = vld [vmem:[%s8] sm:$0xff]
        %v583 = vld [vmem:[%s8 + $0x8] sm:$0xff]
        %v584 = vld [vmem:[%s8 + $0x10] sm:$0xff]
        %v585 = vld [vmem:[%s8 + $0x18] sm:$0xff]
        %v586 = vld [vmem:[%s3] sm:$0x1]
        %v587 = vld [vmem:[%s5] sm:$0x1]
        %v588 = vld [vmem:[%s7] sm:$0x1]
        %v589 = vld [vmem:[%s9] sm:$0x1]
        %v590 = vld [vmem:[%s10] sm:$0x1]
        %v591 = vld [vmem:[%s11] sm:$0x1]
        %v592 = vld [vmem:[%s12] sm:$0x1]
        %v593 = vld [vmem:[%s13] sm:$0x1]
        %v594 = vld [vmem:[%s14] sm:$0xff]
        %v595 = vld [vmem:[%s14 + $0x8] sm:$0xff]
        %v596 = vld [vmem:[%s14 + $0x10] sm:$0xff]
        %v597 = vld [vmem:[%s14 + $0x18] sm:$0xff]
        %v598 = vld [vmem:[%s15] sm:$0xf]
        %v600 = vlaneseq
        %v601 = vshrl.u32 %v600, 7
        %v602 = vsub.s32 0, %v601
        %v603 = vrot.slane %v586, %v602
        %vm605 = vcmask 261120
        %v607 = vsel %vm605, %v568, 0
        %v610 = vsel %vm605, %v569, 0
        %612 = vmatprep.subr.mxu0 0.0
        %613 = vmatpush1.msra.mxu0 0.0
        %614 = vmatprep.subr.mxu0 0.0
        %615 = vmatpush1.msra.mxu0 0.0
        %616 = vmatprep.subr.mxu0 0.0
        %617 = vmatpush1.msra.mxu0 0.0
        %618 = vmatprep.subr.mxu0 0.0
        %619 = vmatpush1.msra.mxu0 0.0
        %620 = vmatprep.subr.mxu0 0.0
        %621 = vmatpush1.msra.mxu0 0.0
        %622 = vmatprep.subr.mxu0 0.0
        %623 = vmatpush1.msra.mxu0 0.0
        %624 = vmatprep.subr.mxu0 0.0
        %625 = vmatpush1.msra.mxu0 0.0
        %626 = vmatprep.subr.mxu0 0.0
        %627 = vmatpush1.msra.mxu0 0.0
        %628 = vmatprep.subr.mxu0 0.0
        %629 = vmatpush1.msra.mxu0 0.0
        %630 = vmatprep.subr.mxu0 0.0
        %631 = vmatpush1.msra.mxu0 0.0
        %632 = vmatprep.subr.mxu0 0.0
        %633 = vmatpush1.msra.mxu0 0.0
        %634 = vmatprep.subr.mxu0 0.0
        %635 = vmatpush1.msra.mxu0 0.0
        %636 = vmatprep.subr.mxu0 0.0
        %637 = vmatpush1.msra.mxu0 %v573
        %638 = vmatprep.subr.mxu0 0.0
        %639 = vmatpush1.msra.mxu0 %v572
        %640 = vmatprep.subr.mxu0 0.0
        %641 = vmatpush1.msra.mxu0 %v571
        %642 = vmatprep.subr.mxu0 0.0
        %643 = vmatpush1.msra.mxu0 %v570
        %644 = vmatprep.subr.mxu0 0.0
        %645 = vmatpush2.msra.mxu0 0.0
        %646 = vmatprep.subr.mxu0 0.0
        %647 = vmatpush2.msra.mxu0 0.0
        %648 = vmatprep.subr.mxu0 0.0
        %649 = vmatpush2.msra.mxu0 0.0
        %650 = vmatprep.subr.mxu0 0.0
        %651 = vmatpush2.msra.mxu0 0.0
        %652 = vmatprep.subr.mxu0 0.0
        %653 = vmatpush2.msra.mxu0 0.0
        %654 = vmatprep.subr.mxu0 0.0
        %655 = vmatpush2.msra.mxu0 0.0
        %656 = vmatprep.subr.mxu0 0.0
        %657 = vmatpush2.msra.mxu0 0.0
        %658 = vmatprep.subr.mxu0 0.0
        %659 = vmatpush2.msra.mxu0 0.0
        %660 = vmatprep.subr.mxu0 0.0
        %661 = vmatpush2.msra.mxu0 0.0
        %662 = vmatprep.subr.mxu0 0.0
        %663 = vmatpush2.msra.mxu0 0.0
        %664 = vmatprep.subr.mxu0 0.0
        %665 = vmatpush2.msra.mxu0 0.0
        %666 = vmatprep.subr.mxu0 0.0
        %667 = vmatpush2.msra.mxu0 0.0
        %668 = vmatprep.subr.mxu0 0.0
        %669 = vmatpush2.msra.mxu0 0.0
        %670 = vmatprep.subr.mxu0 0.0
        %671 = vmatpush2.msra.mxu0 0.0
        %672 = vmatprep.subr.mxu0 0.0
        %673 = vmatpush2.msra.mxu0 0.0
        %674 = vmatprep.subr.mxu0 0.0
        %675 = vmatpush2.msra.mxu0 0.0
        %676 = vmatprep.mubr.f32.mxu0 0.0
        %677 = vmatmul.mubr.f32.gmra.mxu0 %v607
        %v678 = vpop.f32.mrf.mxu0
        %v679 = vadd.f32 %v603, %v678
        %v680 = vpop.f32.mrf.mxu0
        %681 = vmatprep.mubr.f32.mxu0 0.0
        %682 = vmatmul.mubr.f32.gmra.mxu0 %v610
        %v683 = vpop.f32.mrf.mxu0
        %v684 = vadd.f32 %v603, %v683
        %v685 = vpop.f32.mrf.mxu0
        %686 = vdwg.mxu0
        %v688 = vrot.slane %v679, 1
        %v690 = vrot.slane %v679, 2
        %vm692 = vcmask 1046528
        %v693 = vsel %vm692, %v688, %v690
        %695 = vrot.lane.b32.xlu0 %v693, 96
        %v696 = vpop.permute.xlu0 %695
        %v698 = vmul.f32 %v679, %v696
        %v700 = vsel %vm605, %v698, 0
        %702 = vmatprep.subr.mxu0 0.0
        %703 = vmatpush1.msra.mxu0 0.0
        %704 = vmatprep.subr.mxu0 0.0
        %705 = vmatpush1.msra.mxu0 0.0
        %706 = vmatprep.subr.mxu0 0.0
        %707 = vmatpush1.msra.mxu0 0.0
        %708 = vmatprep.subr.mxu0 0.0
        %709 = vmatpush1.msra.mxu0 0.0
        %710 = vmatprep.subr.mxu0 0.0
        %711 = vmatpush1.msra.mxu0 0.0
        %712 = vmatprep.subr.mxu0 0.0
        %713 = vmatpush1.msra.mxu0 0.0
        %714 = vmatprep.subr.mxu0 0.0
        %715 = vmatpush1.msra.mxu0 0.0
        %716 = vmatprep.subr.mxu0 0.0
        %717 = vmatpush1.msra.mxu0 0.0
        %718 = vmatprep.subr.mxu0 0.0
        %719 = vmatpush1.msra.mxu0 0.0
        %720 = vmatprep.subr.mxu0 0.0
        %721 = vmatpush1.msra.mxu0 0.0
        %722 = vmatprep.subr.mxu0 0.0
        %723 = vmatpush1.msra.mxu0 0.0
        %724 = vmatprep.subr.mxu0 0.0
        %725 = vmatpush1.msra.mxu0 0.0
        %726 = vmatprep.subr.mxu0 0.0
        %727 = vmatpush1.msra.mxu0 %v597
        %728 = vmatprep.subr.mxu0 0.0
        %729 = vmatpush1.msra.mxu0 %v596
        %730 = vmatprep.subr.mxu0 0.0
        %731 = vmatpush1.msra.mxu0 %v595
        %732 = vmatprep.subr.mxu0 0.0
        %733 = vmatpush1.msra.mxu0 %v594
        %734 = vmatprep.subr.mxu0 0.0
        %735 = vmatpush2.msra.mxu0 0.0
        %736 = vmatprep.subr.mxu0 0.0
        %737 = vmatpush2.msra.mxu0 0.0
        %738 = vmatprep.subr.mxu0 0.0
        %739 = vmatpush2.msra.mxu0 0.0
        %740 = vmatprep.subr.mxu0 0.0
        %741 = vmatpush2.msra.mxu0 0.0
        %742 = vmatprep.subr.mxu0 0.0
        %743 = vmatpush2.msra.mxu0 0.0
        %744 = vmatprep.subr.mxu0 0.0
        %745 = vmatpush2.msra.mxu0 0.0
        %746 = vmatprep.subr.mxu0 0.0
        %747 = vmatpush2.msra.mxu0 0.0
        %748 = vmatprep.subr.mxu0 0.0
        %749 = vmatpush2.msra.mxu0 0.0
        %750 = vmatprep.subr.mxu0 0.0
        %751 = vmatpush2.msra.mxu0 0.0
        %752 = vmatprep.subr.mxu0 0.0
        %753 = vmatpush2.msra.mxu0 0.0
        %754 = vmatprep.subr.mxu0 0.0
        %755 = vmatpush2.msra.mxu0 0.0
        %756 = vmatprep.subr.mxu0 0.0
        %757 = vmatpush2.msra.mxu0 0.0
        %758 = vmatprep.subr.mxu0 0.0
        %759 = vmatpush2.msra.mxu0 0.0
        %760 = vmatprep.subr.mxu0 0.0
        %761 = vmatpush2.msra.mxu0 0.0
        %762 = vmatprep.subr.mxu0 0.0
        %763 = vmatpush2.msra.mxu0 0.0
        %764 = vmatprep.subr.mxu0 0.0
        %765 = vmatpush2.msra.mxu0 0.0
        %766 = vmatprep.mubr.f32.mxu0 0.0
        %767 = vmatmul.mubr.f32.gmra.mxu0 %v700
        %v768 = vpop.f32.mrf.mxu0
        %v769 = vadd.f32 0.0, %v768
        %v770 = vpop.f32.mrf.mxu0
        %771 = vdwg.mxu0
        %772 = vrot.lane.b32.xlu0 %v679, 96
        %v773 = vpop.permute.xlu0 %772
        %v775 = vmul.f32 %v679, %v773
        %v777 = vsel %vm605, %v775, 0
        %779 = vmatprep.subr.mxu0 0.0
        %780 = vmatpush1.msra.mxu0 0.0
        %781 = vmatprep.subr.mxu0 0.0
        %782 = vmatpush1.msra.mxu0 0.0
        %783 = vmatprep.subr.mxu0 0.0
        %784 = vmatpush1.msra.mxu0 0.0
        %785 = vmatprep.subr.mxu0 0.0
        %786 = vmatpush1.msra.mxu0 0.0
        %787 = vmatprep.subr.mxu0 0.0
        %788 = vmatpush1.msra.mxu0 0.0
        %789 = vmatprep.subr.mxu0 0.0
        %790 = vmatpush1.msra.mxu0 0.0
        %791 = vmatprep.subr.mxu0 0.0
        %792 = vmatpush1.msra.mxu0 0.0
        %793 = vmatprep.subr.mxu0 0.0
        %794 = vmatpush1.msra.mxu0 0.0
        %795 = vmatprep.subr.mxu0 0.0
        %796 = vmatpush1.msra.mxu0 0.0
        %797 = vmatprep.subr.mxu0 0.0
        %798 = vmatpush1.msra.mxu0 0.0
        %799 = vmatprep.subr.mxu0 0.0
        %800 = vmatpush1.msra.mxu0 0.0
        %801 = vmatprep.subr.mxu0 0.0
        %802 = vmatpush1.msra.mxu0 0.0
        %803 = vmatprep.subr.mxu0 0.0
        %804 = vmatpush1.msra.mxu0 %v597
        %805 = vmatprep.subr.mxu0 0.0
        %806 = vmatpush1.msra.mxu0 %v596
        %807 = vmatprep.subr.mxu0 0.0
        %808 = vmatpush1.msra.mxu0 %v595
        %809 = vmatprep.subr.mxu0 0.0
        %810 = vmatpush1.msra.mxu0 %v594
        %811 = vmatprep.subr.mxu0 0.0
        %812 = vmatpush2.msra.mxu0 0.0
        %813 = vmatprep.subr.mxu0 0.0
        %814 = vmatpush2.msra.mxu0 0.0
        %815 = vmatprep.subr.mxu0 0.0
        %816 = vmatpush2.msra.mxu0 0.0
        %817 = vmatprep.subr.mxu0 0.0
        %818 = vmatpush2.msra.mxu0 0.0
        %819 = vmatprep.subr.mxu0 0.0
        %820 = vmatpush2.msra.mxu0 0.0
        %821 = vmatprep.subr.mxu0 0.0
        %822 = vmatpush2.msra.mxu0 0.0
        %823 = vmatprep.subr.mxu0 0.0
        %824 = vmatpush2.msra.mxu0 0.0
        %825 = vmatprep.subr.mxu0 0.0
        %826 = vmatpush2.msra.mxu0 0.0
        %827 = vmatprep.subr.mxu0 0.0
        %828 = vmatpush2.msra.mxu0 0.0
        %829 = vmatprep.subr.mxu0 0.0
        %830 = vmatpush2.msra.mxu0 0.0
        %831 = vmatprep.subr.mxu0 0.0
        %832 = vmatpush2.msra.mxu0 0.0
        %833 = vmatprep.subr.mxu0 0.0
        %834 = vmatpush2.msra.mxu0 0.0
        %835 = vmatprep.subr.mxu0 0.0
        %836 = vmatpush2.msra.mxu0 0.0
        %837 = vmatprep.subr.mxu0 0.0
        %838 = vmatpush2.msra.mxu0 0.0
        %839 = vmatprep.subr.mxu0 0.0
        %840 = vmatpush2.msra.mxu0 0.0
        %841 = vmatprep.subr.mxu0 0.0
        %842 = vmatpush2.msra.mxu0 0.0
        %843 = vmatprep.mubr.f32.mxu0 0.0
        %844 = vmatmul.mubr.f32.gmra.mxu0 %v777
        %v845 = vpop.f32.mrf.mxu0
        %v846 = vadd.f32 0.0, %v845
        %v847 = vpop.f32.mrf.mxu0
        %848 = vdwg.mxu0
        %v849 = vlaneseq
        %v850 = vshrl.u32 %v849, 7
        %v851 = vsub.s32 0, %v850
        %v852 = vrot.slane %v679, %v851
        %854 = vrot.lane.b32.xlu0 %v852, 96
        %v855 = vpop.permute.xlu0 %854
        %v857 = vmul.f32 %v679, %v855
        %v859 = vsel %vm605, %v857, 0
        %861 = vmatprep.subr.mxu0 0.0
        %862 = vmatpush1.msra.mxu0 0.0
        %863 = vmatprep.subr.mxu0 0.0
        %864 = vmatpush1.msra.mxu0 0.0
        %865 = vmatprep.subr.mxu0 0.0
        %866 = vmatpush1.msra.mxu0 0.0
        %867 = vmatprep.subr.mxu0 0.0
        %868 = vmatpush1.msra.mxu0 0.0
        %869 = vmatprep.subr.mxu0 0.0
        %870 = vmatpush1.msra.mxu0 0.0
        %871 = vmatprep.subr.mxu0 0.0
        %872 = vmatpush1.msra.mxu0 0.0
        %873 = vmatprep.subr.mxu0 0.0
        %874 = vmatpush1.msra.mxu0 0.0
        %875 = vmatprep.subr.mxu0 0.0
        %876 = vmatpush1.msra.mxu0 0.0
        %877 = vmatprep.subr.mxu0 0.0
        %878 = vmatpush1.msra.mxu0 0.0
        %879 = vmatprep.subr.mxu0 0.0
        %880 = vmatpush1.msra.mxu0 0.0
        %881 = vmatprep.subr.mxu0 0.0
        %882 = vmatpush1.msra.mxu0 0.0
        %883 = vmatprep.subr.mxu0 0.0
        %884 = vmatpush1.msra.mxu0 0.0
        %885 = vmatprep.subr.mxu0 0.0
        %886 = vmatpush1.msra.mxu0 %v597
        %887 = vmatprep.subr.mxu0 0.0
        %888 = vmatpush1.msra.mxu0 %v596
        %889 = vmatprep.subr.mxu0 0.0
        %890 = vmatpush1.msra.mxu0 %v595
        %891 = vmatprep.subr.mxu0 0.0
        %892 = vmatpush1.msra.mxu0 %v594
        %893 = vmatprep.subr.mxu0 0.0
        %894 = vmatpush2.msra.mxu0 0.0
        %895 = vmatprep.subr.mxu0 0.0
        %896 = vmatpush2.msra.mxu0 0.0
        %897 = vmatprep.subr.mxu0 0.0
        %898 = vmatpush2.msra.mxu0 0.0
        %899 = vmatprep.subr.mxu0 0.0
        %900 = vmatpush2.msra.mxu0 0.0
        %901 = vmatprep.subr.mxu0 0.0
        %902 = vmatpush2.msra.mxu0 0.0
        %903 = vmatprep.subr.mxu0 0.0
        %904 = vmatpush2.msra.mxu0 0.0
        %905 = vmatprep.subr.mxu0 0.0
        %906 = vmatpush2.msra.mxu0 0.0
        %907 = vmatprep.subr.mxu0 0.0
        %908 = vmatpush2.msra.mxu0 0.0
        %909 = vmatprep.subr.mxu0 0.0
        %910 = vmatpush2.msra.mxu0 0.0
        %911 = vmatprep.subr.mxu0 0.0
        %912 = vmatpush2.msra.mxu0 0.0
        %913 = vmatprep.subr.mxu0 0.0
        %914 = vmatpush2.msra.mxu0 0.0
        %915 = vmatprep.subr.mxu0 0.0
        %916 = vmatpush2.msra.mxu0 0.0
        %917 = vmatprep.subr.mxu0 0.0
        %918 = vmatpush2.msra.mxu0 0.0
        %919 = vmatprep.subr.mxu0 0.0
        %920 = vmatpush2.msra.mxu0 0.0
        %921 = vmatprep.subr.mxu0 0.0
        %922 = vmatpush2.msra.mxu0 0.0
        %923 = vmatprep.subr.mxu0 0.0
        %924 = vmatpush2.msra.mxu0 0.0
        %925 = vmatprep.mubr.f32.mxu0 0.0
        %926 = vmatmul.mubr.f32.gmra.mxu0 %v859
        %v927 = vpop.f32.mrf.mxu0
        %v928 = vadd.f32 0.0, %v927
        %v929 = vpop.f32.mrf.mxu0
        %930 = vdwg.mxu0
        %v931 = vlaneseq
        %v932 = vshrl.u32 %v931, 7
        %v933 = vsub.s32 0, %v932
        %v934 = vrot.slane %v684, %v933
        %936 = vrot.lane.b32.xlu0 %v934, 96
        %v937 = vpop.permute.xlu0 %936
        %v939 = vmul.f32 %v679, %v937
        %v941 = vsel %vm605, %v939, 0
        %943 = vmatprep.subr.mxu0 0.0
        %944 = vmatpush1.msra.mxu0 0.0
        %945 = vmatprep.subr.mxu0 0.0
        %946 = vmatpush1.msra.mxu0 0.0
        %947 = vmatprep.subr.mxu0 0.0
        %948 = vmatpush1.msra.mxu0 0.0
        %949 = vmatprep.subr.mxu0 0.0
        %950 = vmatpush1.msra.mxu0 0.0
        %951 = vmatprep.subr.mxu0 0.0
        %952 = vmatpush1.msra.mxu0 0.0
        %953 = vmatprep.subr.mxu0 0.0
        %954 = vmatpush1.msra.mxu0 0.0
        %955 = vmatprep.subr.mxu0 0.0
        %956 = vmatpush1.msra.mxu0 0.0
        %957 = vmatprep.subr.mxu0 0.0
        %958 = vmatpush1.msra.mxu0 0.0
        %959 = vmatprep.subr.mxu0 0.0
        %960 = vmatpush1.msra.mxu0 0.0
        %961 = vmatprep.subr.mxu0 0.0
        %962 = vmatpush1.msra.mxu0 0.0
        %963 = vmatprep.subr.mxu0 0.0
        %964 = vmatpush1.msra.mxu0 0.0
        %965 = vmatprep.subr.mxu0 0.0
        %966 = vmatpush1.msra.mxu0 0.0
        %967 = vmatprep.subr.mxu0 0.0
        %968 = vmatpush1.msra.mxu0 %v597
        %969 = vmatprep.subr.mxu0 0.0
        %970 = vmatpush1.msra.mxu0 %v596
        %971 = vmatprep.subr.mxu0 0.0
        %972 = vmatpush1.msra.mxu0 %v595
        %973 = vmatprep.subr.mxu0 0.0
        %974 = vmatpush1.msra.mxu0 %v594
        %975 = vmatprep.subr.mxu0 0.0
        %976 = vmatpush2.msra.mxu0 0.0
        %977 = vmatprep.subr.mxu0 0.0
        %978 = vmatpush2.msra.mxu0 0.0
        %979 = vmatprep.subr.mxu0 0.0
        %980 = vmatpush2.msra.mxu0 0.0
        %981 = vmatprep.subr.mxu0 0.0
        %982 = vmatpush2.msra.mxu0 0.0
        %983 = vmatprep.subr.mxu0 0.0
        %984 = vmatpush2.msra.mxu0 0.0
        %985 = vmatprep.subr.mxu0 0.0
        %986 = vmatpush2.msra.mxu0 0.0
        %987 = vmatprep.subr.mxu0 0.0
        %988 = vmatpush2.msra.mxu0 0.0
        %989 = vmatprep.subr.mxu0 0.0
        %990 = vmatpush2.msra.mxu0 0.0
        %991 = vmatprep.subr.mxu0 0.0
        %992 = vmatpush2.msra.mxu0 0.0
        %993 = vmatprep.subr.mxu0 0.0
        %994 = vmatpush2.msra.mxu0 0.0
        %995 = vmatprep.subr.mxu0 0.0
        %996 = vmatpush2.msra.mxu0 0.0
        %997 = vmatprep.subr.mxu0 0.0
        %998 = vmatpush2.msra.mxu0 0.0
        %999 = vmatprep.subr.mxu0 0.0
        %1000 = vmatpush2.msra.mxu0 0.0
        %1001 = vmatprep.subr.mxu0 0.0
        %1002 = vmatpush2.msra.mxu0 0.0
        %1003 = vmatprep.subr.mxu0 0.0
        %1004 = vmatpush2.msra.mxu0 0.0
        %1005 = vmatprep.subr.mxu0 0.0
        %1006 = vmatpush2.msra.mxu0 0.0
        %1007 = vmatprep.mubr.f32.mxu0 0.0
        %1008 = vmatmul.mubr.f32.gmra.mxu0 %v941
        %v1009 = vpop.f32.mrf.mxu0
        %v1010 = vadd.f32 0.0, %v1009
        %v1011 = vpop.f32.mrf.mxu0
        %1012 = vdwg.mxu0
        %v1013 = vmax.f32 %v769, %v846
        %v1014 = vmax.f32 %v928, %v846
        %v1015 = vmax.f32 %v1013, %v1014
        %v1016 = vmax.f32 %v1015, %v1010
        %v1017 = vsub.f32 %v769, %v1016
        %v1018 = vmul.f32 %v1017, 1.442695
        %v1019 = vpow.pop %v1018
        %v1020 = vsub.f32 %v846, %v1016
        %v1021 = vmul.f32 %v1020, 1.442695
        %v1022 = vpow.pop %v1021
        %v1023 = vsub.f32 %v928, %v1016
        %v1024 = vmul.f32 %v1023, 1.442695
        %v1025 = vpow.pop %v1024
        %v1026 = vsub.f32 %v1010, %v1016
        %v1027 = vmul.f32 %v1026, 1.442695
        %v1028 = vpow.pop %v1027
        %v1029 = vadd.f32 %v1019, %v1022
        %v1030 = vadd.f32 %v1029, %v1025
        %v1031 = vadd.f32 %v1030, %v1022
        %v1032 = vadd.f32 %v1031, %v1028
        %v1033 = vrcp.pop %v1032
        %v1034 = vmul.f32 %v1032, %v1033
        %v1035 = vsub.f32 2.0, %v1034
        %v1036 = vmul.f32 %v1033, %v1035
        %v1037 = vmul.f32 %v1019, %v1036
        %vm1038 = vcmask 31744
        %v1040 = vsel %vm1038, %v1037, 0
        %vm1042 = vcmask 1043456
        %v1044 = vsel %vm1042, %v598, 0
        %1046 = vmatprep.subr.mxu0 0.0
        %1047 = vmatpush1.msra.mxu0 0.0
        %1048 = vmatprep.subr.mxu0 0.0
        %1049 = vmatpush1.msra.mxu0 0.0
        %1050 = vmatprep.subr.mxu0 0.0
        %1051 = vmatpush1.msra.mxu0 0.0
        %1052 = vmatprep.subr.mxu0 0.0
        %1053 = vmatpush1.msra.mxu0 0.0
        %1054 = vmatprep.subr.mxu0 0.0
        %1055 = vmatpush1.msra.mxu0 0.0
        %1056 = vmatprep.subr.mxu0 0.0
        %1057 = vmatpush1.msra.mxu0 0.0
        %1058 = vmatprep.subr.mxu0 0.0
        %1059 = vmatpush1.msra.mxu0 0.0
        %1060 = vmatprep.subr.mxu0 0.0
        %1061 = vmatpush1.msra.mxu0 0.0
        %1062 = vmatprep.subr.mxu0 0.0
        %1063 = vmatpush1.msra.mxu0 0.0
        %1064 = vmatprep.subr.mxu0 0.0
        %1065 = vmatpush1.msra.mxu0 0.0
        %1066 = vmatprep.subr.mxu0 0.0
        %1067 = vmatpush1.msra.mxu0 0.0
        %1068 = vmatprep.subr.mxu0 0.0
        %1069 = vmatpush1.msra.mxu0 0.0
        %1070 = vmatprep.subr.mxu0 0.0
        %1071 = vmatpush1.msra.mxu0 0.0
        %1072 = vmatprep.subr.mxu0 0.0
        %1073 = vmatpush1.msra.mxu0 0.0
        %1074 = vmatprep.subr.mxu0 0.0
        %1075 = vmatpush1.msra.mxu0 0.0
        %1076 = vmatprep.subr.mxu0 0.0
        %1077 = vmatpush1.msra.mxu0 %v1044
        %1078 = vmatprep.subr.mxu0 0.0
        %1079 = vmatpush2.msra.mxu0 0.0
        %1080 = vmatprep.subr.mxu0 0.0
        %1081 = vmatpush2.msra.mxu0 0.0
        %1082 = vmatprep.subr.mxu0 0.0
        %1083 = vmatpush2.msra.mxu0 0.0
        %1084 = vmatprep.subr.mxu0 0.0
        %1085 = vmatpush2.msra.mxu0 0.0
        %1086 = vmatprep.subr.mxu0 0.0
        %1087 = vmatpush2.msra.mxu0 0.0
        %1088 = vmatprep.subr.mxu0 0.0
        %1089 = vmatpush2.msra.mxu0 0.0
        %1090 = vmatprep.subr.mxu0 0.0
        %1091 = vmatpush2.msra.mxu0 0.0
        %1092 = vmatprep.subr.mxu0 0.0
        %1093 = vmatpush2.msra.mxu0 0.0
        %1094 = vmatprep.subr.mxu0 0.0
        %1095 = vmatpush2.msra.mxu0 0.0
        %1096 = vmatprep.subr.mxu0 0.0
        %1097 = vmatpush2.msra.mxu0 0.0
        %1098 = vmatprep.subr.mxu0 0.0
        %1099 = vmatpush2.msra.mxu0 0.0
        %1100 = vmatprep.subr.mxu0 0.0
        %1101 = vmatpush2.msra.mxu0 0.0
        %1102 = vmatprep.subr.mxu0 0.0
        %1103 = vmatpush2.msra.mxu0 0.0
        %1104 = vmatprep.subr.mxu0 0.0
        %1105 = vmatpush2.msra.mxu0 0.0
        %1106 = vmatprep.subr.mxu0 0.0
        %1107 = vmatpush2.msra.mxu0 0.0
        %1108 = vmatprep.subr.mxu0 0.0
        %1109 = vmatpush2.msra.mxu0 0.0
        %1110 = vmatprep.mubr.f32.mxu0 0.0
        %1111 = vmatmul.mubr.f32.gmra.mxu0 %v1040
        %v1112 = vpop.f32.mrf.mxu0
        %v1113 = vadd.f32 0.0, %v1112
        %v1114 = vpop.f32.mrf.mxu0
        %1115 = vdwg.mxu0
        %1116 = vrot.lane.b32.xlu0 %v693, 64
        %v1117 = vpop.permute.xlu0 %1116
        %v1119 = vmul.f32 %v1113, %v1117
        %v1120 = vmul.f32 %v1022, %v1036
        %v1122 = vsel %vm1038, %v1120, 0
        %1124 = vmatprep.subr.mxu0 0.0
        %1125 = vmatpush1.msra.mxu0 0.0
        %1126 = vmatprep.subr.mxu0 0.0
        %1127 = vmatpush1.msra.mxu0 0.0
        %1128 = vmatprep.subr.mxu0 0.0
        %1129 = vmatpush1.msra.mxu0 0.0
        %1130 = vmatprep.subr.mxu0 0.0
        %1131 = vmatpush1.msra.mxu0 0.0
        %1132 = vmatprep.subr.mxu0 0.0
        %1133 = vmatpush1.msra.mxu0 0.0
        %1134 = vmatprep.subr.mxu0 0.0
        %1135 = vmatpush1.msra.mxu0 0.0
        %1136 = vmatprep.subr.mxu0 0.0
        %1137 = vmatpush1.msra.mxu0 0.0
        %1138 = vmatprep.subr.mxu0 0.0
        %1139 = vmatpush1.msra.mxu0 0.0
        %1140 = vmatprep.subr.mxu0 0.0
        %1141 = vmatpush1.msra.mxu0 0.0
        %1142 = vmatprep.subr.mxu0 0.0
        %1143 = vmatpush1.msra.mxu0 0.0
        %1144 = vmatprep.subr.mxu0 0.0
        %1145 = vmatpush1.msra.mxu0 0.0
        %1146 = vmatprep.subr.mxu0 0.0
        %1147 = vmatpush1.msra.mxu0 0.0
        %1148 = vmatprep.subr.mxu0 0.0
        %1149 = vmatpush1.msra.mxu0 0.0
        %1150 = vmatprep.subr.mxu0 0.0
        %1151 = vmatpush1.msra.mxu0 0.0
        %1152 = vmatprep.subr.mxu0 0.0
        %1153 = vmatpush1.msra.mxu0 0.0
        %1154 = vmatprep.subr.mxu0 0.0
        %1155 = vmatpush1.msra.mxu0 %v1044
        %1156 = vmatprep.subr.mxu0 0.0
        %1157 = vmatpush2.msra.mxu0 0.0
        %1158 = vmatprep.subr.mxu0 0.0
        %1159 = vmatpush2.msra.mxu0 0.0
        %1160 = vmatprep.subr.mxu0 0.0
        %1161 = vmatpush2.msra.mxu0 0.0
        %1162 = vmatprep.subr.mxu0 0.0
        %1163 = vmatpush2.msra.mxu0 0.0
        %1164 = vmatprep.subr.mxu0 0.0
        %1165 = vmatpush2.msra.mxu0 0.0
        %1166 = vmatprep.subr.mxu0 0.0
        %1167 = vmatpush2.msra.mxu0 0.0
        %1168 = vmatprep.subr.mxu0 0.0
        %1169 = vmatpush2.msra.mxu0 0.0
        %1170 = vmatprep.subr.mxu0 0.0
        %1171 = vmatpush2.msra.mxu0 0.0
        %1172 = vmatprep.subr.mxu0 0.0
        %1173 = vmatpush2.msra.mxu0 0.0
        %1174 = vmatprep.subr.mxu0 0.0
        %1175 = vmatpush2.msra.mxu0 0.0
        %1176 = vmatprep.subr.mxu0 0.0
        %1177 = vmatpush2.msra.mxu0 0.0
        %1178 = vmatprep.subr.mxu0 0.0
        %1179 = vmatpush2.msra.mxu0 0.0
        %1180 = vmatprep.subr.mxu0 0.0
        %1181 = vmatpush2.msra.mxu0 0.0
        %1182 = vmatprep.subr.mxu0 0.0
        %1183 = vmatpush2.msra.mxu0 0.0
        %1184 = vmatprep.subr.mxu0 0.0
        %1185 = vmatpush2.msra.mxu0 0.0
        %1186 = vmatprep.subr.mxu0 0.0
        %1187 = vmatpush2.msra.mxu0 0.0
        %1188 = vmatprep.mubr.f32.mxu0 0.0
        %1189 = vmatmul.mubr.f32.gmra.mxu0 %v1122
        %v1190 = vpop.f32.mrf.mxu0
        %v1191 = vadd.f32 0.0, %v1190
        %v1192 = vpop.f32.mrf.mxu0
        %1193 = vdwg.mxu0
        %1194 = vrot.lane.b32.xlu0 %v679, 64
        %v1195 = vpop.permute.xlu0 %1194
        %v1197 = vmul.f32 %v1191, %v1195
        %v1198 = vadd.f32 %v1119, %v1197
        %v1199 = vmul.f32 %v1025, %v1036
        %v1201 = vsel %vm1038, %v1199, 0
        %1203 = vmatprep.subr.mxu0 0.0
        %1204 = vmatpush1.msra.mxu0 0.0
        %1205 = vmatprep.subr.mxu0 0.0
        %1206 = vmatpush1.msra.mxu0 0.0
        %1207 = vmatprep.subr.mxu0 0.0
        %1208 = vmatpush1.msra.mxu0 0.0
        %1209 = vmatprep.subr.mxu0 0.0
        %1210 = vmatpush1.msra.mxu0 0.0
        %1211 = vmatprep.subr.mxu0 0.0
        %1212 = vmatpush1.msra.mxu0 0.0
        %1213 = vmatprep.subr.mxu0 0.0
        %1214 = vmatpush1.msra.mxu0 0.0
        %1215 = vmatprep.subr.mxu0 0.0
        %1216 = vmatpush1.msra.mxu0 0.0
        %1217 = vmatprep.subr.mxu0 0.0
        %1218 = vmatpush1.msra.mxu0 0.0
        %1219 = vmatprep.subr.mxu0 0.0
        %1220 = vmatpush1.msra.mxu0 0.0
        %1221 = vmatprep.subr.mxu0 0.0
        %1222 = vmatpush1.msra.mxu0 0.0
        %1223 = vmatprep.subr.mxu0 0.0
        %1224 = vmatpush1.msra.mxu0 0.0
        %1225 = vmatprep.subr.mxu0 0.0
        %1226 = vmatpush1.msra.mxu0 0.0
        %1227 = vmatprep.subr.mxu0 0.0
        %1228 = vmatpush1.msra.mxu0 0.0
        %1229 = vmatprep.subr.mxu0 0.0
        %1230 = vmatpush1.msra.mxu0 0.0
        %1231 = vmatprep.subr.mxu0 0.0
        %1232 = vmatpush1.msra.mxu0 0.0
        %1233 = vmatprep.subr.mxu0 0.0
        %1234 = vmatpush1.msra.mxu0 %v1044
        %1235 = vmatprep.subr.mxu0 0.0
        %1236 = vmatpush2.msra.mxu0 0.0
        %1237 = vmatprep.subr.mxu0 0.0
        %1238 = vmatpush2.msra.mxu0 0.0
        %1239 = vmatprep.subr.mxu0 0.0
        %1240 = vmatpush2.msra.mxu0 0.0
        %1241 = vmatprep.subr.mxu0 0.0
        %1242 = vmatpush2.msra.mxu0 0.0
        %1243 = vmatprep.subr.mxu0 0.0
        %1244 = vmatpush2.msra.mxu0 0.0
        %1245 = vmatprep.subr.mxu0 0.0
        %1246 = vmatpush2.msra.mxu0 0.0
        %1247 = vmatprep.subr.mxu0 0.0
        %1248 = vmatpush2.msra.mxu0 0.0
        %1249 = vmatprep.subr.mxu0 0.0
        %1250 = vmatpush2.msra.mxu0 0.0
        %1251 = vmatprep.subr.mxu0 0.0
        %1252 = vmatpush2.msra.mxu0 0.0
        %1253 = vmatprep.subr.mxu0 0.0
        %1254 = vmatpush2.msra.mxu0 0.0
        %1255 = vmatprep.subr.mxu0 0.0
        %1256 = vmatpush2.msra.mxu0 0.0
        %1257 = vmatprep.subr.mxu0 0.0
        %1258 = vmatpush2.msra.mxu0 0.0
        %1259 = vmatprep.subr.mxu0 0.0
        %1260 = vmatpush2.msra.mxu0 0.0
        %1261 = vmatprep.subr.mxu0 0.0
        %1262 = vmatpush2.msra.mxu0 0.0
        %1263 = vmatprep.subr.mxu0 0.0
        %1264 = vmatpush2.msra.mxu0 0.0
        %1265 = vmatprep.subr.mxu0 0.0
        %1266 = vmatpush2.msra.mxu0 0.0
        %1267 = vmatprep.mubr.f32.mxu0 0.0
        %1268 = vmatmul.mubr.f32.gmra.mxu0 %v1201
        %v1269 = vpop.f32.mrf.mxu0
        %v1270 = vadd.f32 0.0, %v1269
        %v1271 = vpop.f32.mrf.mxu0
        %1272 = vdwg.mxu0
        %1273 = vrot.lane.b32.xlu0 %v852, 64
        %v1274 = vpop.permute.xlu0 %1273
        %v1276 = vmul.f32 %v1270, %v1274
        %v1277 = vadd.f32 %v1198, %v1276
        %v1278 = vadd.f32 %v1277, %v1197
        %v1279 = vmul.f32 %v1028, %v1036
        %v1281 = vsel %vm1038, %v1279, 0
        %1283 = vmatprep.subr.mxu0 0.0
        %1284 = vmatpush1.msra.mxu0 0.0
        %1285 = vmatprep.subr.mxu0 0.0
        %1286 = vmatpush1.msra.mxu0 0.0
        %1287 = vmatprep.subr.mxu0 0.0
        %1288 = vmatpush1.msra.mxu0 0.0
        %1289 = vmatprep.subr.mxu0 0.0
        %1290 = vmatpush1.msra.mxu0 0.0
        %1291 = vmatprep.subr.mxu0 0.0
        %1292 = vmatpush1.msra.mxu0 0.0
        %1293 = vmatprep.subr.mxu0 0.0
        %1294 = vmatpush1.msra.mxu0 0.0
        %1295 = vmatprep.subr.mxu0 0.0
        %1296 = vmatpush1.msra.mxu0 0.0
        %1297 = vmatprep.subr.mxu0 0.0
        %1298 = vmatpush1.msra.mxu0 0.0
        %1299 = vmatprep.subr.mxu0 0.0
        %1300 = vmatpush1.msra.mxu0 0.0
        %1301 = vmatprep.subr.mxu0 0.0
        %1302 = vmatpush1.msra.mxu0 0.0
        %1303 = vmatprep.subr.mxu0 0.0
        %1304 = vmatpush1.msra.mxu0 0.0
        %1305 = vmatprep.subr.mxu0 0.0
        %1306 = vmatpush1.msra.mxu0 0.0
        %1307 = vmatprep.subr.mxu0 0.0
        %1308 = vmatpush1.msra.mxu0 0.0
        %1309 = vmatprep.subr.mxu0 0.0
        %1310 = vmatpush1.msra.mxu0 0.0
        %1311 = vmatprep.subr.mxu0 0.0
        %1312 = vmatpush1.msra.mxu0 0.0
        %1313 = vmatprep.subr.mxu0 0.0
        %1314 = vmatpush1.msra.mxu0 %v1044
        %1315 = vmatprep.subr.mxu0 0.0
        %1316 = vmatpush2.msra.mxu0 0.0
        %1317 = vmatprep.subr.mxu0 0.0
        %1318 = vmatpush2.msra.mxu0 0.0
        %1319 = vmatprep.subr.mxu0 0.0
        %1320 = vmatpush2.msra.mxu0 0.0
        %1321 = vmatprep.subr.mxu0 0.0
        %1322 = vmatpush2.msra.mxu0 0.0
        %1323 = vmatprep.subr.mxu0 0.0
        %1324 = vmatpush2.msra.mxu0 0.0
        %1325 = vmatprep.subr.mxu0 0.0
        %1326 = vmatpush2.msra.mxu0 0.0
        %1327 = vmatprep.subr.mxu0 0.0
        %1328 = vmatpush2.msra.mxu0 0.0
        %1329 = vmatprep.subr.mxu0 0.0
        %1330 = vmatpush2.msra.mxu0 0.0
        %1331 = vmatprep.subr.mxu0 0.0
        %1332 = vmatpush2.msra.mxu0 0.0
        %1333 = vmatprep.subr.mxu0 0.0
        %1334 = vmatpush2.msra.mxu0 0.0
        %1335 = vmatprep.subr.mxu0 0.0
        %1336 = vmatpush2.msra.mxu0 0.0
        %1337 = vmatprep.subr.mxu0 0.0
        %1338 = vmatpush2.msra.mxu0 0.0
        %1339 = vmatprep.subr.mxu0 0.0
        %1340 = vmatpush2.msra.mxu0 0.0
        %1341 = vmatprep.subr.mxu0 0.0
        %1342 = vmatpush2.msra.mxu0 0.0
        %1343 = vmatprep.subr.mxu0 0.0
        %1344 = vmatpush2.msra.mxu0 0.0
        %1345 = vmatprep.subr.mxu0 0.0
        %1346 = vmatpush2.msra.mxu0 0.0
        %1347 = vmatprep.mubr.f32.mxu0 0.0
        %1348 = vmatmul.mubr.f32.gmra.mxu0 %v1281
        %v1349 = vpop.f32.mrf.mxu0
        %v1350 = vadd.f32 0.0, %v1349
        %v1351 = vpop.f32.mrf.mxu0
        %1352 = vdwg.mxu0
        %1353 = vrot.lane.b32.xlu0 %v934, 64
        %v1354 = vpop.permute.xlu0 %1353
        %v1356 = vmul.f32 %v1350, %v1354
        %v1357 = vadd.f32 %v1278, %v1356
        %v1359 = vlaneseq
        %v1360 = vshrl.u32 %v1359, 7
        %v1361 = vsub.s32 0, %v1360
        %v1362 = vrot.slane %v587, %v1361
        %v1365 = vsel %vm605, %v1357, 0
        %1367 = vmatprep.subr.mxu0 0.0
        %1368 = vmatpush1.msra.mxu0 0.0
        %1369 = vmatprep.subr.mxu0 0.0
        %1370 = vmatpush1.msra.mxu0 0.0
        %1371 = vmatprep.subr.mxu0 0.0
        %1372 = vmatpush1.msra.mxu0 0.0
        %1373 = vmatprep.subr.mxu0 0.0
        %1374 = vmatpush1.msra.mxu0 0.0
        %1375 = vmatprep.subr.mxu0 0.0
        %1376 = vmatpush1.msra.mxu0 0.0
        %1377 = vmatprep.subr.mxu0 0.0
        %1378 = vmatpush1.msra.mxu0 0.0
        %1379 = vmatprep.subr.mxu0 0.0
        %1380 = vmatpush1.msra.mxu0 0.0
        %1381 = vmatprep.subr.mxu0 0.0
        %1382 = vmatpush1.msra.mxu0 0.0
        %1383 = vmatprep.subr.mxu0 0.0
        %1384 = vmatpush1.msra.mxu0 0.0
        %1385 = vmatprep.subr.mxu0 0.0
        %1386 = vmatpush1.msra.mxu0 0.0
        %1387 = vmatprep.subr.mxu0 0.0
        %1388 = vmatpush1.msra.mxu0 0.0
        %1389 = vmatprep.subr.mxu0 0.0
        %1390 = vmatpush1.msra.mxu0 0.0
        %1391 = vmatprep.subr.mxu0 0.0
        %1392 = vmatpush1.msra.mxu0 %v577
        %1393 = vmatprep.subr.mxu0 0.0
        %1394 = vmatpush1.msra.mxu0 %v576
        %1395 = vmatprep.subr.mxu0 0.0
        %1396 = vmatpush1.msra.mxu0 %v575
        %1397 = vmatprep.subr.mxu0 0.0
        %1398 = vmatpush1.msra.mxu0 %v574
        %1399 = vmatprep.subr.mxu0 0.0
        %1400 = vmatpush2.msra.mxu0 0.0
        %1401 = vmatprep.subr.mxu0 0.0
        %1402 = vmatpush2.msra.mxu0 0.0
        %1403 = vmatprep.subr.mxu0 0.0
        %1404 = vmatpush2.msra.mxu0 0.0
        %1405 = vmatprep.subr.mxu0 0.0
        %1406 = vmatpush2.msra.mxu0 0.0
        %1407 = vmatprep.subr.mxu0 0.0
        %1408 = vmatpush2.msra.mxu0 0.0
        %1409 = vmatprep.subr.mxu0 0.0
        %1410 = vmatpush2.msra.mxu0 0.0
        %1411 = vmatprep.subr.mxu0 0.0
        %1412 = vmatpush2.msra.mxu0 0.0
        %1413 = vmatprep.subr.mxu0 0.0
        %1414 = vmatpush2.msra.mxu0 0.0
        %1415 = vmatprep.subr.mxu0 0.0
        %1416 = vmatpush2.msra.mxu0 0.0
        %1417 = vmatprep.subr.mxu0 0.0
        %1418 = vmatpush2.msra.mxu0 0.0
        %1419 = vmatprep.subr.mxu0 0.0
        %1420 = vmatpush2.msra.mxu0 0.0
        %1421 = vmatprep.subr.mxu0 0.0
        %1422 = vmatpush2.msra.mxu0 0.0
        %1423 = vmatprep.subr.mxu0 0.0
        %1424 = vmatpush2.msra.mxu0 0.0
        %1425 = vmatprep.subr.mxu0 0.0
        %1426 = vmatpush2.msra.mxu0 0.0
        %1427 = vmatprep.subr.mxu0 0.0
        %1428 = vmatpush2.msra.mxu0 0.0
        %1429 = vmatprep.subr.mxu0 0.0
        %1430 = vmatpush2.msra.mxu0 0.0
        %1431 = vmatprep.mubr.f32.mxu0 0.0
        %1432 = vmatmul.mubr.f32.gmra.mxu0 %v1365
        %v1433 = vpop.f32.mrf.mxu0
        %v1434 = vadd.f32 %v1362, %v1433
        %v1435 = vpop.f32.mrf.mxu0
        %1436 = vdwg.mxu0
        %v1437 = vmax.f32 %v1434, 0.0
        %v1438 = vsel %vm605, %v1437, 0.0
        %1439 = vadd.xlane.f32.xlu0 %v1438
        %v1440 = vpop.xlane.xlu0 %1439
        %v1441 = vrcp.pop 32.0
        %v1442 = vmul.f32 %v1440, %v1441
        %v1443 = vsub.f32 %v1437, %v1442
        %v1444 = vmul.f32 %v1443, %v1443
        %v1445 = vsel %vm605, %v1444, 0.0
        %1446 = vadd.xlane.f32.xlu0 %v1445
        %v1447 = vpop.xlane.xlu0 %1446
        %v1448 = vmul.f32 %v1447, %v1441
        %v1449 = vadd.f32 %v1448, 1e-12
        %v1450 = vrsqrt.pop %v1449
        %v1451 = vmul.f32 %v1443, %v1450
        %v1453 = vlaneseq
        %v1454 = vshrl.u32 %v1453, 7
        %v1455 = vsub.s32 0, %v1454
        %v1456 = vrot.slane %v590, %v1455
        %v1458 = vmul.f32 %v1456, %v1451
        %v1460 = vlaneseq
        %v1461 = vshrl.u32 %v1460, 7
        %v1462 = vsub.s32 0, %v1461
        %v1463 = vrot.slane %v591, %v1462
        %v1465 = vadd.f32 %v1458, %v1463
        %v1467 = vlaneseq
        %v1468 = vshrl.u32 %v1467, 7
        %v1469 = vsub.s32 0, %v1468
        %v1470 = vrot.slane %v588, %v1469
        %v1473 = vsel %vm605, %v1465, 0
        %1475 = vmatprep.subr.mxu0 0.0
        %1476 = vmatpush1.msra.mxu0 0.0
        %1477 = vmatprep.subr.mxu0 0.0
        %1478 = vmatpush1.msra.mxu0 0.0
        %1479 = vmatprep.subr.mxu0 0.0
        %1480 = vmatpush1.msra.mxu0 0.0
        %1481 = vmatprep.subr.mxu0 0.0
        %1482 = vmatpush1.msra.mxu0 0.0
        %1483 = vmatprep.subr.mxu0 0.0
        %1484 = vmatpush1.msra.mxu0 0.0
        %1485 = vmatprep.subr.mxu0 0.0
        %1486 = vmatpush1.msra.mxu0 0.0
        %1487 = vmatprep.subr.mxu0 0.0
        %1488 = vmatpush1.msra.mxu0 0.0
        %1489 = vmatprep.subr.mxu0 0.0
        %1490 = vmatpush1.msra.mxu0 0.0
        %1491 = vmatprep.subr.mxu0 0.0
        %1492 = vmatpush1.msra.mxu0 0.0
        %1493 = vmatprep.subr.mxu0 0.0
        %1494 = vmatpush1.msra.mxu0 0.0
        %1495 = vmatprep.subr.mxu0 0.0
        %1496 = vmatpush1.msra.mxu0 0.0
        %1497 = vmatprep.subr.mxu0 0.0
        %1498 = vmatpush1.msra.mxu0 0.0
        %1499 = vmatprep.subr.mxu0 0.0
        %1500 = vmatpush1.msra.mxu0 %v581
        %1501 = vmatprep.subr.mxu0 0.0
        %1502 = vmatpush1.msra.mxu0 %v580
        %1503 = vmatprep.subr.mxu0 0.0
        %1504 = vmatpush1.msra.mxu0 %v579
        %1505 = vmatprep.subr.mxu0 0.0
        %1506 = vmatpush1.msra.mxu0 %v578
        %1507 = vmatprep.subr.mxu0 0.0
        %1508 = vmatpush2.msra.mxu0 0.0
        %1509 = vmatprep.subr.mxu0 0.0
        %1510 = vmatpush2.msra.mxu0 0.0
        %1511 = vmatprep.subr.mxu0 0.0
        %1512 = vmatpush2.msra.mxu0 0.0
        %1513 = vmatprep.subr.mxu0 0.0
        %1514 = vmatpush2.msra.mxu0 0.0
        %1515 = vmatprep.subr.mxu0 0.0
        %1516 = vmatpush2.msra.mxu0 0.0
        %1517 = vmatprep.subr.mxu0 0.0
        %1518 = vmatpush2.msra.mxu0 0.0
        %1519 = vmatprep.subr.mxu0 0.0
        %1520 = vmatpush2.msra.mxu0 0.0
        %1521 = vmatprep.subr.mxu0 0.0
        %1522 = vmatpush2.msra.mxu0 0.0
        %1523 = vmatprep.subr.mxu0 0.0
        %1524 = vmatpush2.msra.mxu0 0.0
        %1525 = vmatprep.subr.mxu0 0.0
        %1526 = vmatpush2.msra.mxu0 0.0
        %1527 = vmatprep.subr.mxu0 0.0
        %1528 = vmatpush2.msra.mxu0 0.0
        %1529 = vmatprep.subr.mxu0 0.0
        %1530 = vmatpush2.msra.mxu0 0.0
        %1531 = vmatprep.subr.mxu0 0.0
        %1532 = vmatpush2.msra.mxu0 0.0
        %1533 = vmatprep.subr.mxu0 0.0
        %1534 = vmatpush2.msra.mxu0 0.0
        %1535 = vmatprep.subr.mxu0 0.0
        %1536 = vmatpush2.msra.mxu0 0.0
        %1537 = vmatprep.subr.mxu0 0.0
        %1538 = vmatpush2.msra.mxu0 0.0
        %1539 = vmatprep.mubr.f32.mxu0 0.0
        %1540 = vmatmul.mubr.f32.gmra.mxu0 %v1473
        %v1541 = vpop.f32.mrf.mxu0
        %v1542 = vadd.f32 %v1470, %v1541
        %v1543 = vpop.f32.mrf.mxu0
        %1544 = vmatprep.mubr.f32.mxu0 0.0
        %1545 = vmatmul.mubr.f32.gmra.mxu0 %v610
        %v1546 = vpop.f32.mrf.mxu0
        %v1547 = vadd.f32 %v1470, %v1546
        %v1548 = vpop.f32.mrf.mxu0
        %1549 = vdwg.mxu0
        %v1550 = vlaneseq
        %v1551 = vshrl.u32 %v1550, 7
        %v1552 = vsub.s32 0, %v1551
        %v1553 = vrot.slane %v1547, %v1552
        %1556 = vrot.lane.b32.xlu0 %v1542, 96
        %v1557 = vpop.permute.xlu0 %1556
        %1558 = vrot.lane.b32.xlu0 %v1547, 96
        %v1559 = vpop.permute.xlu0 %1558
        %v1562 = vmul.f32 %v1553, %v1557
        %v1563 = vmul.f32 %v1553, %v1559
        %v1565 = vsel %vm605, %v1562, 0
        %v1568 = vsel %vm605, %v1563, 0
        %1570 = vmatprep.subr.mxu0 0.0
        %1571 = vmatpush1.msra.mxu0 0.0
        %1572 = vmatprep.subr.mxu0 0.0
        %1573 = vmatpush1.msra.mxu0 0.0
        %1574 = vmatprep.subr.mxu0 0.0
        %1575 = vmatpush1.msra.mxu0 0.0
        %1576 = vmatprep.subr.mxu0 0.0
        %1577 = vmatpush1.msra.mxu0 0.0
        %1578 = vmatprep.subr.mxu0 0.0
        %1579 = vmatpush1.msra.mxu0 0.0
        %1580 = vmatprep.subr.mxu0 0.0
        %1581 = vmatpush1.msra.mxu0 0.0
        %1582 = vmatprep.subr.mxu0 0.0
        %1583 = vmatpush1.msra.mxu0 0.0
        %1584 = vmatprep.subr.mxu0 0.0
        %1585 = vmatpush1.msra.mxu0 0.0
        %1586 = vmatprep.subr.mxu0 0.0
        %1587 = vmatpush1.msra.mxu0 0.0
        %1588 = vmatprep.subr.mxu0 0.0
        %1589 = vmatpush1.msra.mxu0 0.0
        %1590 = vmatprep.subr.mxu0 0.0
        %1591 = vmatpush1.msra.mxu0 0.0
        %1592 = vmatprep.subr.mxu0 0.0
        %1593 = vmatpush1.msra.mxu0 0.0
        %1594 = vmatprep.subr.mxu0 0.0
        %1595 = vmatpush1.msra.mxu0 %v597
        %1596 = vmatprep.subr.mxu0 0.0
        %1597 = vmatpush1.msra.mxu0 %v596
        %1598 = vmatprep.subr.mxu0 0.0
        %1599 = vmatpush1.msra.mxu0 %v595
        %1600 = vmatprep.subr.mxu0 0.0
        %1601 = vmatpush1.msra.mxu0 %v594
        %1602 = vmatprep.subr.mxu0 0.0
        %1603 = vmatpush2.msra.mxu0 0.0
        %1604 = vmatprep.subr.mxu0 0.0
        %1605 = vmatpush2.msra.mxu0 0.0
        %1606 = vmatprep.subr.mxu0 0.0
        %1607 = vmatpush2.msra.mxu0 0.0
        %1608 = vmatprep.subr.mxu0 0.0
        %1609 = vmatpush2.msra.mxu0 0.0
        %1610 = vmatprep.subr.mxu0 0.0
        %1611 = vmatpush2.msra.mxu0 0.0
        %1612 = vmatprep.subr.mxu0 0.0
        %1613 = vmatpush2.msra.mxu0 0.0
        %1614 = vmatprep.subr.mxu0 0.0
        %1615 = vmatpush2.msra.mxu0 0.0
        %1616 = vmatprep.subr.mxu0 0.0
        %1617 = vmatpush2.msra.mxu0 0.0
        %1618 = vmatprep.subr.mxu0 0.0
        %1619 = vmatpush2.msra.mxu0 0.0
        %1620 = vmatprep.subr.mxu0 0.0
        %1621 = vmatpush2.msra.mxu0 0.0
        %1622 = vmatprep.subr.mxu0 0.0
        %1623 = vmatpush2.msra.mxu0 0.0
        %1624 = vmatprep.subr.mxu0 0.0
        %1625 = vmatpush2.msra.mxu0 0.0
        %1626 = vmatprep.subr.mxu0 0.0
        %1627 = vmatpush2.msra.mxu0 0.0
        %1628 = vmatprep.subr.mxu0 0.0
        %1629 = vmatpush2.msra.mxu0 0.0
        %1630 = vmatprep.subr.mxu0 0.0
        %1631 = vmatpush2.msra.mxu0 0.0
        %1632 = vmatprep.subr.mxu0 0.0
        %1633 = vmatpush2.msra.mxu0 0.0
        %1634 = vmatprep.mubr.f32.mxu0 0.0
        %1635 = vmatmul.mubr.f32.gmra.mxu0 %v1565
        %v1636 = vpop.f32.mrf.mxu0
        %v1637 = vadd.f32 0.0, %v1636
        %v1638 = vpop.f32.mrf.mxu0
        %1639 = vmatprep.mubr.f32.mxu0 0.0
        %1640 = vmatmul.mubr.f32.gmra.mxu0 %v1568
        %v1641 = vpop.f32.mrf.mxu0
        %v1642 = vadd.f32 0.0, %v1641
        %v1643 = vpop.f32.mrf.mxu0
        %1644 = vdwg.mxu0
        %v1645 = vsel %vm1038, %v1637, -inf
        %vm1646 = vcmask 24576
        %v1647 = vsel %vm1646, %v1642, -inf
        %v1648 = vmax.f32 %v1645, %v1647
        %v1649 = vrot.slane %v1648, 4
        %v1650 = vmax.f32 %v1648, %v1649
        %v1651 = vrot.slane %v1650, 2
        %v1652 = vmax.f32 %v1650, %v1651
        %v1653 = vrot.slane %v1652, 1
        %v1654 = vmax.f32 %v1652, %v1653
        %v1655 = vsub.f32 %v1637, %v1654
        %v1656 = vsub.f32 %v1642, %v1654
        %v1657 = vmul.f32 %v1655, 1.442695
        %v1658 = vpow.pop %v1657
        %v1659 = vmul.f32 %v1656, 1.442695
        %v1660 = vpow.pop %v1659
        %v1661 = vsel %vm1038, %v1658, 0.0
        %v1662 = vsel %vm1646, %v1660, 0.0
        %v1663 = vadd.f32 %v1661, %v1662
        %v1664 = vrot.slane %v1663, 4
        %v1665 = vadd.f32 %v1663, %v1664
        %v1666 = vrot.slane %v1665, 2
        %v1667 = vadd.f32 %v1665, %v1666
        %v1668 = vrot.slane %v1667, 1
        %v1669 = vadd.f32 %v1667, %v1668
        %v1670 = vrcp.pop %v1669
        %v1671 = vmul.f32 %v1669, %v1670
        %v1672 = vsub.f32 2.0, %v1671
        %v1673 = vmul.f32 %v1670, %v1672
        %v1674 = vmul.f32 %v1658, %v1673
        %v1675 = vmul.f32 %v1660, %v1673
        %v1677 = vsel %vm1038, %v1674, 0
        %v1680 = vsel %vm1038, %v1675, 0
        %1682 = vmatprep.subr.mxu0 0.0
        %1683 = vmatpush1.msra.mxu0 0.0
        %1684 = vmatprep.subr.mxu0 0.0
        %1685 = vmatpush1.msra.mxu0 0.0
        %1686 = vmatprep.subr.mxu0 0.0
        %1687 = vmatpush1.msra.mxu0 0.0
        %1688 = vmatprep.subr.mxu0 0.0
        %1689 = vmatpush1.msra.mxu0 0.0
        %1690 = vmatprep.subr.mxu0 0.0
        %1691 = vmatpush1.msra.mxu0 0.0
        %1692 = vmatprep.subr.mxu0 0.0
        %1693 = vmatpush1.msra.mxu0 0.0
        %1694 = vmatprep.subr.mxu0 0.0
        %1695 = vmatpush1.msra.mxu0 0.0
        %1696 = vmatprep.subr.mxu0 0.0
        %1697 = vmatpush1.msra.mxu0 0.0
        %1698 = vmatprep.subr.mxu0 0.0
        %1699 = vmatpush1.msra.mxu0 0.0
        %1700 = vmatprep.subr.mxu0 0.0
        %1701 = vmatpush1.msra.mxu0 0.0
        %1702 = vmatprep.subr.mxu0 0.0
        %1703 = vmatpush1.msra.mxu0 0.0
        %1704 = vmatprep.subr.mxu0 0.0
        %1705 = vmatpush1.msra.mxu0 0.0
        %1706 = vmatprep.subr.mxu0 0.0
        %1707 = vmatpush1.msra.mxu0 0.0
        %1708 = vmatprep.subr.mxu0 0.0
        %1709 = vmatpush1.msra.mxu0 0.0
        %1710 = vmatprep.subr.mxu0 0.0
        %1711 = vmatpush1.msra.mxu0 0.0
        %1712 = vmatprep.subr.mxu0 0.0
        %1713 = vmatpush1.msra.mxu0 %v1044
        %1714 = vmatprep.subr.mxu0 0.0
        %1715 = vmatpush2.msra.mxu0 0.0
        %1716 = vmatprep.subr.mxu0 0.0
        %1717 = vmatpush2.msra.mxu0 0.0
        %1718 = vmatprep.subr.mxu0 0.0
        %1719 = vmatpush2.msra.mxu0 0.0
        %1720 = vmatprep.subr.mxu0 0.0
        %1721 = vmatpush2.msra.mxu0 0.0
        %1722 = vmatprep.subr.mxu0 0.0
        %1723 = vmatpush2.msra.mxu0 0.0
        %1724 = vmatprep.subr.mxu0 0.0
        %1725 = vmatpush2.msra.mxu0 0.0
        %1726 = vmatprep.subr.mxu0 0.0
        %1727 = vmatpush2.msra.mxu0 0.0
        %1728 = vmatprep.subr.mxu0 0.0
        %1729 = vmatpush2.msra.mxu0 0.0
        %1730 = vmatprep.subr.mxu0 0.0
        %1731 = vmatpush2.msra.mxu0 0.0
        %1732 = vmatprep.subr.mxu0 0.0
        %1733 = vmatpush2.msra.mxu0 0.0
        %1734 = vmatprep.subr.mxu0 0.0
        %1735 = vmatpush2.msra.mxu0 0.0
        %1736 = vmatprep.subr.mxu0 0.0
        %1737 = vmatpush2.msra.mxu0 0.0
        %1738 = vmatprep.subr.mxu0 0.0
        %1739 = vmatpush2.msra.mxu0 0.0
        %1740 = vmatprep.subr.mxu0 0.0
        %1741 = vmatpush2.msra.mxu0 0.0
        %1742 = vmatprep.subr.mxu0 0.0
        %1743 = vmatpush2.msra.mxu0 0.0
        %1744 = vmatprep.subr.mxu0 0.0
        %1745 = vmatpush2.msra.mxu0 0.0
        %1746 = vmatprep.mubr.f32.mxu0 0.0
        %1747 = vmatmul.mubr.f32.gmra.mxu0 %v1677
        %v1748 = vpop.f32.mrf.mxu0
        %v1749 = vadd.f32 0.0, %v1748
        %v1750 = vpop.f32.mrf.mxu0
        %1751 = vmatprep.mubr.f32.mxu0 0.0
        %1752 = vmatmul.mubr.f32.gmra.mxu0 %v1680
        %v1753 = vpop.f32.mrf.mxu0
        %v1754 = vadd.f32 0.0, %v1753
        %v1755 = vpop.f32.mrf.mxu0
        %1756 = vdwg.mxu0
        %1757 = vrot.lane.b32.xlu0 %v1542, 64
        %v1758 = vpop.permute.xlu0 %1757
        %1759 = vrot.lane.b32.xlu0 %v1547, 64
        %v1760 = vpop.permute.xlu0 %1759
        %v1763 = vmul.f32 %v1749, %v1758
        %v1764 = vmul.f32 %v1754, %v1760
        %v1765 = vsel %vm605, %v1763, 0.0
        %vm1766 = vcmask 253952
        %v1767 = vsel %vm1766, %v1764, 0.0
        %v1768 = vadd.f32 %v1765, %v1767
        %v1769 = vrot.slane %v1768, 4
        %v1770 = vadd.f32 %v1768, %v1769
        %v1771 = vrot.slane %v1770, 2
        %v1772 = vadd.f32 %v1770, %v1771
        %v1773 = vrot.slane %v1772, 1
        %v1774 = vadd.f32 %v1772, %v1773
        %v1776 = vsel %vm605, %v1774, 0
        %1778 = vmatprep.subr.mxu0 0.0
        %1779 = vmatpush1.msra.mxu0 0.0
        %1780 = vmatprep.subr.mxu0 0.0
        %1781 = vmatpush1.msra.mxu0 0.0
        %1782 = vmatprep.subr.mxu0 0.0
        %1783 = vmatpush1.msra.mxu0 0.0
        %1784 = vmatprep.subr.mxu0 0.0
        %1785 = vmatpush1.msra.mxu0 0.0
        %1786 = vmatprep.subr.mxu0 0.0
        %1787 = vmatpush1.msra.mxu0 0.0
        %1788 = vmatprep.subr.mxu0 0.0
        %1789 = vmatpush1.msra.mxu0 0.0
        %1790 = vmatprep.subr.mxu0 0.0
        %1791 = vmatpush1.msra.mxu0 0.0
        %1792 = vmatprep.subr.mxu0 0.0
        %1793 = vmatpush1.msra.mxu0 0.0
        %1794 = vmatprep.subr.mxu0 0.0
        %1795 = vmatpush1.msra.mxu0 0.0
        %1796 = vmatprep.subr.mxu0 0.0
        %1797 = vmatpush1.msra.mxu0 0.0
        %1798 = vmatprep.subr.mxu0 0.0
        %1799 = vmatpush1.msra.mxu0 0.0
        %1800 = vmatprep.subr.mxu0 0.0
        %1801 = vmatpush1.msra.mxu0 0.0
        %1802 = vmatprep.subr.mxu0 0.0
        %1803 = vmatpush1.msra.mxu0 %v585
        %1804 = vmatprep.subr.mxu0 0.0
        %1805 = vmatpush1.msra.mxu0 %v584
        %1806 = vmatprep.subr.mxu0 0.0
        %1807 = vmatpush1.msra.mxu0 %v583
        %1808 = vmatprep.subr.mxu0 0.0
        %1809 = vmatpush1.msra.mxu0 %v582
        %1810 = vmatprep.subr.mxu0 0.0
        %1811 = vmatpush2.msra.mxu0 0.0
        %1812 = vmatprep.subr.mxu0 0.0
        %1813 = vmatpush2.msra.mxu0 0.0
        %1814 = vmatprep.subr.mxu0 0.0
        %1815 = vmatpush2.msra.mxu0 0.0
        %1816 = vmatprep.subr.mxu0 0.0
        %1817 = vmatpush2.msra.mxu0 0.0
        %1818 = vmatprep.subr.mxu0 0.0
        %1819 = vmatpush2.msra.mxu0 0.0
        %1820 = vmatprep.subr.mxu0 0.0
        %1821 = vmatpush2.msra.mxu0 0.0
        %1822 = vmatprep.subr.mxu0 0.0
        %1823 = vmatpush2.msra.mxu0 0.0
        %1824 = vmatprep.subr.mxu0 0.0
        %1825 = vmatpush2.msra.mxu0 0.0
        %1826 = vmatprep.subr.mxu0 0.0
        %1827 = vmatpush2.msra.mxu0 0.0
        %1828 = vmatprep.subr.mxu0 0.0
        %1829 = vmatpush2.msra.mxu0 0.0
        %1830 = vmatprep.subr.mxu0 0.0
        %1831 = vmatpush2.msra.mxu0 0.0
        %1832 = vmatprep.subr.mxu0 0.0
        %1833 = vmatpush2.msra.mxu0 0.0
        %1834 = vmatprep.subr.mxu0 0.0
        %1835 = vmatpush2.msra.mxu0 0.0
        %1836 = vmatprep.subr.mxu0 0.0
        %1837 = vmatpush2.msra.mxu0 0.0
        %1838 = vmatprep.subr.mxu0 0.0
        %1839 = vmatpush2.msra.mxu0 0.0
        %1840 = vmatprep.subr.mxu0 0.0
        %1841 = vmatpush2.msra.mxu0 0.0
        %1842 = vmatprep.mubr.f32.mxu0 0.0
        %1843 = vmatmul.mubr.f32.gmra.mxu0 %v1776
        %v1844 = vpop.f32.mrf.mxu0
        %v1845 = vadd.f32 %v589, %v1844
        %v1846 = vpop.f32.mrf.mxu0
        %1847 = vdwg.mxu0
        %v1848 = vmax.f32 %v1845, 0.0
        %v1849 = vsel %vm1766, %v1848, 0.0
        %1850 = vadd.xlane.f32.xlu0 %v1849
        %v1851 = vpop.xlane.xlu0 %1850
        %v1852 = vmul.f32 %v1851, %v1441
        %v1853 = vsub.f32 %v1848, %v1852
        %v1854 = vmul.f32 %v1853, %v1853
        %v1855 = vsel %vm1766, %v1854, 0.0
        %1856 = vadd.xlane.f32.xlu0 %v1855
        %v1857 = vpop.xlane.xlu0 %1856
        %v1858 = vmul.f32 %v1857, %v1441
        %v1859 = vadd.f32 %v1858, 1e-12
        %v1860 = vrsqrt.pop %v1859
        %v1861 = vmul.f32 %v1853, %v1860
        %v1862 = vmul.f32 %v592, %v1861
        %v1863 = vadd.f32 %v1862, %v593
        %v1865 = vsel %vm605, %v1863, 0
        %1867 = vmatprep.subr.mxu0 0.0
        %1868 = vmatpush1.msra.mxu0 0.0
        %1869 = vmatprep.subr.mxu0 0.0
        %1870 = vmatpush1.msra.mxu0 0.0
        %1871 = vmatprep.subr.mxu0 0.0
        %1872 = vmatpush1.msra.mxu0 0.0
        %1873 = vmatprep.subr.mxu0 0.0
        %1874 = vmatpush1.msra.mxu0 0.0
        %1875 = vmatprep.subr.mxu0 0.0
        %1876 = vmatpush1.msra.mxu0 0.0
        %1877 = vmatprep.subr.mxu0 0.0
        %1878 = vmatpush1.msra.mxu0 0.0
        %1879 = vmatprep.subr.mxu0 0.0
        %1880 = vmatpush1.msra.mxu0 0.0
        %1881 = vmatprep.subr.mxu0 0.0
        %1882 = vmatpush1.msra.mxu0 0.0
        %1883 = vmatprep.subr.mxu0 0.0
        %1884 = vmatpush1.msra.mxu0 0.0
        %1885 = vmatprep.subr.mxu0 0.0
        %1886 = vmatpush1.msra.mxu0 0.0
        %1887 = vmatprep.subr.mxu0 0.0
        %1888 = vmatpush1.msra.mxu0 0.0
        %1889 = vmatprep.subr.mxu0 0.0
        %1890 = vmatpush1.msra.mxu0 0.0
        %1891 = vmatprep.subr.mxu0 0.0
        %1892 = vmatpush1.msra.mxu0 %v573
        %1893 = vmatprep.subr.mxu0 0.0
        %1894 = vmatpush1.msra.mxu0 %v572
        %1895 = vmatprep.subr.mxu0 0.0
        %1896 = vmatpush1.msra.mxu0 %v571
        %1897 = vmatprep.subr.mxu0 0.0
        %1898 = vmatpush1.msra.mxu0 %v570
        %1899 = vmatprep.subr.mxu0 0.0
        %1900 = vmatpush2.msra.mxu0 0.0
        %1901 = vmatprep.subr.mxu0 0.0
        %1902 = vmatpush2.msra.mxu0 0.0
        %1903 = vmatprep.subr.mxu0 0.0
        %1904 = vmatpush2.msra.mxu0 0.0
        %1905 = vmatprep.subr.mxu0 0.0
        %1906 = vmatpush2.msra.mxu0 0.0
        %1907 = vmatprep.subr.mxu0 0.0
        %1908 = vmatpush2.msra.mxu0 0.0
        %1909 = vmatprep.subr.mxu0 0.0
        %1910 = vmatpush2.msra.mxu0 0.0
        %1911 = vmatprep.subr.mxu0 0.0
        %1912 = vmatpush2.msra.mxu0 0.0
        %1913 = vmatprep.subr.mxu0 0.0
        %1914 = vmatpush2.msra.mxu0 0.0
        %1915 = vmatprep.subr.mxu0 0.0
        %1916 = vmatpush2.msra.mxu0 0.0
        %1917 = vmatprep.subr.mxu0 0.0
        %1918 = vmatpush2.msra.mxu0 0.0
        %1919 = vmatprep.subr.mxu0 0.0
        %1920 = vmatpush2.msra.mxu0 0.0
        %1921 = vmatprep.subr.mxu0 0.0
        %1922 = vmatpush2.msra.mxu0 0.0
        %1923 = vmatprep.subr.mxu0 0.0
        %1924 = vmatpush2.msra.mxu0 0.0
        %1925 = vmatprep.subr.mxu0 0.0
        %1926 = vmatpush2.msra.mxu0 0.0
        %1927 = vmatprep.subr.mxu0 0.0
        %1928 = vmatpush2.msra.mxu0 0.0
        %1929 = vmatprep.subr.mxu0 0.0
        %1930 = vmatpush2.msra.mxu0 0.0
        %1931 = vmatprep.mubr.f32.mxu0 0.0
        %1932 = vmatmul.mubr.f32.gmra.mxu0 %v1473
        %v1933 = vpop.f32.mrf.mxu0
        %v1934 = vadd.f32 %v603, %v1933
        %v1935 = vpop.f32.mrf.mxu0
        %1936 = vmatprep.mubr.f32.mxu0 0.0
        %1937 = vmatmul.mubr.f32.gmra.mxu0 %v1865
        %v1938 = vpop.f32.mrf.mxu0
        %v1939 = vadd.f32 %v603, %v1938
        %v1940 = vpop.f32.mrf.mxu0
        %1941 = vdwg.mxu0
        %v1943 = vrot.slane %v1934, 1
        %v1945 = vrot.slane %v1934, 2
        %v1947 = vsel %vm692, %v1943, %v1945
        %1949 = vrot.lane.b32.xlu0 %v1947, 96
        %v1950 = vpop.permute.xlu0 %1949
        %v1952 = vmul.f32 %v1934, %v1950
        %v1954 = vsel %vm605, %v1952, 0
        %1956 = vmatprep.subr.mxu0 0.0
        %1957 = vmatpush1.msra.mxu0 0.0
        %1958 = vmatprep.subr.mxu0 0.0
        %1959 = vmatpush1.msra.mxu0 0.0
        %1960 = vmatprep.subr.mxu0 0.0
        %1961 = vmatpush1.msra.mxu0 0.0
        %1962 = vmatprep.subr.mxu0 0.0
        %1963 = vmatpush1.msra.mxu0 0.0
        %1964 = vmatprep.subr.mxu0 0.0
        %1965 = vmatpush1.msra.mxu0 0.0
        %1966 = vmatprep.subr.mxu0 0.0
        %1967 = vmatpush1.msra.mxu0 0.0
        %1968 = vmatprep.subr.mxu0 0.0
        %1969 = vmatpush1.msra.mxu0 0.0
        %1970 = vmatprep.subr.mxu0 0.0
        %1971 = vmatpush1.msra.mxu0 0.0
        %1972 = vmatprep.subr.mxu0 0.0
        %1973 = vmatpush1.msra.mxu0 0.0
        %1974 = vmatprep.subr.mxu0 0.0
        %1975 = vmatpush1.msra.mxu0 0.0
        %1976 = vmatprep.subr.mxu0 0.0
        %1977 = vmatpush1.msra.mxu0 0.0
        %1978 = vmatprep.subr.mxu0 0.0
        %1979 = vmatpush1.msra.mxu0 0.0
        %1980 = vmatprep.subr.mxu0 0.0
        %1981 = vmatpush1.msra.mxu0 %v597
        %1982 = vmatprep.subr.mxu0 0.0
        %1983 = vmatpush1.msra.mxu0 %v596
        %1984 = vmatprep.subr.mxu0 0.0
        %1985 = vmatpush1.msra.mxu0 %v595
        %1986 = vmatprep.subr.mxu0 0.0
        %1987 = vmatpush1.msra.mxu0 %v594
        %1988 = vmatprep.subr.mxu0 0.0
        %1989 = vmatpush2.msra.mxu0 0.0
        %1990 = vmatprep.subr.mxu0 0.0
        %1991 = vmatpush2.msra.mxu0 0.0
        %1992 = vmatprep.subr.mxu0 0.0
        %1993 = vmatpush2.msra.mxu0 0.0
        %1994 = vmatprep.subr.mxu0 0.0
        %1995 = vmatpush2.msra.mxu0 0.0
        %1996 = vmatprep.subr.mxu0 0.0
        %1997 = vmatpush2.msra.mxu0 0.0
        %1998 = vmatprep.subr.mxu0 0.0
        %1999 = vmatpush2.msra.mxu0 0.0
        %2000 = vmatprep.subr.mxu0 0.0
        %2001 = vmatpush2.msra.mxu0 0.0
        %2002 = vmatprep.subr.mxu0 0.0
        %2003 = vmatpush2.msra.mxu0 0.0
        %2004 = vmatprep.subr.mxu0 0.0
        %2005 = vmatpush2.msra.mxu0 0.0
        %2006 = vmatprep.subr.mxu0 0.0
        %2007 = vmatpush2.msra.mxu0 0.0
        %2008 = vmatprep.subr.mxu0 0.0
        %2009 = vmatpush2.msra.mxu0 0.0
        %2010 = vmatprep.subr.mxu0 0.0
        %2011 = vmatpush2.msra.mxu0 0.0
        %2012 = vmatprep.subr.mxu0 0.0
        %2013 = vmatpush2.msra.mxu0 0.0
        %2014 = vmatprep.subr.mxu0 0.0
        %2015 = vmatpush2.msra.mxu0 0.0
        %2016 = vmatprep.subr.mxu0 0.0
        %2017 = vmatpush2.msra.mxu0 0.0
        %2018 = vmatprep.subr.mxu0 0.0
        %2019 = vmatpush2.msra.mxu0 0.0
        %2020 = vmatprep.mubr.f32.mxu0 0.0
        %2021 = vmatmul.mubr.f32.gmra.mxu0 %v1954
        %v2022 = vpop.f32.mrf.mxu0
        %v2023 = vadd.f32 0.0, %v2022
        %v2024 = vpop.f32.mrf.mxu0
        %2025 = vdwg.mxu0
        %2026 = vrot.lane.b32.xlu0 %v1934, 96
        %v2027 = vpop.permute.xlu0 %2026
        %v2029 = vmul.f32 %v1934, %v2027
        %v2031 = vsel %vm605, %v2029, 0
        %2033 = vmatprep.subr.mxu0 0.0
        %2034 = vmatpush1.msra.mxu0 0.0
        %2035 = vmatprep.subr.mxu0 0.0
        %2036 = vmatpush1.msra.mxu0 0.0
        %2037 = vmatprep.subr.mxu0 0.0
        %2038 = vmatpush1.msra.mxu0 0.0
        %2039 = vmatprep.subr.mxu0 0.0
        %2040 = vmatpush1.msra.mxu0 0.0
        %2041 = vmatprep.subr.mxu0 0.0
        %2042 = vmatpush1.msra.mxu0 0.0
        %2043 = vmatprep.subr.mxu0 0.0
        %2044 = vmatpush1.msra.mxu0 0.0
        %2045 = vmatprep.subr.mxu0 0.0
        %2046 = vmatpush1.msra.mxu0 0.0
        %2047 = vmatprep.subr.mxu0 0.0
        %2048 = vmatpush1.msra.mxu0 0.0
        %2049 = vmatprep.subr.mxu0 0.0
        %2050 = vmatpush1.msra.mxu0 0.0
        %2051 = vmatprep.subr.mxu0 0.0
        %2052 = vmatpush1.msra.mxu0 0.0
        %2053 = vmatprep.subr.mxu0 0.0
        %2054 = vmatpush1.msra.mxu0 0.0
        %2055 = vmatprep.subr.mxu0 0.0
        %2056 = vmatpush1.msra.mxu0 0.0
        %2057 = vmatprep.subr.mxu0 0.0
        %2058 = vmatpush1.msra.mxu0 %v597
        %2059 = vmatprep.subr.mxu0 0.0
        %2060 = vmatpush1.msra.mxu0 %v596
        %2061 = vmatprep.subr.mxu0 0.0
        %2062 = vmatpush1.msra.mxu0 %v595
        %2063 = vmatprep.subr.mxu0 0.0
        %2064 = vmatpush1.msra.mxu0 %v594
        %2065 = vmatprep.subr.mxu0 0.0
        %2066 = vmatpush2.msra.mxu0 0.0
        %2067 = vmatprep.subr.mxu0 0.0
        %2068 = vmatpush2.msra.mxu0 0.0
        %2069 = vmatprep.subr.mxu0 0.0
        %2070 = vmatpush2.msra.mxu0 0.0
        %2071 = vmatprep.subr.mxu0 0.0
        %2072 = vmatpush2.msra.mxu0 0.0
        %2073 = vmatprep.subr.mxu0 0.0
        %2074 = vmatpush2.msra.mxu0 0.0
        %2075 = vmatprep.subr.mxu0 0.0
        %2076 = vmatpush2.msra.mxu0 0.0
        %2077 = vmatprep.subr.mxu0 0.0
        %2078 = vmatpush2.msra.mxu0 0.0
        %2079 = vmatprep.subr.mxu0 0.0
        %2080 = vmatpush2.msra.mxu0 0.0
        %2081 = vmatprep.subr.mxu0 0.0
        %2082 = vmatpush2.msra.mxu0 0.0
        %2083 = vmatprep.subr.mxu0 0.0
        %2084 = vmatpush2.msra.mxu0 0.0
        %2085 = vmatprep.subr.mxu0 0.0
        %2086 = vmatpush2.msra.mxu0 0.0
        %2087 = vmatprep.subr.mxu0 0.0
        %2088 = vmatpush2.msra.mxu0 0.0
        %2089 = vmatprep.subr.mxu0 0.0
        %2090 = vmatpush2.msra.mxu0 0.0
        %2091 = vmatprep.subr.mxu0 0.0
        %2092 = vmatpush2.msra.mxu0 0.0
        %2093 = vmatprep.subr.mxu0 0.0
        %2094 = vmatpush2.msra.mxu0 0.0
        %2095 = vmatprep.subr.mxu0 0.0
        %2096 = vmatpush2.msra.mxu0 0.0
        %2097 = vmatprep.mubr.f32.mxu0 0.0
        %2098 = vmatmul.mubr.f32.gmra.mxu0 %v2031
        %v2099 = vpop.f32.mrf.mxu0
        %v2100 = vadd.f32 0.0, %v2099
        %v2101 = vpop.f32.mrf.mxu0
        %2102 = vdwg.mxu0
        %v2103 = vlaneseq
        %v2104 = vshrl.u32 %v2103, 7
        %v2105 = vsub.s32 0, %v2104
        %v2106 = vrot.slane %v1934, %v2105
        %2108 = vrot.lane.b32.xlu0 %v2106, 96
        %v2109 = vpop.permute.xlu0 %2108
        %v2111 = vmul.f32 %v1934, %v2109
        %v2113 = vsel %vm605, %v2111, 0
        %2115 = vmatprep.subr.mxu0 0.0
        %2116 = vmatpush1.msra.mxu0 0.0
        %2117 = vmatprep.subr.mxu0 0.0
        %2118 = vmatpush1.msra.mxu0 0.0
        %2119 = vmatprep.subr.mxu0 0.0
        %2120 = vmatpush1.msra.mxu0 0.0
        %2121 = vmatprep.subr.mxu0 0.0
        %2122 = vmatpush1.msra.mxu0 0.0
        %2123 = vmatprep.subr.mxu0 0.0
        %2124 = vmatpush1.msra.mxu0 0.0
        %2125 = vmatprep.subr.mxu0 0.0
        %2126 = vmatpush1.msra.mxu0 0.0
        %2127 = vmatprep.subr.mxu0 0.0
        %2128 = vmatpush1.msra.mxu0 0.0
        %2129 = vmatprep.subr.mxu0 0.0
        %2130 = vmatpush1.msra.mxu0 0.0
        %2131 = vmatprep.subr.mxu0 0.0
        %2132 = vmatpush1.msra.mxu0 0.0
        %2133 = vmatprep.subr.mxu0 0.0
        %2134 = vmatpush1.msra.mxu0 0.0
        %2135 = vmatprep.subr.mxu0 0.0
        %2136 = vmatpush1.msra.mxu0 0.0
        %2137 = vmatprep.subr.mxu0 0.0
        %2138 = vmatpush1.msra.mxu0 0.0
        %2139 = vmatprep.subr.mxu0 0.0
        %2140 = vmatpush1.msra.mxu0 %v597
        %2141 = vmatprep.subr.mxu0 0.0
        %2142 = vmatpush1.msra.mxu0 %v596
        %2143 = vmatprep.subr.mxu0 0.0
        %2144 = vmatpush1.msra.mxu0 %v595
        %2145 = vmatprep.subr.mxu0 0.0
        %2146 = vmatpush1.msra.mxu0 %v594
        %2147 = vmatprep.subr.mxu0 0.0
        %2148 = vmatpush2.msra.mxu0 0.0
        %2149 = vmatprep.subr.mxu0 0.0
        %2150 = vmatpush2.msra.mxu0 0.0
        %2151 = vmatprep.subr.mxu0 0.0
        %2152 = vmatpush2.msra.mxu0 0.0
        %2153 = vmatprep.subr.mxu0 0.0
        %2154 = vmatpush2.msra.mxu0 0.0
        %2155 = vmatprep.subr.mxu0 0.0
        %2156 = vmatpush2.msra.mxu0 0.0
        %2157 = vmatprep.subr.mxu0 0.0
        %2158 = vmatpush2.msra.mxu0 0.0
        %2159 = vmatprep.subr.mxu0 0.0
        %2160 = vmatpush2.msra.mxu0 0.0
        %2161 = vmatprep.subr.mxu0 0.0
        %2162 = vmatpush2.msra.mxu0 0.0
        %2163 = vmatprep.subr.mxu0 0.0
        %2164 = vmatpush2.msra.mxu0 0.0
        %2165 = vmatprep.subr.mxu0 0.0
        %2166 = vmatpush2.msra.mxu0 0.0
        %2167 = vmatprep.subr.mxu0 0.0
        %2168 = vmatpush2.msra.mxu0 0.0
        %2169 = vmatprep.subr.mxu0 0.0
        %2170 = vmatpush2.msra.mxu0 0.0
        %2171 = vmatprep.subr.mxu0 0.0
        %2172 = vmatpush2.msra.mxu0 0.0
        %2173 = vmatprep.subr.mxu0 0.0
        %2174 = vmatpush2.msra.mxu0 0.0
        %2175 = vmatprep.subr.mxu0 0.0
        %2176 = vmatpush2.msra.mxu0 0.0
        %2177 = vmatprep.subr.mxu0 0.0
        %2178 = vmatpush2.msra.mxu0 0.0
        %2179 = vmatprep.mubr.f32.mxu0 0.0
        %2180 = vmatmul.mubr.f32.gmra.mxu0 %v2113
        %v2181 = vpop.f32.mrf.mxu0
        %v2182 = vadd.f32 0.0, %v2181
        %v2183 = vpop.f32.mrf.mxu0
        %2184 = vdwg.mxu0
        %v2185 = vmul.f32 %v1934, %v773
        %v2187 = vsel %vm605, %v2185, 0
        %2189 = vmatprep.subr.mxu0 0.0
        %2190 = vmatpush1.msra.mxu0 0.0
        %2191 = vmatprep.subr.mxu0 0.0
        %2192 = vmatpush1.msra.mxu0 0.0
        %2193 = vmatprep.subr.mxu0 0.0
        %2194 = vmatpush1.msra.mxu0 0.0
        %2195 = vmatprep.subr.mxu0 0.0
        %2196 = vmatpush1.msra.mxu0 0.0
        %2197 = vmatprep.subr.mxu0 0.0
        %2198 = vmatpush1.msra.mxu0 0.0
        %2199 = vmatprep.subr.mxu0 0.0
        %2200 = vmatpush1.msra.mxu0 0.0
        %2201 = vmatprep.subr.mxu0 0.0
        %2202 = vmatpush1.msra.mxu0 0.0
        %2203 = vmatprep.subr.mxu0 0.0
        %2204 = vmatpush1.msra.mxu0 0.0
        %2205 = vmatprep.subr.mxu0 0.0
        %2206 = vmatpush1.msra.mxu0 0.0
        %2207 = vmatprep.subr.mxu0 0.0
        %2208 = vmatpush1.msra.mxu0 0.0
        %2209 = vmatprep.subr.mxu0 0.0
        %2210 = vmatpush1.msra.mxu0 0.0
        %2211 = vmatprep.subr.mxu0 0.0
        %2212 = vmatpush1.msra.mxu0 0.0
        %2213 = vmatprep.subr.mxu0 0.0
        %2214 = vmatpush1.msra.mxu0 %v597
        %2215 = vmatprep.subr.mxu0 0.0
        %2216 = vmatpush1.msra.mxu0 %v596
        %2217 = vmatprep.subr.mxu0 0.0
        %2218 = vmatpush1.msra.mxu0 %v595
        %2219 = vmatprep.subr.mxu0 0.0
        %2220 = vmatpush1.msra.mxu0 %v594
        %2221 = vmatprep.subr.mxu0 0.0
        %2222 = vmatpush2.msra.mxu0 0.0
        %2223 = vmatprep.subr.mxu0 0.0
        %2224 = vmatpush2.msra.mxu0 0.0
        %2225 = vmatprep.subr.mxu0 0.0
        %2226 = vmatpush2.msra.mxu0 0.0
        %2227 = vmatprep.subr.mxu0 0.0
        %2228 = vmatpush2.msra.mxu0 0.0
        %2229 = vmatprep.subr.mxu0 0.0
        %2230 = vmatpush2.msra.mxu0 0.0
        %2231 = vmatprep.subr.mxu0 0.0
        %2232 = vmatpush2.msra.mxu0 0.0
        %2233 = vmatprep.subr.mxu0 0.0
        %2234 = vmatpush2.msra.mxu0 0.0
        %2235 = vmatprep.subr.mxu0 0.0
        %2236 = vmatpush2.msra.mxu0 0.0
        %2237 = vmatprep.subr.mxu0 0.0
        %2238 = vmatpush2.msra.mxu0 0.0
        %2239 = vmatprep.subr.mxu0 0.0
        %2240 = vmatpush2.msra.mxu0 0.0
        %2241 = vmatprep.subr.mxu0 0.0
        %2242 = vmatpush2.msra.mxu0 0.0
        %2243 = vmatprep.subr.mxu0 0.0
        %2244 = vmatpush2.msra.mxu0 0.0
        %2245 = vmatprep.subr.mxu0 0.0
        %2246 = vmatpush2.msra.mxu0 0.0
        %2247 = vmatprep.subr.mxu0 0.0
        %2248 = vmatpush2.msra.mxu0 0.0
        %2249 = vmatprep.subr.mxu0 0.0
        %2250 = vmatpush2.msra.mxu0 0.0
        %2251 = vmatprep.subr.mxu0 0.0
        %2252 = vmatpush2.msra.mxu0 0.0
        %2253 = vmatprep.mubr.f32.mxu0 0.0
        %2254 = vmatmul.mubr.f32.gmra.mxu0 %v2187
        %v2255 = vpop.f32.mrf.mxu0
        %v2256 = vadd.f32 0.0, %v2255
        %v2257 = vpop.f32.mrf.mxu0
        %2258 = vdwg.mxu0
        %v2259 = vlaneseq
        %v2260 = vshrl.u32 %v2259, 7
        %v2261 = vsub.s32 0, %v2260
        %v2262 = vrot.slane %v1939, %v2261
        %2264 = vrot.lane.b32.xlu0 %v2262, 96
        %v2265 = vpop.permute.xlu0 %2264
        %v2267 = vmul.f32 %v1934, %v2265
        %v2269 = vsel %vm605, %v2267, 0
        %2271 = vmatprep.subr.mxu0 0.0
        %2272 = vmatpush1.msra.mxu0 0.0
        %2273 = vmatprep.subr.mxu0 0.0
        %2274 = vmatpush1.msra.mxu0 0.0
        %2275 = vmatprep.subr.mxu0 0.0
        %2276 = vmatpush1.msra.mxu0 0.0
        %2277 = vmatprep.subr.mxu0 0.0
        %2278 = vmatpush1.msra.mxu0 0.0
        %2279 = vmatprep.subr.mxu0 0.0
        %2280 = vmatpush1.msra.mxu0 0.0
        %2281 = vmatprep.subr.mxu0 0.0
        %2282 = vmatpush1.msra.mxu0 0.0
        %2283 = vmatprep.subr.mxu0 0.0
        %2284 = vmatpush1.msra.mxu0 0.0
        %2285 = vmatprep.subr.mxu0 0.0
        %2286 = vmatpush1.msra.mxu0 0.0
        %2287 = vmatprep.subr.mxu0 0.0
        %2288 = vmatpush1.msra.mxu0 0.0
        %2289 = vmatprep.subr.mxu0 0.0
        %2290 = vmatpush1.msra.mxu0 0.0
        %2291 = vmatprep.subr.mxu0 0.0
        %2292 = vmatpush1.msra.mxu0 0.0
        %2293 = vmatprep.subr.mxu0 0.0
        %2294 = vmatpush1.msra.mxu0 0.0
        %2295 = vmatprep.subr.mxu0 0.0
        %2296 = vmatpush1.msra.mxu0 %v597
        %2297 = vmatprep.subr.mxu0 0.0
        %2298 = vmatpush1.msra.mxu0 %v596
        %2299 = vmatprep.subr.mxu0 0.0
        %2300 = vmatpush1.msra.mxu0 %v595
        %2301 = vmatprep.subr.mxu0 0.0
        %2302 = vmatpush1.msra.mxu0 %v594
        %2303 = vmatprep.subr.mxu0 0.0
        %2304 = vmatpush2.msra.mxu0 0.0
        %2305 = vmatprep.subr.mxu0 0.0
        %2306 = vmatpush2.msra.mxu0 0.0
        %2307 = vmatprep.subr.mxu0 0.0
        %2308 = vmatpush2.msra.mxu0 0.0
        %2309 = vmatprep.subr.mxu0 0.0
        %2310 = vmatpush2.msra.mxu0 0.0
        %2311 = vmatprep.subr.mxu0 0.0
        %2312 = vmatpush2.msra.mxu0 0.0
        %2313 = vmatprep.subr.mxu0 0.0
        %2314 = vmatpush2.msra.mxu0 0.0
        %2315 = vmatprep.subr.mxu0 0.0
        %2316 = vmatpush2.msra.mxu0 0.0
        %2317 = vmatprep.subr.mxu0 0.0
        %2318 = vmatpush2.msra.mxu0 0.0
        %2319 = vmatprep.subr.mxu0 0.0
        %2320 = vmatpush2.msra.mxu0 0.0
        %2321 = vmatprep.subr.mxu0 0.0
        %2322 = vmatpush2.msra.mxu0 0.0
        %2323 = vmatprep.subr.mxu0 0.0
        %2324 = vmatpush2.msra.mxu0 0.0
        %2325 = vmatprep.subr.mxu0 0.0
        %2326 = vmatpush2.msra.mxu0 0.0
        %2327 = vmatprep.subr.mxu0 0.0
        %2328 = vmatpush2.msra.mxu0 0.0
        %2329 = vmatprep.subr.mxu0 0.0
        %2330 = vmatpush2.msra.mxu0 0.0
        %2331 = vmatprep.subr.mxu0 0.0
        %2332 = vmatpush2.msra.mxu0 0.0
        %2333 = vmatprep.subr.mxu0 0.0
        %2334 = vmatpush2.msra.mxu0 0.0
        %2335 = vmatprep.mubr.f32.mxu0 0.0
        %2336 = vmatmul.mubr.f32.gmra.mxu0 %v2269
        %v2337 = vpop.f32.mrf.mxu0
        %v2338 = vadd.f32 0.0, %v2337
        %v2339 = vpop.f32.mrf.mxu0
        %2340 = vdwg.mxu0
        %v2341 = vmax.f32 %v2023, %v2100
        %v2342 = vmax.f32 %v2182, %v2256
        %v2343 = vmax.f32 %v2341, %v2342
        %v2344 = vmax.f32 %v2343, %v2338
        %v2345 = vsub.f32 %v2023, %v2344
        %v2346 = vmul.f32 %v2345, 1.442695
        %v2347 = vpow.pop %v2346
        %v2348 = vsub.f32 %v2100, %v2344
        %v2349 = vmul.f32 %v2348, 1.442695
        %v2350 = vpow.pop %v2349
        %v2351 = vsub.f32 %v2182, %v2344
        %v2352 = vmul.f32 %v2351, 1.442695
        %v2353 = vpow.pop %v2352
        %v2354 = vsub.f32 %v2256, %v2344
        %v2355 = vmul.f32 %v2354, 1.442695
        %v2356 = vpow.pop %v2355
        %v2357 = vsub.f32 %v2338, %v2344
        %v2358 = vmul.f32 %v2357, 1.442695
        %v2359 = vpow.pop %v2358
        %v2360 = vadd.f32 %v2347, %v2350
        %v2361 = vadd.f32 %v2360, %v2353
        %v2362 = vadd.f32 %v2361, %v2356
        %v2363 = vadd.f32 %v2362, %v2359
        %v2364 = vrcp.pop %v2363
        %v2365 = vmul.f32 %v2363, %v2364
        %v2366 = vsub.f32 2.0, %v2365
        %v2367 = vmul.f32 %v2364, %v2366
        %v2368 = vmul.f32 %v2347, %v2367
        %v2370 = vsel %vm1038, %v2368, 0
        %2372 = vmatprep.subr.mxu0 0.0
        %2373 = vmatpush1.msra.mxu0 0.0
        %2374 = vmatprep.subr.mxu0 0.0
        %2375 = vmatpush1.msra.mxu0 0.0
        %2376 = vmatprep.subr.mxu0 0.0
        %2377 = vmatpush1.msra.mxu0 0.0
        %2378 = vmatprep.subr.mxu0 0.0
        %2379 = vmatpush1.msra.mxu0 0.0
        %2380 = vmatprep.subr.mxu0 0.0
        %2381 = vmatpush1.msra.mxu0 0.0
        %2382 = vmatprep.subr.mxu0 0.0
        %2383 = vmatpush1.msra.mxu0 0.0
        %2384 = vmatprep.subr.mxu0 0.0
        %2385 = vmatpush1.msra.mxu0 0.0
        %2386 = vmatprep.subr.mxu0 0.0
        %2387 = vmatpush1.msra.mxu0 0.0
        %2388 = vmatprep.subr.mxu0 0.0
        %2389 = vmatpush1.msra.mxu0 0.0
        %2390 = vmatprep.subr.mxu0 0.0
        %2391 = vmatpush1.msra.mxu0 0.0
        %2392 = vmatprep.subr.mxu0 0.0
        %2393 = vmatpush1.msra.mxu0 0.0
        %2394 = vmatprep.subr.mxu0 0.0
        %2395 = vmatpush1.msra.mxu0 0.0
        %2396 = vmatprep.subr.mxu0 0.0
        %2397 = vmatpush1.msra.mxu0 0.0
        %2398 = vmatprep.subr.mxu0 0.0
        %2399 = vmatpush1.msra.mxu0 0.0
        %2400 = vmatprep.subr.mxu0 0.0
        %2401 = vmatpush1.msra.mxu0 0.0
        %2402 = vmatprep.subr.mxu0 0.0
        %2403 = vmatpush1.msra.mxu0 %v1044
        %2404 = vmatprep.subr.mxu0 0.0
        %2405 = vmatpush2.msra.mxu0 0.0
        %2406 = vmatprep.subr.mxu0 0.0
        %2407 = vmatpush2.msra.mxu0 0.0
        %2408 = vmatprep.subr.mxu0 0.0
        %2409 = vmatpush2.msra.mxu0 0.0
        %2410 = vmatprep.subr.mxu0 0.0
        %2411 = vmatpush2.msra.mxu0 0.0
        %2412 = vmatprep.subr.mxu0 0.0
        %2413 = vmatpush2.msra.mxu0 0.0
        %2414 = vmatprep.subr.mxu0 0.0
        %2415 = vmatpush2.msra.mxu0 0.0
        %2416 = vmatprep.subr.mxu0 0.0
        %2417 = vmatpush2.msra.mxu0 0.0
        %2418 = vmatprep.subr.mxu0 0.0
        %2419 = vmatpush2.msra.mxu0 0.0
        %2420 = vmatprep.subr.mxu0 0.0
        %2421 = vmatpush2.msra.mxu0 0.0
        %2422 = vmatprep.subr.mxu0 0.0
        %2423 = vmatpush2.msra.mxu0 0.0
        %2424 = vmatprep.subr.mxu0 0.0
        %2425 = vmatpush2.msra.mxu0 0.0
        %2426 = vmatprep.subr.mxu0 0.0
        %2427 = vmatpush2.msra.mxu0 0.0
        %2428 = vmatprep.subr.mxu0 0.0
        %2429 = vmatpush2.msra.mxu0 0.0
        %2430 = vmatprep.subr.mxu0 0.0
        %2431 = vmatpush2.msra.mxu0 0.0
        %2432 = vmatprep.subr.mxu0 0.0
        %2433 = vmatpush2.msra.mxu0 0.0
        %2434 = vmatprep.subr.mxu0 0.0
        %2435 = vmatpush2.msra.mxu0 0.0
        %2436 = vmatprep.mubr.f32.mxu0 0.0
        %2437 = vmatmul.mubr.f32.gmra.mxu0 %v2370
        %v2438 = vpop.f32.mrf.mxu0
        %v2439 = vadd.f32 0.0, %v2438
        %v2440 = vpop.f32.mrf.mxu0
        %2441 = vdwg.mxu0
        %2442 = vrot.lane.b32.xlu0 %v1947, 64
        %v2443 = vpop.permute.xlu0 %2442
        %v2445 = vmul.f32 %v2439, %v2443
        %v2446 = vmul.f32 %v2350, %v2367
        %v2448 = vsel %vm1038, %v2446, 0
        %2450 = vmatprep.subr.mxu0 0.0
        %2451 = vmatpush1.msra.mxu0 0.0
        %2452 = vmatprep.subr.mxu0 0.0
        %2453 = vmatpush1.msra.mxu0 0.0
        %2454 = vmatprep.subr.mxu0 0.0
        %2455 = vmatpush1.msra.mxu0 0.0
        %2456 = vmatprep.subr.mxu0 0.0
        %2457 = vmatpush1.msra.mxu0 0.0
        %2458 = vmatprep.subr.mxu0 0.0
        %2459 = vmatpush1.msra.mxu0 0.0
        %2460 = vmatprep.subr.mxu0 0.0
        %2461 = vmatpush1.msra.mxu0 0.0
        %2462 = vmatprep.subr.mxu0 0.0
        %2463 = vmatpush1.msra.mxu0 0.0
        %2464 = vmatprep.subr.mxu0 0.0
        %2465 = vmatpush1.msra.mxu0 0.0
        %2466 = vmatprep.subr.mxu0 0.0
        %2467 = vmatpush1.msra.mxu0 0.0
        %2468 = vmatprep.subr.mxu0 0.0
        %2469 = vmatpush1.msra.mxu0 0.0
        %2470 = vmatprep.subr.mxu0 0.0
        %2471 = vmatpush1.msra.mxu0 0.0
        %2472 = vmatprep.subr.mxu0 0.0
        %2473 = vmatpush1.msra.mxu0 0.0
        %2474 = vmatprep.subr.mxu0 0.0
        %2475 = vmatpush1.msra.mxu0 0.0
        %2476 = vmatprep.subr.mxu0 0.0
        %2477 = vmatpush1.msra.mxu0 0.0
        %2478 = vmatprep.subr.mxu0 0.0
        %2479 = vmatpush1.msra.mxu0 0.0
        %2480 = vmatprep.subr.mxu0 0.0
        %2481 = vmatpush1.msra.mxu0 %v1044
        %2482 = vmatprep.subr.mxu0 0.0
        %2483 = vmatpush2.msra.mxu0 0.0
        %2484 = vmatprep.subr.mxu0 0.0
        %2485 = vmatpush2.msra.mxu0 0.0
        %2486 = vmatprep.subr.mxu0 0.0
        %2487 = vmatpush2.msra.mxu0 0.0
        %2488 = vmatprep.subr.mxu0 0.0
        %2489 = vmatpush2.msra.mxu0 0.0
        %2490 = vmatprep.subr.mxu0 0.0
        %2491 = vmatpush2.msra.mxu0 0.0
        %2492 = vmatprep.subr.mxu0 0.0
        %2493 = vmatpush2.msra.mxu0 0.0
        %2494 = vmatprep.subr.mxu0 0.0
        %2495 = vmatpush2.msra.mxu0 0.0
        %2496 = vmatprep.subr.mxu0 0.0
        %2497 = vmatpush2.msra.mxu0 0.0
        %2498 = vmatprep.subr.mxu0 0.0
        %2499 = vmatpush2.msra.mxu0 0.0
        %2500 = vmatprep.subr.mxu0 0.0
        %2501 = vmatpush2.msra.mxu0 0.0
        %2502 = vmatprep.subr.mxu0 0.0
        %2503 = vmatpush2.msra.mxu0 0.0
        %2504 = vmatprep.subr.mxu0 0.0
        %2505 = vmatpush2.msra.mxu0 0.0
        %2506 = vmatprep.subr.mxu0 0.0
        %2507 = vmatpush2.msra.mxu0 0.0
        %2508 = vmatprep.subr.mxu0 0.0
        %2509 = vmatpush2.msra.mxu0 0.0
        %2510 = vmatprep.subr.mxu0 0.0
        %2511 = vmatpush2.msra.mxu0 0.0
        %2512 = vmatprep.subr.mxu0 0.0
        %2513 = vmatpush2.msra.mxu0 0.0
        %2514 = vmatprep.mubr.f32.mxu0 0.0
        %2515 = vmatmul.mubr.f32.gmra.mxu0 %v2448
        %v2516 = vpop.f32.mrf.mxu0
        %v2517 = vadd.f32 0.0, %v2516
        %v2518 = vpop.f32.mrf.mxu0
        %2519 = vdwg.mxu0
        %2520 = vrot.lane.b32.xlu0 %v1934, 64
        %v2521 = vpop.permute.xlu0 %2520
        %v2523 = vmul.f32 %v2517, %v2521
        %v2524 = vadd.f32 %v2445, %v2523
        %v2525 = vmul.f32 %v2353, %v2367
        %v2527 = vsel %vm1038, %v2525, 0
        %2529 = vmatprep.subr.mxu0 0.0
        %2530 = vmatpush1.msra.mxu0 0.0
        %2531 = vmatprep.subr.mxu0 0.0
        %2532 = vmatpush1.msra.mxu0 0.0
        %2533 = vmatprep.subr.mxu0 0.0
        %2534 = vmatpush1.msra.mxu0 0.0
        %2535 = vmatprep.subr.mxu0 0.0
        %2536 = vmatpush1.msra.mxu0 0.0
        %2537 = vmatprep.subr.mxu0 0.0
        %2538 = vmatpush1.msra.mxu0 0.0
        %2539 = vmatprep.subr.mxu0 0.0
        %2540 = vmatpush1.msra.mxu0 0.0
        %2541 = vmatprep.subr.mxu0 0.0
        %2542 = vmatpush1.msra.mxu0 0.0
        %2543 = vmatprep.subr.mxu0 0.0
        %2544 = vmatpush1.msra.mxu0 0.0
        %2545 = vmatprep.subr.mxu0 0.0
        %2546 = vmatpush1.msra.mxu0 0.0
        %2547 = vmatprep.subr.mxu0 0.0
        %2548 = vmatpush1.msra.mxu0 0.0
        %2549 = vmatprep.subr.mxu0 0.0
        %2550 = vmatpush1.msra.mxu0 0.0
        %2551 = vmatprep.subr.mxu0 0.0
        %2552 = vmatpush1.msra.mxu0 0.0
        %2553 = vmatprep.subr.mxu0 0.0
        %2554 = vmatpush1.msra.mxu0 0.0
        %2555 = vmatprep.subr.mxu0 0.0
        %2556 = vmatpush1.msra.mxu0 0.0
        %2557 = vmatprep.subr.mxu0 0.0
        %2558 = vmatpush1.msra.mxu0 0.0
        %2559 = vmatprep.subr.mxu0 0.0
        %2560 = vmatpush1.msra.mxu0 %v1044
        %2561 = vmatprep.subr.mxu0 0.0
        %2562 = vmatpush2.msra.mxu0 0.0
        %2563 = vmatprep.subr.mxu0 0.0
        %2564 = vmatpush2.msra.mxu0 0.0
        %2565 = vmatprep.subr.mxu0 0.0
        %2566 = vmatpush2.msra.mxu0 0.0
        %2567 = vmatprep.subr.mxu0 0.0
        %2568 = vmatpush2.msra.mxu0 0.0
        %2569 = vmatprep.subr.mxu0 0.0
        %2570 = vmatpush2.msra.mxu0 0.0
        %2571 = vmatprep.subr.mxu0 0.0
        %2572 = vmatpush2.msra.mxu0 0.0
        %2573 = vmatprep.subr.mxu0 0.0
        %2574 = vmatpush2.msra.mxu0 0.0
        %2575 = vmatprep.subr.mxu0 0.0
        %2576 = vmatpush2.msra.mxu0 0.0
        %2577 = vmatprep.subr.mxu0 0.0
        %2578 = vmatpush2.msra.mxu0 0.0
        %2579 = vmatprep.subr.mxu0 0.0
        %2580 = vmatpush2.msra.mxu0 0.0
        %2581 = vmatprep.subr.mxu0 0.0
        %2582 = vmatpush2.msra.mxu0 0.0
        %2583 = vmatprep.subr.mxu0 0.0
        %2584 = vmatpush2.msra.mxu0 0.0
        %2585 = vmatprep.subr.mxu0 0.0
        %2586 = vmatpush2.msra.mxu0 0.0
        %2587 = vmatprep.subr.mxu0 0.0
        %2588 = vmatpush2.msra.mxu0 0.0
        %2589 = vmatprep.subr.mxu0 0.0
        %2590 = vmatpush2.msra.mxu0 0.0
        %2591 = vmatprep.subr.mxu0 0.0
        %2592 = vmatpush2.msra.mxu0 0.0
        %2593 = vmatprep.mubr.f32.mxu0 0.0
        %2594 = vmatmul.mubr.f32.gmra.mxu0 %v2527
        %v2595 = vpop.f32.mrf.mxu0
        %v2596 = vadd.f32 0.0, %v2595
        %v2597 = vpop.f32.mrf.mxu0
        %2598 = vdwg.mxu0
        %2599 = vrot.lane.b32.xlu0 %v2106, 64
        %v2600 = vpop.permute.xlu0 %2599
        %v2602 = vmul.f32 %v2596, %v2600
        %v2603 = vadd.f32 %v2524, %v2602
        %v2604 = vmul.f32 %v2356, %v2367
        %v2606 = vsel %vm1038, %v2604, 0
        %2608 = vmatprep.subr.mxu0 0.0
        %2609 = vmatpush1.msra.mxu0 0.0
        %2610 = vmatprep.subr.mxu0 0.0
        %2611 = vmatpush1.msra.mxu0 0.0
        %2612 = vmatprep.subr.mxu0 0.0
        %2613 = vmatpush1.msra.mxu0 0.0
        %2614 = vmatprep.subr.mxu0 0.0
        %2615 = vmatpush1.msra.mxu0 0.0
        %2616 = vmatprep.subr.mxu0 0.0
        %2617 = vmatpush1.msra.mxu0 0.0
        %2618 = vmatprep.subr.mxu0 0.0
        %2619 = vmatpush1.msra.mxu0 0.0
        %2620 = vmatprep.subr.mxu0 0.0
        %2621 = vmatpush1.msra.mxu0 0.0
        %2622 = vmatprep.subr.mxu0 0.0
        %2623 = vmatpush1.msra.mxu0 0.0
        %2624 = vmatprep.subr.mxu0 0.0
        %2625 = vmatpush1.msra.mxu0 0.0
        %2626 = vmatprep.subr.mxu0 0.0
        %2627 = vmatpush1.msra.mxu0 0.0
        %2628 = vmatprep.subr.mxu0 0.0
        %2629 = vmatpush1.msra.mxu0 0.0
        %2630 = vmatprep.subr.mxu0 0.0
        %2631 = vmatpush1.msra.mxu0 0.0
        %2632 = vmatprep.subr.mxu0 0.0
        %2633 = vmatpush1.msra.mxu0 0.0
        %2634 = vmatprep.subr.mxu0 0.0
        %2635 = vmatpush1.msra.mxu0 0.0
        %2636 = vmatprep.subr.mxu0 0.0
        %2637 = vmatpush1.msra.mxu0 0.0
        %2638 = vmatprep.subr.mxu0 0.0
        %2639 = vmatpush1.msra.mxu0 %v1044
        %2640 = vmatprep.subr.mxu0 0.0
        %2641 = vmatpush2.msra.mxu0 0.0
        %2642 = vmatprep.subr.mxu0 0.0
        %2643 = vmatpush2.msra.mxu0 0.0
        %2644 = vmatprep.subr.mxu0 0.0
        %2645 = vmatpush2.msra.mxu0 0.0
        %2646 = vmatprep.subr.mxu0 0.0
        %2647 = vmatpush2.msra.mxu0 0.0
        %2648 = vmatprep.subr.mxu0 0.0
        %2649 = vmatpush2.msra.mxu0 0.0
        %2650 = vmatprep.subr.mxu0 0.0
        %2651 = vmatpush2.msra.mxu0 0.0
        %2652 = vmatprep.subr.mxu0 0.0
        %2653 = vmatpush2.msra.mxu0 0.0
        %2654 = vmatprep.subr.mxu0 0.0
        %2655 = vmatpush2.msra.mxu0 0.0
        %2656 = vmatprep.subr.mxu0 0.0
        %2657 = vmatpush2.msra.mxu0 0.0
        %2658 = vmatprep.subr.mxu0 0.0
        %2659 = vmatpush2.msra.mxu0 0.0
        %2660 = vmatprep.subr.mxu0 0.0
        %2661 = vmatpush2.msra.mxu0 0.0
        %2662 = vmatprep.subr.mxu0 0.0
        %2663 = vmatpush2.msra.mxu0 0.0
        %2664 = vmatprep.subr.mxu0 0.0
        %2665 = vmatpush2.msra.mxu0 0.0
        %2666 = vmatprep.subr.mxu0 0.0
        %2667 = vmatpush2.msra.mxu0 0.0
        %2668 = vmatprep.subr.mxu0 0.0
        %2669 = vmatpush2.msra.mxu0 0.0
        %2670 = vmatprep.subr.mxu0 0.0
        %2671 = vmatpush2.msra.mxu0 0.0
        %2672 = vmatprep.mubr.f32.mxu0 0.0
        %2673 = vmatmul.mubr.f32.gmra.mxu0 %v2606
        %v2674 = vpop.f32.mrf.mxu0
        %v2675 = vadd.f32 0.0, %v2674
        %v2676 = vpop.f32.mrf.mxu0
        %2677 = vdwg.mxu0
        %v2678 = vmul.f32 %v2675, %v1195
        %v2679 = vadd.f32 %v2603, %v2678
        %v2680 = vmul.f32 %v2359, %v2367
        %v2682 = vsel %vm1038, %v2680, 0
        %2684 = vmatprep.subr.mxu0 0.0
        %2685 = vmatpush1.msra.mxu0 0.0
        %2686 = vmatprep.subr.mxu0 0.0
        %2687 = vmatpush1.msra.mxu0 0.0
        %2688 = vmatprep.subr.mxu0 0.0
        %2689 = vmatpush1.msra.mxu0 0.0
        %2690 = vmatprep.subr.mxu0 0.0
        %2691 = vmatpush1.msra.mxu0 0.0
        %2692 = vmatprep.subr.mxu0 0.0
        %2693 = vmatpush1.msra.mxu0 0.0
        %2694 = vmatprep.subr.mxu0 0.0
        %2695 = vmatpush1.msra.mxu0 0.0
        %2696 = vmatprep.subr.mxu0 0.0
        %2697 = vmatpush1.msra.mxu0 0.0
        %2698 = vmatprep.subr.mxu0 0.0
        %2699 = vmatpush1.msra.mxu0 0.0
        %2700 = vmatprep.subr.mxu0 0.0
        %2701 = vmatpush1.msra.mxu0 0.0
        %2702 = vmatprep.subr.mxu0 0.0
        %2703 = vmatpush1.msra.mxu0 0.0
        %2704 = vmatprep.subr.mxu0 0.0
        %2705 = vmatpush1.msra.mxu0 0.0
        %2706 = vmatprep.subr.mxu0 0.0
        %2707 = vmatpush1.msra.mxu0 0.0
        %2708 = vmatprep.subr.mxu0 0.0
        %2709 = vmatpush1.msra.mxu0 0.0
        %2710 = vmatprep.subr.mxu0 0.0
        %2711 = vmatpush1.msra.mxu0 0.0
        %2712 = vmatprep.subr.mxu0 0.0
        %2713 = vmatpush1.msra.mxu0 0.0
        %2714 = vmatprep.subr.mxu0 0.0
        %2715 = vmatpush1.msra.mxu0 %v1044
        %2716 = vmatprep.subr.mxu0 0.0
        %2717 = vmatpush2.msra.mxu0 0.0
        %2718 = vmatprep.subr.mxu0 0.0
        %2719 = vmatpush2.msra.mxu0 0.0
        %2720 = vmatprep.subr.mxu0 0.0
        %2721 = vmatpush2.msra.mxu0 0.0
        %2722 = vmatprep.subr.mxu0 0.0
        %2723 = vmatpush2.msra.mxu0 0.0
        %2724 = vmatprep.subr.mxu0 0.0
        %2725 = vmatpush2.msra.mxu0 0.0
        %2726 = vmatprep.subr.mxu0 0.0
        %2727 = vmatpush2.msra.mxu0 0.0
        %2728 = vmatprep.subr.mxu0 0.0
        %2729 = vmatpush2.msra.mxu0 0.0
        %2730 = vmatprep.subr.mxu0 0.0
        %2731 = vmatpush2.msra.mxu0 0.0
        %2732 = vmatprep.subr.mxu0 0.0
        %2733 = vmatpush2.msra.mxu0 0.0
        %2734 = vmatprep.subr.mxu0 0.0
        %2735 = vmatpush2.msra.mxu0 0.0
        %2736 = vmatprep.subr.mxu0 0.0
        %2737 = vmatpush2.msra.mxu0 0.0
        %2738 = vmatprep.subr.mxu0 0.0
        %2739 = vmatpush2.msra.mxu0 0.0
        %2740 = vmatprep.subr.mxu0 0.0
        %2741 = vmatpush2.msra.mxu0 0.0
        %2742 = vmatprep.subr.mxu0 0.0
        %2743 = vmatpush2.msra.mxu0 0.0
        %2744 = vmatprep.subr.mxu0 0.0
        %2745 = vmatpush2.msra.mxu0 0.0
        %2746 = vmatprep.subr.mxu0 0.0
        %2747 = vmatpush2.msra.mxu0 0.0
        %2748 = vmatprep.mubr.f32.mxu0 0.0
        %2749 = vmatmul.mubr.f32.gmra.mxu0 %v2682
        %v2750 = vpop.f32.mrf.mxu0
        %v2751 = vadd.f32 0.0, %v2750
        %v2752 = vpop.f32.mrf.mxu0
        %2753 = vdwg.mxu0
        %2754 = vrot.lane.b32.xlu0 %v2262, 64
        %v2755 = vpop.permute.xlu0 %2754
        %v2757 = vmul.f32 %v2751, %v2755
        %v2758 = vadd.f32 %v2679, %v2757
        %v2760 = vsel %vm605, %v2758, 0
        %2762 = vmatprep.subr.mxu0 0.0
        %2763 = vmatpush1.msra.mxu0 0.0
        %2764 = vmatprep.subr.mxu0 0.0
        %2765 = vmatpush1.msra.mxu0 0.0
        %2766 = vmatprep.subr.mxu0 0.0
        %2767 = vmatpush1.msra.mxu0 0.0
        %2768 = vmatprep.subr.mxu0 0.0
        %2769 = vmatpush1.msra.mxu0 0.0
        %2770 = vmatprep.subr.mxu0 0.0
        %2771 = vmatpush1.msra.mxu0 0.0
        %2772 = vmatprep.subr.mxu0 0.0
        %2773 = vmatpush1.msra.mxu0 0.0
        %2774 = vmatprep.subr.mxu0 0.0
        %2775 = vmatpush1.msra.mxu0 0.0
        %2776 = vmatprep.subr.mxu0 0.0
        %2777 = vmatpush1.msra.mxu0 0.0
        %2778 = vmatprep.subr.mxu0 0.0
        %2779 = vmatpush1.msra.mxu0 0.0
        %2780 = vmatprep.subr.mxu0 0.0
        %2781 = vmatpush1.msra.mxu0 0.0
        %2782 = vmatprep.subr.mxu0 0.0
        %2783 = vmatpush1.msra.mxu0 0.0
        %2784 = vmatprep.subr.mxu0 0.0
        %2785 = vmatpush1.msra.mxu0 0.0
        %2786 = vmatprep.subr.mxu0 0.0
        %2787 = vmatpush1.msra.mxu0 %v577
        %2788 = vmatprep.subr.mxu0 0.0
        %2789 = vmatpush1.msra.mxu0 %v576
        %2790 = vmatprep.subr.mxu0 0.0
        %2791 = vmatpush1.msra.mxu0 %v575
        %2792 = vmatprep.subr.mxu0 0.0
        %2793 = vmatpush1.msra.mxu0 %v574
        %2794 = vmatprep.subr.mxu0 0.0
        %2795 = vmatpush2.msra.mxu0 0.0
        %2796 = vmatprep.subr.mxu0 0.0
        %2797 = vmatpush2.msra.mxu0 0.0
        %2798 = vmatprep.subr.mxu0 0.0
        %2799 = vmatpush2.msra.mxu0 0.0
        %2800 = vmatprep.subr.mxu0 0.0
        %2801 = vmatpush2.msra.mxu0 0.0
        %2802 = vmatprep.subr.mxu0 0.0
        %2803 = vmatpush2.msra.mxu0 0.0
        %2804 = vmatprep.subr.mxu0 0.0
        %2805 = vmatpush2.msra.mxu0 0.0
        %2806 = vmatprep.subr.mxu0 0.0
        %2807 = vmatpush2.msra.mxu0 0.0
        %2808 = vmatprep.subr.mxu0 0.0
        %2809 = vmatpush2.msra.mxu0 0.0
        %2810 = vmatprep.subr.mxu0 0.0
        %2811 = vmatpush2.msra.mxu0 0.0
        %2812 = vmatprep.subr.mxu0 0.0
        %2813 = vmatpush2.msra.mxu0 0.0
        %2814 = vmatprep.subr.mxu0 0.0
        %2815 = vmatpush2.msra.mxu0 0.0
        %2816 = vmatprep.subr.mxu0 0.0
        %2817 = vmatpush2.msra.mxu0 0.0
        %2818 = vmatprep.subr.mxu0 0.0
        %2819 = vmatpush2.msra.mxu0 0.0
        %2820 = vmatprep.subr.mxu0 0.0
        %2821 = vmatpush2.msra.mxu0 0.0
        %2822 = vmatprep.subr.mxu0 0.0
        %2823 = vmatpush2.msra.mxu0 0.0
        %2824 = vmatprep.subr.mxu0 0.0
        %2825 = vmatpush2.msra.mxu0 0.0
        %2826 = vmatprep.mubr.f32.mxu0 0.0
        %2827 = vmatmul.mubr.f32.gmra.mxu0 %v2760
        %v2828 = vpop.f32.mrf.mxu0
        %v2829 = vadd.f32 %v1362, %v2828
        %v2830 = vpop.f32.mrf.mxu0
        %2831 = vdwg.mxu0
        %v2832 = vmax.f32 %v2829, 0.0
        %v2833 = vsel %vm605, %v2832, 0.0
        %2834 = vadd.xlane.f32.xlu0 %v2833
        %v2835 = vpop.xlane.xlu0 %2834
        %v2836 = vmul.f32 %v2835, %v1441
        %v2837 = vsub.f32 %v2832, %v2836
        %v2838 = vmul.f32 %v2837, %v2837
        %v2839 = vsel %vm605, %v2838, 0.0
        %2840 = vadd.xlane.f32.xlu0 %v2839
        %v2841 = vpop.xlane.xlu0 %2840
        %v2842 = vmul.f32 %v2841, %v1441
        %v2843 = vadd.f32 %v2842, 1e-12
        %v2844 = vrsqrt.pop %v2843
        %v2845 = vmul.f32 %v2837, %v2844
        %v2846 = vmul.f32 %v1456, %v2845
        %v2847 = vadd.f32 %v2846, %v1463
        %v2849 = vsel %vm605, %v2847, 0
        %2851 = vmatprep.subr.mxu0 0.0
        %2852 = vmatpush1.msra.mxu0 0.0
        %2853 = vmatprep.subr.mxu0 0.0
        %2854 = vmatpush1.msra.mxu0 0.0
        %2855 = vmatprep.subr.mxu0 0.0
        %2856 = vmatpush1.msra.mxu0 0.0
        %2857 = vmatprep.subr.mxu0 0.0
        %2858 = vmatpush1.msra.mxu0 0.0
        %2859 = vmatprep.subr.mxu0 0.0
        %2860 = vmatpush1.msra.mxu0 0.0
        %2861 = vmatprep.subr.mxu0 0.0
        %2862 = vmatpush1.msra.mxu0 0.0
        %2863 = vmatprep.subr.mxu0 0.0
        %2864 = vmatpush1.msra.mxu0 0.0
        %2865 = vmatprep.subr.mxu0 0.0
        %2866 = vmatpush1.msra.mxu0 0.0
        %2867 = vmatprep.subr.mxu0 0.0
        %2868 = vmatpush1.msra.mxu0 0.0
        %2869 = vmatprep.subr.mxu0 0.0
        %2870 = vmatpush1.msra.mxu0 0.0
        %2871 = vmatprep.subr.mxu0 0.0
        %2872 = vmatpush1.msra.mxu0 0.0
        %2873 = vmatprep.subr.mxu0 0.0
        %2874 = vmatpush1.msra.mxu0 0.0
        %2875 = vmatprep.subr.mxu0 0.0
        %2876 = vmatpush1.msra.mxu0 %v581
        %2877 = vmatprep.subr.mxu0 0.0
        %2878 = vmatpush1.msra.mxu0 %v580
        %2879 = vmatprep.subr.mxu0 0.0
        %2880 = vmatpush1.msra.mxu0 %v579
        %2881 = vmatprep.subr.mxu0 0.0
        %2882 = vmatpush1.msra.mxu0 %v578
        %2883 = vmatprep.subr.mxu0 0.0
        %2884 = vmatpush2.msra.mxu0 0.0
        %2885 = vmatprep.subr.mxu0 0.0
        %2886 = vmatpush2.msra.mxu0 0.0
        %2887 = vmatprep.subr.mxu0 0.0
        %2888 = vmatpush2.msra.mxu0 0.0
        %2889 = vmatprep.subr.mxu0 0.0
        %2890 = vmatpush2.msra.mxu0 0.0
        %2891 = vmatprep.subr.mxu0 0.0
        %2892 = vmatpush2.msra.mxu0 0.0
        %2893 = vmatprep.subr.mxu0 0.0
        %2894 = vmatpush2.msra.mxu0 0.0
        %2895 = vmatprep.subr.mxu0 0.0
        %2896 = vmatpush2.msra.mxu0 0.0
        %2897 = vmatprep.subr.mxu0 0.0
        %2898 = vmatpush2.msra.mxu0 0.0
        %2899 = vmatprep.subr.mxu0 0.0
        %2900 = vmatpush2.msra.mxu0 0.0
        %2901 = vmatprep.subr.mxu0 0.0
        %2902 = vmatpush2.msra.mxu0 0.0
        %2903 = vmatprep.subr.mxu0 0.0
        %2904 = vmatpush2.msra.mxu0 0.0
        %2905 = vmatprep.subr.mxu0 0.0
        %2906 = vmatpush2.msra.mxu0 0.0
        %2907 = vmatprep.subr.mxu0 0.0
        %2908 = vmatpush2.msra.mxu0 0.0
        %2909 = vmatprep.subr.mxu0 0.0
        %2910 = vmatpush2.msra.mxu0 0.0
        %2911 = vmatprep.subr.mxu0 0.0
        %2912 = vmatpush2.msra.mxu0 0.0
        %2913 = vmatprep.subr.mxu0 0.0
        %2914 = vmatpush2.msra.mxu0 0.0
        %2915 = vmatprep.mubr.f32.mxu0 0.0
        %2916 = vmatmul.mubr.f32.gmra.mxu0 %v2849
        %v2917 = vpop.f32.mrf.mxu0
        %v2918 = vadd.f32 %v1470, %v2917
        %v2919 = vpop.f32.mrf.mxu0
        %2920 = vmatprep.mubr.f32.mxu0 0.0
        %2921 = vmatmul.mubr.f32.gmra.mxu0 %v1865
        %v2922 = vpop.f32.mrf.mxu0
        %v2923 = vadd.f32 %v1470, %v2922
        %v2924 = vpop.f32.mrf.mxu0
        %2925 = vdwg.mxu0
        %v2926 = vlaneseq
        %v2927 = vshrl.u32 %v2926, 7
        %v2928 = vsub.s32 0, %v2927
        %v2929 = vrot.slane %v2923, %v2928
        %2932 = vrot.lane.b32.xlu0 %v2918, 96
        %v2933 = vpop.permute.xlu0 %2932
        %2934 = vrot.lane.b32.xlu0 %v2923, 96
        %v2935 = vpop.permute.xlu0 %2934
        %v2938 = vmul.f32 %v2929, %v2933
        %v2939 = vmul.f32 %v2929, %v2935
        %v2941 = vsel %vm605, %v2938, 0
        %v2944 = vsel %vm605, %v2939, 0
        %2946 = vmatprep.subr.mxu0 0.0
        %2947 = vmatpush1.msra.mxu0 0.0
        %2948 = vmatprep.subr.mxu0 0.0
        %2949 = vmatpush1.msra.mxu0 0.0
        %2950 = vmatprep.subr.mxu0 0.0
        %2951 = vmatpush1.msra.mxu0 0.0
        %2952 = vmatprep.subr.mxu0 0.0
        %2953 = vmatpush1.msra.mxu0 0.0
        %2954 = vmatprep.subr.mxu0 0.0
        %2955 = vmatpush1.msra.mxu0 0.0
        %2956 = vmatprep.subr.mxu0 0.0
        %2957 = vmatpush1.msra.mxu0 0.0
        %2958 = vmatprep.subr.mxu0 0.0
        %2959 = vmatpush1.msra.mxu0 0.0
        %2960 = vmatprep.subr.mxu0 0.0
        %2961 = vmatpush1.msra.mxu0 0.0
        %2962 = vmatprep.subr.mxu0 0.0
        %2963 = vmatpush1.msra.mxu0 0.0
        %2964 = vmatprep.subr.mxu0 0.0
        %2965 = vmatpush1.msra.mxu0 0.0
        %2966 = vmatprep.subr.mxu0 0.0
        %2967 = vmatpush1.msra.mxu0 0.0
        %2968 = vmatprep.subr.mxu0 0.0
        %2969 = vmatpush1.msra.mxu0 0.0
        %2970 = vmatprep.subr.mxu0 0.0
        %2971 = vmatpush1.msra.mxu0 %v597
        %2972 = vmatprep.subr.mxu0 0.0
        %2973 = vmatpush1.msra.mxu0 %v596
        %2974 = vmatprep.subr.mxu0 0.0
        %2975 = vmatpush1.msra.mxu0 %v595
        %2976 = vmatprep.subr.mxu0 0.0
        %2977 = vmatpush1.msra.mxu0 %v594
        %2978 = vmatprep.subr.mxu0 0.0
        %2979 = vmatpush2.msra.mxu0 0.0
        %2980 = vmatprep.subr.mxu0 0.0
        %2981 = vmatpush2.msra.mxu0 0.0
        %2982 = vmatprep.subr.mxu0 0.0
        %2983 = vmatpush2.msra.mxu0 0.0
        %2984 = vmatprep.subr.mxu0 0.0
        %2985 = vmatpush2.msra.mxu0 0.0
        %2986 = vmatprep.subr.mxu0 0.0
        %2987 = vmatpush2.msra.mxu0 0.0
        %2988 = vmatprep.subr.mxu0 0.0
        %2989 = vmatpush2.msra.mxu0 0.0
        %2990 = vmatprep.subr.mxu0 0.0
        %2991 = vmatpush2.msra.mxu0 0.0
        %2992 = vmatprep.subr.mxu0 0.0
        %2993 = vmatpush2.msra.mxu0 0.0
        %2994 = vmatprep.subr.mxu0 0.0
        %2995 = vmatpush2.msra.mxu0 0.0
        %2996 = vmatprep.subr.mxu0 0.0
        %2997 = vmatpush2.msra.mxu0 0.0
        %2998 = vmatprep.subr.mxu0 0.0
        %2999 = vmatpush2.msra.mxu0 0.0
        %3000 = vmatprep.subr.mxu0 0.0
        %3001 = vmatpush2.msra.mxu0 0.0
        %3002 = vmatprep.subr.mxu0 0.0
        %3003 = vmatpush2.msra.mxu0 0.0
        %3004 = vmatprep.subr.mxu0 0.0
        %3005 = vmatpush2.msra.mxu0 0.0
        %3006 = vmatprep.subr.mxu0 0.0
        %3007 = vmatpush2.msra.mxu0 0.0
        %3008 = vmatprep.subr.mxu0 0.0
        %3009 = vmatpush2.msra.mxu0 0.0
        %3010 = vmatprep.mubr.f32.mxu0 0.0
        %3011 = vmatmul.mubr.f32.gmra.mxu0 %v2941
        %v3012 = vpop.f32.mrf.mxu0
        %v3013 = vadd.f32 0.0, %v3012
        %v3014 = vpop.f32.mrf.mxu0
        %3015 = vmatprep.mubr.f32.mxu0 0.0
        %3016 = vmatmul.mubr.f32.gmra.mxu0 %v2944
        %v3017 = vpop.f32.mrf.mxu0
        %v3018 = vadd.f32 0.0, %v3017
        %v3019 = vpop.f32.mrf.mxu0
        %3020 = vdwg.mxu0
        %v3021 = vsel %vm1038, %v3013, -inf
        %v3022 = vsel %vm1646, %v3018, -inf
        %v3023 = vmax.f32 %v3021, %v3022
        %v3024 = vrot.slane %v3023, 4
        %v3025 = vmax.f32 %v3023, %v3024
        %v3026 = vrot.slane %v3025, 2
        %v3027 = vmax.f32 %v3025, %v3026
        %v3028 = vrot.slane %v3027, 1
        %v3029 = vmax.f32 %v3027, %v3028
        %v3030 = vsub.f32 %v3013, %v3029
        %v3031 = vsub.f32 %v3018, %v3029
        %v3032 = vmul.f32 %v3030, 1.442695
        %v3033 = vpow.pop %v3032
        %v3034 = vmul.f32 %v3031, 1.442695
        %v3035 = vpow.pop %v3034
        %v3036 = vsel %vm1038, %v3033, 0.0
        %v3037 = vsel %vm1646, %v3035, 0.0
        %v3038 = vadd.f32 %v3036, %v3037
        %v3039 = vrot.slane %v3038, 4
        %v3040 = vadd.f32 %v3038, %v3039
        %v3041 = vrot.slane %v3040, 2
        %v3042 = vadd.f32 %v3040, %v3041
        %v3043 = vrot.slane %v3042, 1
        %v3044 = vadd.f32 %v3042, %v3043
        %v3045 = vrcp.pop %v3044
        %v3046 = vmul.f32 %v3044, %v3045
        %v3047 = vsub.f32 2.0, %v3046
        %v3048 = vmul.f32 %v3045, %v3047
        %v3049 = vmul.f32 %v3033, %v3048
        %v3050 = vmul.f32 %v3035, %v3048
        %v3052 = vsel %vm1038, %v3049, 0
        %v3055 = vsel %vm1038, %v3050, 0
        %3057 = vmatprep.subr.mxu0 0.0
        %3058 = vmatpush1.msra.mxu0 0.0
        %3059 = vmatprep.subr.mxu0 0.0
        %3060 = vmatpush1.msra.mxu0 0.0
        %3061 = vmatprep.subr.mxu0 0.0
        %3062 = vmatpush1.msra.mxu0 0.0
        %3063 = vmatprep.subr.mxu0 0.0
        %3064 = vmatpush1.msra.mxu0 0.0
        %3065 = vmatprep.subr.mxu0 0.0
        %3066 = vmatpush1.msra.mxu0 0.0
        %3067 = vmatprep.subr.mxu0 0.0
        %3068 = vmatpush1.msra.mxu0 0.0
        %3069 = vmatprep.subr.mxu0 0.0
        %3070 = vmatpush1.msra.mxu0 0.0
        %3071 = vmatprep.subr.mxu0 0.0
        %3072 = vmatpush1.msra.mxu0 0.0
        %3073 = vmatprep.subr.mxu0 0.0
        %3074 = vmatpush1.msra.mxu0 0.0
        %3075 = vmatprep.subr.mxu0 0.0
        %3076 = vmatpush1.msra.mxu0 0.0
        %3077 = vmatprep.subr.mxu0 0.0
        %3078 = vmatpush1.msra.mxu0 0.0
        %3079 = vmatprep.subr.mxu0 0.0
        %3080 = vmatpush1.msra.mxu0 0.0
        %3081 = vmatprep.subr.mxu0 0.0
        %3082 = vmatpush1.msra.mxu0 0.0
        %3083 = vmatprep.subr.mxu0 0.0
        %3084 = vmatpush1.msra.mxu0 0.0
        %3085 = vmatprep.subr.mxu0 0.0
        %3086 = vmatpush1.msra.mxu0 0.0
        %3087 = vmatprep.subr.mxu0 0.0
        %3088 = vmatpush1.msra.mxu0 %v1044
        %3089 = vmatprep.subr.mxu0 0.0
        %3090 = vmatpush2.msra.mxu0 0.0
        %3091 = vmatprep.subr.mxu0 0.0
        %3092 = vmatpush2.msra.mxu0 0.0
        %3093 = vmatprep.subr.mxu0 0.0
        %3094 = vmatpush2.msra.mxu0 0.0
        %3095 = vmatprep.subr.mxu0 0.0
        %3096 = vmatpush2.msra.mxu0 0.0
        %3097 = vmatprep.subr.mxu0 0.0
        %3098 = vmatpush2.msra.mxu0 0.0
        %3099 = vmatprep.subr.mxu0 0.0
        %3100 = vmatpush2.msra.mxu0 0.0
        %3101 = vmatprep.subr.mxu0 0.0
        %3102 = vmatpush2.msra.mxu0 0.0
        %3103 = vmatprep.subr.mxu0 0.0
        %3104 = vmatpush2.msra.mxu0 0.0
        %3105 = vmatprep.subr.mxu0 0.0
        %3106 = vmatpush2.msra.mxu0 0.0
        %3107 = vmatprep.subr.mxu0 0.0
        %3108 = vmatpush2.msra.mxu0 0.0
        %3109 = vmatprep.subr.mxu0 0.0
        %3110 = vmatpush2.msra.mxu0 0.0
        %3111 = vmatprep.subr.mxu0 0.0
        %3112 = vmatpush2.msra.mxu0 0.0
        %3113 = vmatprep.subr.mxu0 0.0
        %3114 = vmatpush2.msra.mxu0 0.0
        %3115 = vmatprep.subr.mxu0 0.0
        %3116 = vmatpush2.msra.mxu0 0.0
        %3117 = vmatprep.subr.mxu0 0.0
        %3118 = vmatpush2.msra.mxu0 0.0
        %3119 = vmatprep.subr.mxu0 0.0
        %3120 = vmatpush2.msra.mxu0 0.0
        %3121 = vmatprep.mubr.f32.mxu0 0.0
        %3122 = vmatmul.mubr.f32.gmra.mxu0 %v3052
        %v3123 = vpop.f32.mrf.mxu0
        %v3124 = vadd.f32 0.0, %v3123
        %v3125 = vpop.f32.mrf.mxu0
        %3126 = vmatprep.mubr.f32.mxu0 0.0
        %3127 = vmatmul.mubr.f32.gmra.mxu0 %v3055
        %v3128 = vpop.f32.mrf.mxu0
        %v3129 = vadd.f32 0.0, %v3128
        %v3130 = vpop.f32.mrf.mxu0
        %3131 = vdwg.mxu0
        %3132 = vrot.lane.b32.xlu0 %v2918, 64
        %v3133 = vpop.permute.xlu0 %3132
        %3134 = vrot.lane.b32.xlu0 %v2923, 64
        %v3135 = vpop.permute.xlu0 %3134
        %v3138 = vmul.f32 %v3124, %v3133
        %v3139 = vmul.f32 %v3129, %v3135
        %v3140 = vsel %vm605, %v3138, 0.0
        %v3141 = vsel %vm1766, %v3139, 0.0
        %v3142 = vadd.f32 %v3140, %v3141
        %v3143 = vrot.slane %v3142, 4
        %v3144 = vadd.f32 %v3142, %v3143
        %v3145 = vrot.slane %v3144, 2
        %v3146 = vadd.f32 %v3144, %v3145
        %v3147 = vrot.slane %v3146, 1
        %v3148 = vadd.f32 %v3146, %v3147
        %v3150 = vsel %vm605, %v3148, 0
        %3152 = vmatprep.subr.mxu0 0.0
        %3153 = vmatpush1.msra.mxu0 0.0
        %3154 = vmatprep.subr.mxu0 0.0
        %3155 = vmatpush1.msra.mxu0 0.0
        %3156 = vmatprep.subr.mxu0 0.0
        %3157 = vmatpush1.msra.mxu0 0.0
        %3158 = vmatprep.subr.mxu0 0.0
        %3159 = vmatpush1.msra.mxu0 0.0
        %3160 = vmatprep.subr.mxu0 0.0
        %3161 = vmatpush1.msra.mxu0 0.0
        %3162 = vmatprep.subr.mxu0 0.0
        %3163 = vmatpush1.msra.mxu0 0.0
        %3164 = vmatprep.subr.mxu0 0.0
        %3165 = vmatpush1.msra.mxu0 0.0
        %3166 = vmatprep.subr.mxu0 0.0
        %3167 = vmatpush1.msra.mxu0 0.0
        %3168 = vmatprep.subr.mxu0 0.0
        %3169 = vmatpush1.msra.mxu0 0.0
        %3170 = vmatprep.subr.mxu0 0.0
        %3171 = vmatpush1.msra.mxu0 0.0
        %3172 = vmatprep.subr.mxu0 0.0
        %3173 = vmatpush1.msra.mxu0 0.0
        %3174 = vmatprep.subr.mxu0 0.0
        %3175 = vmatpush1.msra.mxu0 0.0
        %3176 = vmatprep.subr.mxu0 0.0
        %3177 = vmatpush1.msra.mxu0 %v585
        %3178 = vmatprep.subr.mxu0 0.0
        %3179 = vmatpush1.msra.mxu0 %v584
        %3180 = vmatprep.subr.mxu0 0.0
        %3181 = vmatpush1.msra.mxu0 %v583
        %3182 = vmatprep.subr.mxu0 0.0
        %3183 = vmatpush1.msra.mxu0 %v582
        %3184 = vmatprep.subr.mxu0 0.0
        %3185 = vmatpush2.msra.mxu0 0.0
        %3186 = vmatprep.subr.mxu0 0.0
        %3187 = vmatpush2.msra.mxu0 0.0
        %3188 = vmatprep.subr.mxu0 0.0
        %3189 = vmatpush2.msra.mxu0 0.0
        %3190 = vmatprep.subr.mxu0 0.0
        %3191 = vmatpush2.msra.mxu0 0.0
        %3192 = vmatprep.subr.mxu0 0.0
        %3193 = vmatpush2.msra.mxu0 0.0
        %3194 = vmatprep.subr.mxu0 0.0
        %3195 = vmatpush2.msra.mxu0 0.0
        %3196 = vmatprep.subr.mxu0 0.0
        %3197 = vmatpush2.msra.mxu0 0.0
        %3198 = vmatprep.subr.mxu0 0.0
        %3199 = vmatpush2.msra.mxu0 0.0
        %3200 = vmatprep.subr.mxu0 0.0
        %3201 = vmatpush2.msra.mxu0 0.0
        %3202 = vmatprep.subr.mxu0 0.0
        %3203 = vmatpush2.msra.mxu0 0.0
        %3204 = vmatprep.subr.mxu0 0.0
        %3205 = vmatpush2.msra.mxu0 0.0
        %3206 = vmatprep.subr.mxu0 0.0
        %3207 = vmatpush2.msra.mxu0 0.0
        %3208 = vmatprep.subr.mxu0 0.0
        %3209 = vmatpush2.msra.mxu0 0.0
        %3210 = vmatprep.subr.mxu0 0.0
        %3211 = vmatpush2.msra.mxu0 0.0
        %3212 = vmatprep.subr.mxu0 0.0
        %3213 = vmatpush2.msra.mxu0 0.0
        %3214 = vmatprep.subr.mxu0 0.0
        %3215 = vmatpush2.msra.mxu0 0.0
        %3216 = vmatprep.mubr.f32.mxu0 0.0
        %3217 = vmatmul.mubr.f32.gmra.mxu0 %v3150
        %v3218 = vpop.f32.mrf.mxu0
        %v3219 = vadd.f32 %v589, %v3218
        %v3220 = vpop.f32.mrf.mxu0
        %3221 = vdwg.mxu0
        %v3222 = vmax.f32 %v3219, 0.0
        %v3223 = vsel %vm1766, %v3222, 0.0
        %3224 = vadd.xlane.f32.xlu0 %v3223
        %v3225 = vpop.xlane.xlu0 %3224
        %v3226 = vmul.f32 %v3225, %v1441
        %v3227 = vsub.f32 %v3222, %v3226
        %v3228 = vmul.f32 %v3227, %v3227
        %v3229 = vsel %vm1766, %v3228, 0.0
        %3230 = vadd.xlane.f32.xlu0 %v3229
        %v3231 = vpop.xlane.xlu0 %3230
        %v3232 = vmul.f32 %v3231, %v1441
        %v3233 = vadd.f32 %v3232, 1e-12
        %v3234 = vrsqrt.pop %v3233
        %v3235 = vmul.f32 %v3227, %v3234
        %v3236 = vmul.f32 %v592, %v3235
        %v3237 = vadd.f32 %v3236, %v593
        %3238 = vst.msk [vmem:[%s554] sm:$0xff] %vm605, %v2847
        %3239 = vst.msk [vmem:[%s560] sm:$0x1] %vm1766, %v3237
        %s3240 = sand.u32 %s389, 1
        %s3241 = scalar_lea.sflag [#allocation3], %s3240
        %s3242 = sand.u32 %s389, 1
        %s3243 = smul.addr %s3242, 8
        %s3244 = scalar_lea.vmem [#allocation2], %s3243
        %s3245 = sand.u32 %s415, 1
        %s3246 = scalar_lea.sflag [#allocation5], %s3245
        %s3247 = sand.u32 %s415, 1
        %s3248 = scalar_lea.vmem [#allocation4], %s3247
        // Predicated region
        $region85: #{star_transformer_layer.1} parent=83 // pred_check
          %p3249 = pneg %p399
        $region86: #{star_transformer_layer.1} parent=83 // pred_check_branch
          %3251 = sbr.rel (%p3249) target = $region88
        $region87: #{star_transformer_layer.1} parent=83 // pred_region
          %s3253 = ssub.s32 128, 128
          %3254 = vsyncadd %s3241, %s3253
          %s3255 = smul.addr %s35, 128
          %s3256 = scalar_lea.hbm %s16, %s3255
          %s3258 = sshll.u32 %s3244, 4
          %s3259 = int_to_ptr.vmem [resolvable:$true] %s3258
          %3261 = dma.vmem_to_hbm [thread:$0]  %s3259, 128, %s3256, %s3241
        $region88: #{star_transformer_layer.1} parent=83 // pred_fallthru
          _
        // Predicated region
        $region89: #{star_transformer_layer.1} parent=83 // pred_check
          %p3262 = pneg %p425
        $region90: #{star_transformer_layer.1} parent=83 // pred_check_branch
          %3264 = sbr.rel (%p3262) target = $region92
        $region91: #{star_transformer_layer.1} parent=83 // pred_region
          %s3266 = ssub.s32 16, 16
          %3267 = vsyncadd %s3246, %s3266
          %s3268 = smul.addr %s35, 16
          %s3269 = scalar_lea.hbm %s17, %s3268
          %s3271 = sshll.u32 %s3248, 4
          %s3272 = int_to_ptr.vmem [resolvable:$true] %s3271
          %3274 = dma.vmem_to_hbm [thread:$0]  %s3272, 16, %s3269, %s3246
        $region92: #{star_transformer_layer.1} parent=83 // pred_fallthru
          _
      $region84: #{star_transformer_layer.1} parent=5 // pred_fallthru
        _
      %p3275 = scmp.le.s32.totalorder 2, %s30
      // Predicated region
      $region93: #{star_transformer_layer.1} parent=5 // pred_check
        %p3276 = pneg %p3275
      $region94: #{star_transformer_layer.1} parent=5 // pred_check_branch
        %3278 = sbr.rel (%p3276) target = $region96
      $region95: #{star_transformer_layer.1} parent=5 // pred_region
        %s3279 = ssub.s32 %s30, 2
        // Predicated region
        $region97: #{star_transformer_layer.1} parent=95 // pred_check
          %p3280 = pneg %p405
        $region98: #{star_transformer_layer.1} parent=95 // pred_check_branch
          %3282 = sbr.rel (%p3280) target = $region100
        $region99: #{star_transformer_layer.1} parent=95 // pred_region
          %s3283 = sand.u32 %s390, 1
          %s3284 = scalar_lea.sflag [#allocation3], %s3283
          %s3285 = sand.u32 %s390, 1
          %s3286 = smul.addr %s3285, 8
          %s3287 = scalar_lea.vmem [#allocation2], %s3286
          %3288 = dma.done %s3284, 128
        $region100: #{star_transformer_layer.1} parent=95 // pred_fallthru
          _
        // Predicated region
        $region101: #{star_transformer_layer.1} parent=95 // pred_check
          %p3289 = pneg %p431
        $region102: #{star_transformer_layer.1} parent=95 // pred_check_branch
          %3291 = sbr.rel (%p3289) target = $region104
        $region103: #{star_transformer_layer.1} parent=95 // pred_region
          %s3292 = sand.u32 %s416, 1
          %s3293 = scalar_lea.sflag [#allocation5], %s3292
          %s3294 = sand.u32 %s416, 1
          %s3295 = scalar_lea.vmem [#allocation4], %s3294
          %3296 = dma.done %s3293, 16
        $region104: #{star_transformer_layer.1} parent=95 // pred_fallthru
          _
      $region96: #{star_transformer_layer.1} parent=5 // pred_fallthru
        _
    $region6: #{star_transformer_layer.1} parent=1 // loop_footer
      %s34 = sadd.s32 1, %s30
    $region7: #{star_transformer_layer.1} parent=1 // loop_footer_branch
      %29 = sbr.rel target = $region3
    $region8: #{star_transformer_layer.1} parent=1 // loop_exit
      _
    %3297 = vsyncpa [#allocation3], 1
    %s3298 = scalar_lea.sflag [#allocation3], 1
    %3299 = vsyncpa %s3298, 1
    %3300 = vsyncpa [#allocation5], 1
    %s3301 = scalar_lea.sflag [#allocation5], 1
    %3302 = vsyncpa %s3301, 1

</llo_original>
